<compile_context>
chip_gen: v5e
topology: v5e:2x2
jax: 0.10.0
libtpu: 0.0.40
codegen_flags: <defaults>
</compile_context>

<pallas_src>
import math

import jax
import jax.numpy as jnp
from jax.experimental import pallas as pl
from jax.experimental.pallas import tpu as pltpu

# ----------------------------- small configuration ---------------------------
B, N_RES = 2, 16
C_S, C_Z, C_HIDDEN = 32, 16, 8
NO_HEADS, NO_QK_POINTS, NO_V_POINTS = 4, 4, 8
INF, EPS = 1e5, 1e-8

HC = NO_HEADS * C_HIDDEN                                           # 32
HPQ = NO_HEADS * NO_QK_POINTS                                      # 16
PKV = NO_QK_POINTS + NO_V_POINTS                                   # 12
HPKV = NO_HEADS * PKV                                              # 48
HPQ3 = HPQ * 3                                                     # 48
HPKV3 = HPKV * 3                                                   # 144
PROJ_DIM = HC + 2 * HC + HPQ3 + HPKV3                              # 288
CONCAT_DIM = NO_HEADS * (C_Z + C_HIDDEN + NO_V_POINTS * 4)         # 224

SCALE_QK = math.sqrt(1.0 / (3 * C_HIDDEN))
SQRT_THIRD = math.sqrt(1.0 / 3.0)
PT_W_SCALE = math.sqrt(1.0 / (3 * (NO_QK_POINTS * 9.0 / 2)))


# ----------------------------- generic linear kernel -------------------------
def _linear_kernel(x_ref, w_ref, b_ref, o_ref):
    o_ref[...] = (
        jnp.dot(x_ref[...], w_ref[...], preferred_element_type=jnp.float32)
        + b_ref[...]
    )


def pallas_linear(x, w, b):
    """x: [M, K], w: [K, N], b: [1, N] -> [M, N] (single-block matmul kernel)."""
    M, K = x.shape
    _, N = w.shape
    return pl.pallas_call(
        _linear_kernel,
        grid=(1,),
        in_specs=[
            pl.BlockSpec((M, K), lambda i: (0, 0)),
            pl.BlockSpec((K, N), lambda i: (0, 0)),
            pl.BlockSpec((1, N), lambda i: (0, 0)),
        ],
        out_specs=pl.BlockSpec((M, N), lambda i: (0, 0)),
        out_shape=jax.ShapeDtypeStruct((M, N), jnp.float32),
    )(x, w, b)


# ----------------------------- fused IPA kernel ------------------------------
def _ipa_fused_kernel(scal_ref, proj_ref, rot_ref, trans_ref, z_ref, maskb_ref,
                      wbt_ref, wout_ref, bout_ref, out_ref):
    """One batch element per grid step; everything after the input projection."""
    proj = proj_ref[0]            # [N, 288] fused projection slab
    rot = rot_ref[0]              # [N, 9]   row-major per-residue rotation
    trans = trans_ref[0]          # [N, 3]
    z = z_ref[0]                  # [N, N, C_z]
    maskb = maskb_ref[0]          # [N, N]   inf*(m_i*m_j - 1)
    ones_col = jnp.ones((N_RES, 1), jnp.float32)

    q = proj[:, :HC]                                   # [N, H*C]
    kv = proj[:, HC:3 * HC]                            # [N, 2*H*C]  (h-major, k|v)
    qp_raw = proj[:, 3 * HC:3 * HC + HPQ3]             # [N, 48]  coord-major x|y|z
    kvp_raw = proj[:, 3 * HC + HPQ3:]                  # [N, 144] coord-major x|y|z

    def apply_rigid(raw, width):
        """local coord chunks -> 3 global coord planes (R x + t), pure VPU."""
        cx = raw[:, 0 * width:1 * width]
        cy = raw[:, 1 * width:2 * width]
        cz = raw[:, 2 * width:3 * width]
        out = []
        for i in range(3):
            out.append(rot[:, 3 * i + 0:3 * i + 1] * cx
                       + rot[:, 3 * i + 1:3 * i + 2] * cy
                       + rot[:, 3 * i + 2:3 * i + 3] * cz
                       + trans[:, i:i + 1])
        return out

    qpg = apply_rigid(qp_raw, HPQ)      # 3 x [N, H*Pq]      (global q points)
    kvpg = apply_rigid(kvp_raw, HPKV)   # 3 x [N, H*(Pq+Pv)] (global k|v points)

    o_parts, ox_parts, oy_parts, oz_parts, opair_parts = [], [], [], [], []
    for h in range(NO_HEADS):                       # H=4, unrolled at trace time
        hw = scal_ref[0, h]                         # softplus(w_h)*pt_scale (SMEM)
        bbh = scal_ref[1, h]                        # sqrt(1/3)*b_b[h]       (SMEM)
        qh = q[:, h * C_HIDDEN:(h + 1) * C_HIDDEN]
        kh = kv[:, h * 2 * C_HIDDEN: h * 2 * C_HIDDEN + C_HIDDEN]
        vh = kv[:, h * 2 * C_HIDDEN + C_HIDDEN:(h + 1) * 2 * C_HIDDEN]
        qph = jnp.concatenate(
            [qpg[i][:, h * NO_QK_POINTS:(h + 1) * NO_QK_POINTS] for i in range(3)],
            axis=-1)                                                    # [N, 12]
        kph = jnp.concatenate(
            [kvpg[i][:, h * PKV: h * PKV + NO_QK_POINTS] for i in range(3)],
            axis=-1)                                                    # [N, 12]
        vph = jnp.concatenate(
            [kvpg[i][:, h * PKV + NO_QK_POINTS:(h + 1) * PKV] for i in range(3)],
            axis=-1)                                                    # [N, 24]

        qsq = jnp.sum(qph * qph, axis=-1, keepdims=True)                # [N, 1]
        ksq = jnp.sum(kph * kph, axis=-1, keepdims=True)                # [N, 1]

        # one MXU push per head: lane-concatenated operands give
        #   SCALE_QK*(q.k) + hw*(q_pts.k_pts) - 0.5*hw*|k_pts|^2_j
        lhs = jnp.concatenate([SCALE_QK * qh, hw * qph, ones_col], axis=-1)
        rhs = jnp.concatenate([kh, kph, -0.5 * hw * ksq], axis=-1)
        a = jnp.einsum('ip,jp->ij', lhs, rhs,
                       preferred_element_type=jnp.float32)              # [N, N]

        # pair bias sqrt(1/3)*(z.w_b + b_b) computed in-kernel (z read once from
        # HBM); w_b pre-scaled by sqrt(1/3) in the wrapper.
        wbh = wbt_ref[h:h + 1, :]                                        # [1, C_z]
        bias_pair = jnp.sum(z * wbh[None, :, :], axis=-1)               # [N, N]

        a = a - 0.5 * hw * qsq + bias_pair + bbh + maskb

        # softmax over keys j
        a = a - jnp.max(a, axis=-1, keepdims=True)
        a = jnp.exp(a)
        a = a / jnp.sum(a, axis=-1, keepdims=True)

        o_parts.append(jnp.dot(a, vh, preferred_element_type=jnp.float32))
        optg = jnp.dot(a, vph, preferred_element_type=jnp.float32)      # [N, 24]
        ox_parts.append(optg[:, 0 * NO_V_POINTS:1 * NO_V_POINTS])
        oy_parts.append(optg[:, 1 * NO_V_POINTS:2 * NO_V_POINTS])
        oz_parts.append(optg[:, 2 * NO_V_POINTS:3 * NO_V_POINTS])
        # o_pair[i, c] = sum_j a[i, j] * z[i, j, c]  (VPU broadcast-reduce)
        opair_parts.append(jnp.sum(a[:, :, None] * z, axis=1))          # [N, C_z]

    o = jnp.concatenate(o_parts, axis=-1)          # [N, H*C]     (h, c)
    ogx = jnp.concatenate(ox_parts, axis=-1)       # [N, H*Pv]    (h, p)
    ogy = jnp.concatenate(oy_parts, axis=-1)
    ogz = jnp.concatenate(oz_parts, axis=-1)
    opair = jnp.concatenate(opair_parts, axis=-1)  # [N, H*C_z]   (h, c_z)

    # inverse rigid apply: x_local = R^T (x_global - t)
    dx = ogx - trans[:, 0:1]
    dy = ogy - trans[:, 1:2]
    dz = ogz - trans[:, 2:3]
    lx = rot[:, 0:1] * dx + rot[:, 3:4] * dy + rot[:, 6:7] * dz
    ly = rot[:, 1:2] * dx + rot[:, 4:5] * dy + rot[:, 7:8] * dz
    lz = rot[:, 2:3] * dx + rot[:, 5:6] * dy + rot[:, 8:9] * dz
    norm = jnp.sqrt(lx * lx + ly * ly + lz * lz + EPS)                  # [N, H*Pv]

    # concat -> final output projection, single MXU push [N,224]x[224,C_s]
    cat = jnp.concatenate([o, lx, ly, lz, norm, opair], axis=-1)        # [N, 224]
    out_ref[0] = (
        jnp.dot(cat, wout_ref[...], preferred_element_type=jnp.float32)
        + bout_ref[...]
    )


def ipa_fused_pallas(scal, proj, rot9, trans, z, maskb, wbt, w_out, b_out):
    im3 = lambda b: (b, 0, 0)
    im4 = lambda b: (b, 0, 0, 0)
    return pl.pallas_call(
        _ipa_fused_kernel,
        grid=(B,),
        in_specs=[
            pl.BlockSpec(memory_space=pltpu.MemorySpace.SMEM),          # [2,H] scalars
            pl.BlockSpec((1, N_RES, PROJ_DIM), im3),                    # proj slab
            pl.BlockSpec((1, N_RES, 9), im3),                           # rotations
            pl.BlockSpec((1, N_RES, 3), im3),                           # translations
            pl.BlockSpec((1, N_RES, N_RES, C_Z), im4),                  # z
            pl.BlockSpec((1, N_RES, N_RES), im3),                       # mask bias
            pl.BlockSpec((NO_HEADS, C_Z), lambda b: (0, 0)),            # sqrt(1/3)*w_b^T
            pl.BlockSpec((CONCAT_DIM, C_S), lambda b: (0, 0)),          # w_out
            pl.BlockSpec((1, C_S), lambda b: (0, 0)),                   # b_out
        ],
        out_specs=pl.BlockSpec((1, N_RES, C_S), im3),
        out_shape=jax.ShapeDtypeStruct((B, N_RES, C_S), jnp.float32),
        compiler_params=pltpu.CompilerParams(
            dimension_semantics=("parallel",)),
    )(scal, proj, rot9, trans, z, maskb, wbt, w_out, b_out)


# ----------------------------- full forward (Pallas path) --------------------
def ipa_forward_pallas(s, z, rot, trans, mask, p):
    H = NO_HEADS
    s2 = s.reshape(B * N_RES, C_S)

    # ---- one fused projection matmul:  s @ [w_q | w_kv | w_qp | w_kvp] ----
    w_cat = jnp.concatenate([p['w_q'], p['w_kv'], p['w_qp'], p['w_kvp']], axis=1)
    b_cat = jnp.concatenate([p['b_q'], p['b_kv'], p['b_qp'], p['b_kvp']], axis=1)
    proj = pallas_linear(s2, w_cat, b_cat).reshape(B, N_RES, PROJ_DIM)

    # tiny, head-independent pairwise mask bias
    maskb = INF * (mask[:, :, None] * mask[:, None, :] - 1.0)           # [B,N,N]

    # scalar path: softplus(head_weights)*pt_scale and sqrt(1/3)*b_b
    hw = jax.nn.softplus(p['head_weights']) * PT_W_SCALE                # [H]
    scal = jnp.stack([hw, SQRT_THIRD * p['b_b'].reshape(H)], axis=0)    # [2,H]
    wbt = SQRT_THIRD * p['w_b'].T                                       # [H,C_z]

    rot9 = rot.reshape(B, N_RES, 9)

    return ipa_fused_pallas(scal, proj, rot9, trans, z, maskb, wbt,
                            p['w_out'], p['b_out'])


# ----------------------------- pure-JAX reference (PyTorch semantics) --------
def ipa_reference(s, z, rot, trans, mask, p):
    H, C, Pq, Pv = NO_HEADS, C_HIDDEN, NO_QK_POINTS, NO_V_POINTS
    q = (s @ p['w_q'] + p['b_q']).reshape(B, N_RES, H, C)
    kv = (s @ p['w_kv'] + p['b_kv']).reshape(B, N_RES, H, 2 * C)
    k, v = kv[..., :C], kv[..., C:]

    qp_raw = (s @ p['w_qp'] + p['b_qp']).reshape(B, N_RES, 3, H * Pq)
    qp3 = jnp.transpose(qp_raw, (0, 1, 3, 2))
    qp_g = jnp.einsum('bnij,bnmj->bnmi', rot, qp3) + trans[:, :, None, :]
    q_pts = qp_g.reshape(B, N_RES, H, Pq, 3)

    kvp_raw = (s @ p['w_kvp'] + p['b_kvp']).reshape(B, N_RES, 3, H * (Pq + Pv))
    kvp3 = jnp.transpose(kvp_raw, (0, 1, 3, 2))
    kvp_g = jnp.einsum('bnij,bnmj->bnmi', rot, kvp3) + trans[:, :, None, :]
    kvp_pts = kvp_g.reshape(B, N_RES, H, Pq + Pv, 3)
    k_pts, v_pts = kvp_pts[..., :Pq, :], kvp_pts[..., Pq:, :]

    bb = (z @ p['w_b'] + p['b_b'])                                   # [B,N,N,H]

    a = jnp.einsum('bihc,bjhc->bhij', q, k) * SCALE_QK
    a = a + SQRT_THIRD * jnp.transpose(bb, (0, 3, 1, 2))

    d = q_pts[:, :, None, :, :, :] - k_pts[:, None, :, :, :, :]      # [B,N,N,H,Pq,3]
    d2 = jnp.sum(d * d, axis=-1)
    hw = jax.nn.softplus(p['head_weights']) * PT_W_SCALE
    pt_att = jnp.sum(d2 * hw[None, None, None, :, None], axis=-1) * (-0.5)
    sq_mask = INF * (mask[:, :, None] * mask[:, None, :] - 1.0)
    a = a + jnp.transpose(pt_att, (0, 3, 1, 2)) + sq_mask[:, None, :, :]
    a = jax.nn.softmax(a, axis=-1)

    o = jnp.einsum('bhij,bjhc->bihc', a, v).reshape(B, N_RES, H * C)
    o_pt_g = jnp.einsum('bhij,bjhpx->bihpx', a, v_pts)
    o_pt_l = jnp.einsum('bnji,bnhpj->bnhpi', rot,
                        o_pt_g - trans[:, :, None, None, :])
    o_pt_norm = jnp.sqrt(jnp.sum(o_pt_l ** 2, axis=-1) + EPS).reshape(
        B, N_RES, H * Pv)
    o_pt_flat = o_pt_l.reshape(B, N_RES, H * Pv, 3)
    o_pair = jnp.einsum('bhij,bijc->bihc', a, z).reshape(B, N_RES, H * C_Z)

    cat = jnp.concatenate(
        [o, o_pt_flat[..., 0], o_pt_flat[..., 1], o_pt_flat[..., 2],
         o_pt_norm, o_pair], axis=-1)
    return (cat @ p['w_out'] + p['b_out']).reshape(B, N_RES, C_S)


# ----------------------------- deterministic parameters / inputs -------------
def init_params(key):
    H, C, Pq, Pv = NO_HEADS, C_HIDDEN, NO_QK_POINTS, NO_V_POINTS
    ks = jax.random.split(key, 12)

    def w(k, shape, scale=0.1):
        return scale * jax.random.normal(k, shape, jnp.float32)

    return {
        'w_q': w(ks[0], (C_S, H * C)), 'b_q': w(ks[1], (1, H * C), 0.02),
        'w_kv': w(ks[2], (C_S, 2 * H * C)), 'b_kv': w(ks[3], (1, 2 * H * C), 0.02),
        'w_qp': w(ks[4], (C_S, H * Pq * 3)), 'b_qp': w(ks[5], (1, H * Pq * 3), 0.02),
        'w_kvp': w(ks[6], (C_S, H * (Pq + Pv) * 3)),
        'b_kvp': w(ks[7], (1, H * (Pq + Pv) * 3), 0.02),
        'w_b': w(ks[8], (C_Z, H)), 'b_b': w(ks[9], (1, H), 0.02),
        # linear_out uses init='final' (zeros) in OpenFold; small random here so
        # the synthetic test output is non-trivial.
        'w_out': w(ks[10], (CONCAT_DIM, C_S)), 'b_out': w(ks[11], (1, C_S), 0.02),
        # ipa_point_weights_init_: softplus^{-1}(1) = log(e - 1)
        'head_weights': jnp.full((NO_HEADS,), math.log(math.e - 1.0), jnp.float32),
    }


def random_rigids(key):
    k1, k2 = jax.random.split(key)
    quat = jax.random.normal(k1, (B, N_RES, 4), jnp.float32)
    quat = quat / jnp.linalg.norm(quat, axis=-1, keepdims=True)
    w, x, y, zc = quat[..., 0], quat[..., 1], quat[..., 2], quat[..., 3]
    rot = jnp.stack([
        jnp.stack([1 - 2 * (y * y + zc * zc), 2 * (x * y - w * zc),
                   2 * (x * zc + w * y)], -1),
        jnp.stack([2 * (x * y + w * zc), 1 - 2 * (x * x + zc * zc),
                   2 * (y * zc - w * x)], -1),
        jnp.stack([2 * (x * zc - w * y), 2 * (y * zc + w * x),
                   1 - 2 * (x * x + y * y)], -1),
    ], axis=-2)                                            # [B, N, 3, 3]
    trans = jax.random.normal(k2, (B, N_RES, 3), jnp.float32)
    return rot, trans


if __name__ == "__main__":
    key = jax.random.PRNGKey(0)
    k_s, k_z, k_t, k_p = jax.random.split(key, 4)
    s = jax.random.normal(k_s, (B, N_RES, C_S), jnp.float32)
    z = jax.random.normal(k_z, (B, N_RES, N_RES, C_Z), jnp.float32)
    rot, trans = random_rigids(k_t)
    mask = jnp.ones((B, N_RES), jnp.float32).at[:, -3:].set(0.0)
    params = init_params(k_p)

    out = jax.jit(ipa_forward_pallas)(s, z, rot, trans, mask, params)
    out = jax.block_until_ready(out)

    ref = jax.block_until_ready(ipa_reference(s, z, rot, trans, mask, params))

    assert out.shape == (B, N_RES, C_S)
    assert bool(jnp.all(jnp.isfinite(out)))
    max_err = float(jnp.max(jnp.abs(out - ref)))
    if max_err > 2e-2:
        raise AssertionError(f"mismatch vs reference: max_err={max_err}")
    print("KERNEL_OK")
</pallas_src>

<mosaic_0001>
module attributes {stable_mosaic.version = 11 : i64} {
  func.func @_linear_kernel(%arg0: i32, %arg1: memref<32x32xf32, #tpu.memory_space<vmem>>, %arg2: memref<32x288xf32, #tpu.memory_space<vmem>>, %arg3: memref<1x288xf32, #tpu.memory_space<vmem>>, %arg4: memref<32x288xf32, #tpu.memory_space<vmem>>) attributes {dimension_semantics = [#tpu.dimension_semantics<arbitrary>], iteration_bounds = array<i64: 1>, scalar_prefetch = 0 : i64, scratch_operands = 0 : i64, tpu.core_type = #tpu.core_type<tc>, window_params = [{pipeline_mode = #tpu.pipeline_mode<synchronous>, transform_indices = @transform_0, window_bounds = array<i64: 32, 32>}, {pipeline_mode = #tpu.pipeline_mode<synchronous>, transform_indices = @transform_1, window_bounds = array<i64: 32, 288>}, {pipeline_mode = #tpu.pipeline_mode<synchronous>, transform_indices = @transform_2, window_bounds = array<i64: 1, 288>}, {pipeline_mode = #tpu.pipeline_mode<synchronous>, transform_indices = @transform_3, window_bounds = array<i64: 32, 288>}]} {
    %c0 = arith.constant 0 : index
    %c0_0 = arith.constant 0 : index
    %0 = vector.load %arg1[%c0, %c0_0] : memref<32x32xf32, #tpu.memory_space<vmem>>, vector<32x32xf32>
    %c0_1 = arith.constant 0 : index
    %c0_2 = arith.constant 0 : index
    %1 = vector.load %arg2[%c0_1, %c0_2] : memref<32x288xf32, #tpu.memory_space<vmem>>, vector<32x288xf32>
    %cst = arith.constant dense<0.000000e+00> : vector<32x288xf32>
    %2 = tpu.matmul %0, %1, %cst {dimension_numbers = #tpu.dot_dimension_numbers<[1], [0], [0], [1], [0, 0, 1, 1], [], []>} : vector<32x32xf32>, vector<32x288xf32>, vector<32x288xf32> -> vector<32x288xf32>
    %c0_3 = arith.constant 0 : index
    %c0_4 = arith.constant 0 : index
    %3 = vector.load %arg3[%c0_3, %c0_4] : memref<1x288xf32, #tpu.memory_space<vmem>>, vector<1x288xf32>
    %4 = vector.broadcast %3 : vector<1x288xf32> to vector<32x288xf32>
    %5 = arith.addf %2, %4 : vector<32x288xf32>
    %c0_5 = arith.constant 0 : index
    %c0_6 = arith.constant 0 : index
    %6 = vector.load %arg4[%c0_5, %c0_6] : memref<32x288xf32, #tpu.memory_space<vmem>>, vector<32x288xf32>
    tpu.vector_store %arg4[%c0_5, %c0_6], %5 {strides = array<i32>} : memref<32x288xf32, #tpu.memory_space<vmem>>, vector<32x288xf32>,
    return
  }
  func.func @transform_0(%arg0: i32) -> (i32, i32) {
    %c0_i32 = arith.constant 0 : i32
    %c0_i32_0 = arith.constant 0 : i32
    %c0_i32_1 = arith.constant 0 : i32
    return %c0_i32, %c0_i32_0 : i32, i32
  }
  func.func @transform_1(%arg0: i32) -> (i32, i32) {
    %c0_i32 = arith.constant 0 : i32
    %c0_i32_0 = arith.constant 0 : i32
    %c0_i32_1 = arith.constant 0 : i32
    return %c0_i32, %c0_i32_0 : i32, i32
  }
  func.func @transform_2(%arg0: i32) -> (i32, i32) {
    %c0_i32 = arith.constant 0 : i32
    %c0_i32_0 = arith.constant 0 : i32
    %c0_i32_1 = arith.constant 0 : i32
    return %c0_i32, %c0_i32_0 : i32, i32
  }
  func.func @transform_3(%arg0: i32) -> (i32, i32) {
    %c0_i32 = arith.constant 0 : i32
    %c0_i32_0 = arith.constant 0 : i32
    %c0_i32_1 = arith.constant 0 : i32
    return %c0_i32, %c0_i32_0 : i32, i32
  }
}

module attributes {stable_mosaic.version = 11 : i64} {
  func.func @_ipa_fused_kernel(%arg0: i32, %arg1: memref<2x4xf32, #tpu.memory_space<smem>>, %arg2: memref<1x16x288xf32, #tpu.memory_space<vmem>>, %arg3: memref<1x16x9xf32, #tpu.memory_space<vmem>>, %arg4: memref<1x16x3xf32, #tpu.memory_space<vmem>>, %arg5: memref<1x16x16x16xf32, #tpu.memory_space<vmem>>, %arg6: memref<1x16x16xf32, #tpu.memory_space<vmem>>, %arg7: memref<4x16xf32, #tpu.memory_space<vmem>>, %arg8: memref<224x32xf32, #tpu.memory_space<vmem>>, %arg9: memref<1x32xf32, #tpu.memory_space<vmem>>, %arg10: memref<1x16x32xf32, #tpu.memory_space<vmem>>) attributes {dimension_semantics = [#tpu.dimension_semantics<parallel>], iteration_bounds = array<i64: 2>, scalar_prefetch = 0 : i64, scratch_operands = 0 : i64, tpu.core_type = #tpu.core_type<tc>, window_params = [{transform_indices = @transform_0, window_bounds = array<i64: 2, 4>}, {transform_indices = @transform_1, window_bounds = array<i64: 1, 16, 288>}, {transform_indices = @transform_2, window_bounds = array<i64: 1, 16, 9>}, {transform_indices = @transform_3, window_bounds = array<i64: 1, 16, 3>}, {transform_indices = @transform_4, window_bounds = array<i64: 1, 16, 16, 16>}, {transform_indices = @transform_5, window_bounds = array<i64: 1, 16, 16>}, {pipeline_mode = #tpu.pipeline_mode<synchronous>, transform_indices = @transform_6, window_bounds = array<i64: 4, 16>}, {pipeline_mode = #tpu.pipeline_mode<synchronous>, transform_indices = @transform_7, window_bounds = array<i64: 224, 32>}, {pipeline_mode = #tpu.pipeline_mode<synchronous>, transform_indices = @transform_8, window_bounds = array<i64: 1, 32>}, {transform_indices = @transform_9, window_bounds = array<i64: 1, 16, 32>}]} {
    %c0 = arith.constant 0 : index
    %c0_0 = arith.constant 0 : index
    %c0_1 = arith.constant 0 : index
    %0 = vector.load %arg2[%c0, %c0_0, %c0_1] : memref<1x16x288xf32, #tpu.memory_space<vmem>>, vector<1x16x288xf32>
    %1 = vector.shape_cast %0 : vector<1x16x288xf32> to vector<16x288xf32>
    %c0_2 = arith.constant 0 : index
    %c0_3 = arith.constant 0 : index
    %c0_4 = arith.constant 0 : index
    %2 = vector.load %arg3[%c0_2, %c0_3, %c0_4] : memref<1x16x9xf32, #tpu.memory_space<vmem>>, vector<1x16x9xf32>
    %3 = vector.shape_cast %2 : vector<1x16x9xf32> to vector<16x9xf32>
    %c0_5 = arith.constant 0 : index
    %c0_6 = arith.constant 0 : index
    %c0_7 = arith.constant 0 : index
    %4 = vector.load %arg4[%c0_5, %c0_6, %c0_7] : memref<1x16x3xf32, #tpu.memory_space<vmem>>, vector<1x16x3xf32>
    %5 = vector.shape_cast %4 : vector<1x16x3xf32> to vector<16x3xf32>
    %c0_8 = arith.constant 0 : index
    %c0_9 = arith.constant 0 : index
    %c0_10 = arith.constant 0 : index
    %c0_11 = arith.constant 0 : index
    %6 = vector.load %arg5[%c0_8, %c0_9, %c0_10, %c0_11] : memref<1x16x16x16xf32, #tpu.memory_space<vmem>>, vector<1x16x16x16xf32>
    %7 = vector.shape_cast %6 : vector<1x16x16x16xf32> to vector<16x16x16xf32>
    %c0_12 = arith.constant 0 : index
    %c0_13 = arith.constant 0 : index
    %c0_14 = arith.constant 0 : index
    %8 = vector.load %arg6[%c0_12, %c0_13, %c0_14] : memref<1x16x16xf32, #tpu.memory_space<vmem>>, vector<1x16x16xf32>
    %9 = vector.shape_cast %8 : vector<1x16x16xf32> to vector<16x16xf32>
    %cst = arith.constant 1.000000e+00 : f32
    %10 = vector.broadcast %cst : f32 to vector<16x1xf32>
    %11 = vector.extract_strided_slice %1 {offsets = [0, 0], sizes = [16, 32], strides = [1, 1]} : vector<16x288xf32> to vector<16x32xf32>
    %12 = vector.extract_strided_slice %1 {offsets = [0, 32], sizes = [16, 64], strides = [1, 1]} : vector<16x288xf32> to vector<16x64xf32>
    %13 = vector.extract_strided_slice %1 {offsets = [0, 96], sizes = [16, 48], strides = [1, 1]} : vector<16x288xf32> to vector<16x48xf32>
    %14 = vector.extract_strided_slice %1 {offsets = [0, 144], sizes = [16, 144], strides = [1, 1]} : vector<16x288xf32> to vector<16x144xf32>
    %15 = vector.extract_strided_slice %13 {offsets = [0, 0], sizes = [16, 16], strides = [1, 1]} : vector<16x48xf32> to vector<16x16xf32>
    %16 = vector.extract_strided_slice %13 {offsets = [0, 16], sizes = [16, 16], strides = [1, 1]} : vector<16x48xf32> to vector<16x16xf32>
    %17 = vector.extract_strided_slice %13 {offsets = [0, 32], sizes = [16, 16], strides = [1, 1]} : vector<16x48xf32> to vector<16x16xf32>
    %18 = vector.extract_strided_slice %3 {offsets = [0, 0], sizes = [16, 1], strides = [1, 1]} : vector<16x9xf32> to vector<16x1xf32>
    %19 = vector.broadcast %18 : vector<16x1xf32> to vector<16x16xf32>
    %20 = arith.mulf %19, %15 : vector<16x16xf32>
    %21 = vector.extract_strided_slice %3 {offsets = [0, 1], sizes = [16, 1], strides = [1, 1]} : vector<16x9xf32> to vector<16x1xf32>
    %22 = vector.broadcast %21 : vector<16x1xf32> to vector<16x16xf32>
    %23 = arith.mulf %22, %16 : vector<16x16xf32>
    %24 = arith.addf %20, %23 : vector<16x16xf32>
    %25 = vector.extract_strided_slice %3 {offsets = [0, 2], sizes = [16, 1], strides = [1, 1]} : vector<16x9xf32> to vector<16x1xf32>
    %26 = vector.broadcast %25 : vector<16x1xf32> to vector<16x16xf32>
    %27 = arith.mulf %26, %17 : vector<16x16xf32>
    %28 = arith.addf %24, %27 : vector<16x16xf32>
    %29 = vector.extract_strided_slice %5 {offsets = [0, 0], sizes = [16, 1], strides = [1, 1]} : vector<16x3xf32> to vector<16x1xf32>
    %30 = vector.broadcast %29 : vector<16x1xf32> to vector<16x16xf32>
    %31 = arith.addf %28, %30 : vector<16x16xf32>
    %32 = vector.extract_strided_slice %3 {offsets = [0, 3], sizes = [16, 1], strides = [1, 1]} : vector<16x9xf32> to vector<16x1xf32>
    %33 = vector.broadcast %32 : vector<16x1xf32> to vector<16x16xf32>
    %34 = arith.mulf %33, %15 : vector<16x16xf32>
    %35 = vector.extract_strided_slice %3 {offsets = [0, 4], sizes = [16, 1], strides = [1, 1]} : vector<16x9xf32> to vector<16x1xf32>
    %36 = vector.broadcast %35 : vector<16x1xf32> to vector<16x16xf32>
    %37 = arith.mulf %36, %16 : vector<16x16xf32>
    %38 = arith.addf %34, %37 : vector<16x16xf32>
    %39 = vector.extract_strided_slice %3 {offsets = [0, 5], sizes = [16, 1], strides = [1, 1]} : vector<16x9xf32> to vector<16x1xf32>
    %40 = vector.broadcast %39 : vector<16x1xf32> to vector<16x16xf32>
    %41 = arith.mulf %40, %17 : vector<16x16xf32>
    %42 = arith.addf %38, %41 : vector<16x16xf32>
    %43 = vector.extract_strided_slice %5 {offsets = [0, 1], sizes = [16, 1], strides = [1, 1]} : vector<16x3xf32> to vector<16x1xf32>
    %44 = vector.broadcast %43 : vector<16x1xf32> to vector<16x16xf32>
    %45 = arith.addf %42, %44 : vector<16x16xf32>
    %46 = vector.extract_strided_slice %3 {offsets = [0, 6], sizes = [16, 1], strides = [1, 1]} : vector<16x9xf32> to vector<16x1xf32>
    %47 = vector.broadcast %46 : vector<16x1xf32> to vector<16x16xf32>
    %48 = arith.mulf %47, %15 : vector<16x16xf32>
    %49 = vector.extract_strided_slice %3 {offsets = [0, 7], sizes = [16, 1], strides = [1, 1]} : vector<16x9xf32> to vector<16x1xf32>
    %50 = vector.broadcast %49 : vector<16x1xf32> to vector<16x16xf32>
    %51 = arith.mulf %50, %16 : vector<16x16xf32>
    %52 = arith.addf %48, %51 : vector<16x16xf32>
    %53 = vector.extract_strided_slice %3 {offsets = [0, 8], sizes = [16, 1], strides = [1, 1]} : vector<16x9xf32> to vector<16x1xf32>
    %54 = vector.broadcast %53 : vector<16x1xf32> to vector<16x16xf32>
    %55 = arith.mulf %54, %17 : vector<16x16xf32>
    %56 = arith.addf %52, %55 : vector<16x16xf32>
    %57 = vector.extract_strided_slice %5 {offsets = [0, 2], sizes = [16, 1], strides = [1, 1]} : vector<16x3xf32> to vector<16x1xf32>
    %58 = vector.broadcast %57 : vector<16x1xf32> to vector<16x16xf32>
    %59 = arith.addf %56, %58 : vector<16x16xf32>
    %60 = vector.extract_strided_slice %14 {offsets = [0, 0], sizes = [16, 48], strides = [1, 1]} : vector<16x144xf32> to vector<16x48xf32>
    %61 = vector.extract_strided_slice %14 {offsets = [0, 48], sizes = [16, 48], strides = [1, 1]} : vector<16x144xf32> to vector<16x48xf32>
    %62 = vector.extract_strided_slice %14 {offsets = [0, 96], sizes = [16, 48], strides = [1, 1]} : vector<16x144xf32> to vector<16x48xf32>
    %63 = vector.extract_strided_slice %3 {offsets = [0, 0], sizes = [16, 1], strides = [1, 1]} : vector<16x9xf32> to vector<16x1xf32>
    %64 = vector.broadcast %63 : vector<16x1xf32> to vector<16x48xf32>
    %65 = arith.mulf %64, %60 : vector<16x48xf32>
    %66 = vector.extract_strided_slice %3 {offsets = [0, 1], sizes = [16, 1], strides = [1, 1]} : vector<16x9xf32> to vector<16x1xf32>
    %67 = vector.broadcast %66 : vector<16x1xf32> to vector<16x48xf32>
    %68 = arith.mulf %67, %61 : vector<16x48xf32>
    %69 = arith.addf %65, %68 : vector<16x48xf32>
    %70 = vector.extract_strided_slice %3 {offsets = [0, 2], sizes = [16, 1], strides = [1, 1]} : vector<16x9xf32> to vector<16x1xf32>
    %71 = vector.broadcast %70 : vector<16x1xf32> to vector<16x48xf32>
    %72 = arith.mulf %71, %62 : vector<16x48xf32>
    %73 = arith.addf %69, %72 : vector<16x48xf32>
    %74 = vector.extract_strided_slice %5 {offsets = [0, 0], sizes = [16, 1], strides = [1, 1]} : vector<16x3xf32> to vector<16x1xf32>
    %75 = vector.broadcast %74 : vector<16x1xf32> to vector<16x48xf32>
    %76 = arith.addf %73, %75 : vector<16x48xf32>
    %77 = vector.extract_strided_slice %3 {offsets = [0, 3], sizes = [16, 1], strides = [1, 1]} : vector<16x9xf32> to vector<16x1xf32>
    %78 = vector.broadcast %77 : vector<16x1xf32> to vector<16x48xf32>
    %79 = arith.mulf %78, %60 : vector<16x48xf32>
    %80 = vector.extract_strided_slice %3 {offsets = [0, 4], sizes = [16, 1], strides = [1, 1]} : vector<16x9xf32> to vector<16x1xf32>
    %81 = vector.broadcast %80 : vector<16x1xf32> to vector<16x48xf32>
    %82 = arith.mulf %81, %61 : vector<16x48xf32>
    %83 = arith.addf %79, %82 : vector<16x48xf32>
    %84 = vector.extract_strided_slice %3 {offsets = [0, 5], sizes = [16, 1], strides = [1, 1]} : vector<16x9xf32> to vector<16x1xf32>
    %85 = vector.broadcast %84 : vector<16x1xf32> to vector<16x48xf32>
    %86 = arith.mulf %85, %62 : vector<16x48xf32>
    %87 = arith.addf %83, %86 : vector<16x48xf32>
    %88 = vector.extract_strided_slice %5 {offsets = [0, 1], sizes = [16, 1], strides = [1, 1]} : vector<16x3xf32> to vector<16x1xf32>
    %89 = vector.broadcast %88 : vector<16x1xf32> to vector<16x48xf32>
    %90 = arith.addf %87, %89 : vector<16x48xf32>
    %91 = vector.extract_strided_slice %3 {offsets = [0, 6], sizes = [16, 1], strides = [1, 1]} : vector<16x9xf32> to vector<16x1xf32>
    %92 = vector.broadcast %91 : vector<16x1xf32> to vector<16x48xf32>
    %93 = arith.mulf %92, %60 : vector<16x48xf32>
    %94 = vector.extract_strided_slice %3 {offsets = [0, 7], sizes = [16, 1], strides = [1, 1]} : vector<16x9xf32> to vector<16x1xf32>
    %95 = vector.broadcast %94 : vector<16x1xf32> to vector<16x48xf32>
    %96 = arith.mulf %95, %61 : vector<16x48xf32>
    %97 = arith.addf %93, %96 : vector<16x48xf32>
    %98 = vector.extract_strided_slice %3 {offsets = [0, 8], sizes = [16, 1], strides = [1, 1]} : vector<16x9xf32> to vector<16x1xf32>
    %99 = vector.broadcast %98 : vector<16x1xf32> to vector<16x48xf32>
    %100 = arith.mulf %99, %62 : vector<16x48xf32>
    %101 = arith.addf %97, %100 : vector<16x48xf32>
    %102 = vector.extract_strided_slice %5 {offsets = [0, 2], sizes = [16, 1], strides = [1, 1]} : vector<16x3xf32> to vector<16x1xf32>
    %103 = vector.broadcast %102 : vector<16x1xf32> to vector<16x48xf32>
    %104 = arith.addf %101, %103 : vector<16x48xf32>
    %c0_15 = arith.constant 0 : index
    %c0_16 = arith.constant 0 : index
    %105 = memref.load %arg1[%c0_15, %c0_16] : memref<2x4xf32, #tpu.memory_space<smem>>
    %c1 = arith.constant 1 : index
    %c0_17 = arith.constant 0 : index
    %106 = memref.load %arg1[%c1, %c0_17] : memref<2x4xf32, #tpu.memory_space<smem>>
    %107 = vector.extract_strided_slice %11 {offsets = [0, 0], sizes = [16, 8], strides = [1, 1]} : vector<16x32xf32> to vector<16x8xf32>
    %108 = vector.extract_strided_slice %12 {offsets = [0, 0], sizes = [16, 8], strides = [1, 1]} : vector<16x64xf32> to vector<16x8xf32>
    %109 = vector.extract_strided_slice %12 {offsets = [0, 8], sizes = [16, 8], strides = [1, 1]} : vector<16x64xf32> to vector<16x8xf32>
    %110 = vector.extract_strided_slice %31 {offsets = [0, 0], sizes = [16, 4], strides = [1, 1]} : vector<16x16xf32> to vector<16x4xf32>
    %111 = vector.extract_strided_slice %45 {offsets = [0, 0], sizes = [16, 4], strides = [1, 1]} : vector<16x16xf32> to vector<16x4xf32>
    %112 = vector.extract_strided_slice %59 {offsets = [0, 0], sizes = [16, 4], strides = [1, 1]} : vector<16x16xf32> to vector<16x4xf32>
    %113 = tpu.concatenate %110, %111, %112 in 1 : vector<16x4xf32>, vector<16x4xf32>, vector<16x4xf32> -> vector<16x12xf32>
    %114 = vector.extract_strided_slice %76 {offsets = [0, 0], sizes = [16, 4], strides = [1, 1]} : vector<16x48xf32> to vector<16x4xf32>
    %115 = vector.extract_strided_slice %90 {offsets = [0, 0], sizes = [16, 4], strides = [1, 1]} : vector<16x48xf32> to vector<16x4xf32>
    %116 = vector.extract_strided_slice %104 {offsets = [0, 0], sizes = [16, 4], strides = [1, 1]} : vector<16x48xf32> to vector<16x4xf32>
    %117 = tpu.concatenate %114, %115, %116 in 1 : vector<16x4xf32>, vector<16x4xf32>, vector<16x4xf32> -> vector<16x12xf32>
    %118 = vector.extract_strided_slice %76 {offsets = [0, 4], sizes = [16, 8], strides = [1, 1]} : vector<16x48xf32> to vector<16x8xf32>
    %119 = vector.extract_strided_slice %90 {offsets = [0, 4], sizes = [16, 8], strides = [1, 1]} : vector<16x48xf32> to vector<16x8xf32>
    %120 = vector.extract_strided_slice %104 {offsets = [0, 4], sizes = [16, 8], strides = [1, 1]} : vector<16x48xf32> to vector<16x8xf32>
    %121 = tpu.concatenate %118, %119, %120 in 1 : vector<16x8xf32>, vector<16x8xf32>, vector<16x8xf32> -> vector<16x24xf32>
    %122 = arith.mulf %113, %113 : vector<16x12xf32>
    %cst_18 = arith.constant dense<0.000000e+00> : vector<16xf32>
    %123 = vector.multi_reduction <add>, %122, %cst_18 [1] : vector<16x12xf32> to vector<16xf32>
    %124 = vector.shape_cast %123 : vector<16xf32> to vector<16x1xf32>
    %125 = arith.mulf %117, %117 : vector<16x12xf32>
    %cst_19 = arith.constant dense<0.000000e+00> : vector<16xf32>
    %126 = vector.multi_reduction <add>, %125, %cst_19 [1] : vector<16x12xf32> to vector<16xf32>
    %127 = vector.shape_cast %126 : vector<16xf32> to vector<16x1xf32>
    %cst_20 = arith.constant 0.204124153 : f32
    %128 = vector.broadcast %cst_20 : f32 to vector<16x8xf32>
    %129 = arith.mulf %128, %107 : vector<16x8xf32>
    %130 = vector.broadcast %105 : f32 to vector<16x12xf32>
    %131 = arith.mulf %130, %113 : vector<16x12xf32>
    %132 = tpu.concatenate %129, %131, %10 in 1 : vector<16x8xf32>, vector<16x12xf32>, vector<16x1xf32> -> vector<16x21xf32>
    %cst_21 = arith.constant -5.000000e-01 : f32
    %133 = arith.mulf %cst_21, %105 : f32
    %134 = vector.broadcast %133 : f32 to vector<16x1xf32>
    %135 = arith.mulf %134, %127 : vector<16x1xf32>
    %136 = tpu.concatenate %108, %117, %135 in 1 : vector<16x8xf32>, vector<16x12xf32>, vector<16x1xf32> -> vector<16x21xf32>
    "tpu.trace_start"() <{level = 10 : i32, message = "ip,jp->ij"}> : () -> ()
    %cst_22 = arith.constant dense<0.000000e+00> : vector<16x16xf32>
    %137 = tpu.matmul %132, %136, %cst_22 {dimension_numbers = #tpu.dot_dimension_numbers<[1], [1], [0], [0], [0, 0, 1, 0], [], []>} : vector<16x21xf32>, vector<16x21xf32>, vector<16x16xf32> -> vector<16x16xf32>
    "tpu.trace_stop"() : () -> ()
    %c0_23 = arith.constant 0 : index
    %c0_24 = arith.constant 0 : index
    %138 = vector.load %arg7[%c0_23, %c0_24] : memref<4x16xf32, #tpu.memory_space<vmem>>, vector<1x16xf32>
    %139 = vector.shape_cast %138 : vector<1x16xf32> to vector<1x1x16xf32>
    %140 = vector.broadcast %139 : vector<1x1x16xf32> to vector<16x16x16xf32>
    %141 = arith.mulf %7, %140 : vector<16x16x16xf32>
    %cst_25 = arith.constant dense<0.000000e+00> : vector<16x16xf32>
    %142 = vector.multi_reduction <add>, %141, %cst_25 [2] : vector<16x16x16xf32> to vector<16x16xf32>
    %cst_26 = arith.constant 5.000000e-01 : f32
    %143 = arith.mulf %cst_26, %105 : f32
    %144 = vector.broadcast %143 : f32 to vector<16x1xf32>
    %145 = arith.mulf %144, %124 : vector<16x1xf32>
    %146 = vector.broadcast %145 : vector<16x1xf32> to vector<16x16xf32>
    %147 = arith.subf %137, %146 : vector<16x16xf32>
    %148 = arith.addf %147, %142 : vector<16x16xf32>
    %149 = vector.broadcast %106 : f32 to vector<16x16xf32>
    %150 = arith.addf %148, %149 : vector<16x16xf32>
    %151 = arith.addf %150, %9 : vector<16x16xf32>
    %cst_27 = arith.constant dense<0xFF800000> : vector<16xf32>
    %152 = vector.multi_reduction <maximumf>, %151, %cst_27 [1] : vector<16x16xf32> to vector<16xf32>
    %153 = vector.shape_cast %152 : vector<16xf32> to vector<16x1xf32>
    %154 = vector.broadcast %153 : vector<16x1xf32> to vector<16x16xf32>
    %155 = arith.subf %151, %154 : vector<16x16xf32>
    %156 = math.exp %155 : vector<16x16xf32>
    %cst_28 = arith.constant dense<0.000000e+00> : vector<16xf32>
    %157 = vector.multi_reduction <add>, %156, %cst_28 [1] : vector<16x16xf32> to vector<16xf32>
    %158 = vector.shape_cast %157 : vector<16xf32> to vector<16x1xf32>
    %159 = vector.broadcast %158 : vector<16x1xf32> to vector<16x16xf32>
    %160 = arith.divf %156, %159 : vector<16x16xf32>
    %cst_29 = arith.constant dense<0.000000e+00> : vector<16x8xf32>
    %161 = tpu.matmul %160, %109, %cst_29 {dimension_numbers = #tpu.dot_dimension_numbers<[1], [0], [0], [1], [0, 0, 1, 1], [], []>} : vector<16x16xf32>, vector<16x8xf32>, vector<16x8xf32> -> vector<16x8xf32>
    %cst_30 = arith.constant dense<0.000000e+00> : vector<16x24xf32>
    %162 = tpu.matmul %160, %121, %cst_30 {dimension_numbers = #tpu.dot_dimension_numbers<[1], [0], [0], [1], [0, 0, 1, 1], [], []>} : vector<16x16xf32>, vector<16x24xf32>, vector<16x24xf32> -> vector<16x24xf32>
    %163 = vector.extract_strided_slice %162 {offsets = [0, 0], sizes = [16, 8], strides = [1, 1]} : vector<16x24xf32> to vector<16x8xf32>
    %164 = vector.extract_strided_slice %162 {offsets = [0, 8], sizes = [16, 8], strides = [1, 1]} : vector<16x24xf32> to vector<16x8xf32>
    %165 = vector.extract_strided_slice %162 {offsets = [0, 16], sizes = [16, 8], strides = [1, 1]} : vector<16x24xf32> to vector<16x8xf32>
    %166 = vector.shape_cast %160 : vector<16x16xf32> to vector<16x16x1xf32>
    %167 = vector.broadcast %166 : vector<16x16x1xf32> to vector<16x16x16xf32>
    %168 = arith.mulf %167, %7 : vector<16x16x16xf32>
    %cst_31 = arith.constant dense<0.000000e+00> : vector<16x16xf32>
    %169 = vector.multi_reduction <add>, %168, %cst_31 [1] : vector<16x16x16xf32> to vector<16x16xf32>
    %c0_32 = arith.constant 0 : index
    %c1_33 = arith.constant 1 : index
    %170 = memref.load %arg1[%c0_32, %c1_33] : memref<2x4xf32, #tpu.memory_space<smem>>
    %c1_34 = arith.constant 1 : index
    %c1_35 = arith.constant 1 : index
    %171 = memref.load %arg1[%c1_34, %c1_35] : memref<2x4xf32, #tpu.memory_space<smem>>
    %172 = vector.extract_strided_slice %11 {offsets = [0, 8], sizes = [16, 8], strides = [1, 1]} : vector<16x32xf32> to vector<16x8xf32>
    %173 = vector.extract_strided_slice %12 {offsets = [0, 16], sizes = [16, 8], strides = [1, 1]} : vector<16x64xf32> to vector<16x8xf32>
    %174 = vector.extract_strided_slice %12 {offsets = [0, 24], sizes = [16, 8], strides = [1, 1]} : vector<16x64xf32> to vector<16x8xf32>
    %175 = vector.extract_strided_slice %31 {offsets = [0, 4], sizes = [16, 4], strides = [1, 1]} : vector<16x16xf32> to vector<16x4xf32>
    %176 = vector.extract_strided_slice %45 {offsets = [0, 4], sizes = [16, 4], strides = [1, 1]} : vector<16x16xf32> to vector<16x4xf32>
    %177 = vector.extract_strided_slice %59 {offsets = [0, 4], sizes = [16, 4], strides = [1, 1]} : vector<16x16xf32> to vector<16x4xf32>
    %178 = tpu.concatenate %175, %176, %177 in 1 : vector<16x4xf32>, vector<16x4xf32>, vector<16x4xf32> -> vector<16x12xf32>
    %179 = vector.extract_strided_slice %76 {offsets = [0, 12], sizes = [16, 4], strides = [1, 1]} : vector<16x48xf32> to vector<16x4xf32>
    %180 = vector.extract_strided_slice %90 {offsets = [0, 12], sizes = [16, 4], strides = [1, 1]} : vector<16x48xf32> to vector<16x4xf32>
    %181 = vector.extract_strided_slice %104 {offsets = [0, 12], sizes = [16, 4], strides = [1, 1]} : vector<16x48xf32> to vector<16x4xf32>
    %182 = tpu.concatenate %179, %180, %181 in 1 : vector<16x4xf32>, vector<16x4xf32>, vector<16x4xf32> -> vector<16x12xf32>
    %183 = vector.extract_strided_slice %76 {offsets = [0, 16], sizes = [16, 8], strides = [1, 1]} : vector<16x48xf32> to vector<16x8xf32>
    %184 = vector.extract_strided_slice %90 {offsets = [0, 16], sizes = [16, 8], strides = [1, 1]} : vector<16x48xf32> to vector<16x8xf32>
    %185 = vector.extract_strided_slice %104 {offsets = [0, 16], sizes = [16, 8], strides = [1, 1]} : vector<16x48xf32> to vector<16x8xf32>
    %186 = tpu.concatenate %183, %184, %185 in 1 : vector<16x8xf32>, vector<16x8xf32>, vector<16x8xf32> -> vector<16x24xf32>
    %187 = arith.mulf %178, %178 : vector<16x12xf32>
    %cst_36 = arith.constant dense<0.000000e+00> : vector<16xf32>
    %188 = vector.multi_reduction <add>, %187, %cst_36 [1] : vector<16x12xf32> to vector<16xf32>
    %189 = vector.shape_cast %188 : vector<16xf32> to vector<16x1xf32>
    %190 = arith.mulf %182, %182 : vector<16x12xf32>
    %cst_37 = arith.constant dense<0.000000e+00> : vector<16xf32>
    %191 = vector.multi_reduction <add>, %190, %cst_37 [1] : vector<16x12xf32> to vector<16xf32>
    %192 = vector.shape_cast %191 : vector<16xf32> to vector<16x1xf32>
    %cst_38 = arith.constant 0.204124153 : f32
    %193 = vector.broadcast %cst_38 : f32 to vector<16x8xf32>
    %194 = arith.mulf %193, %172 : vector<16x8xf32>
    %195 = vector.broadcast %170 : f32 to vector<16x12xf32>
    %196 = arith.mulf %195, %178 : vector<16x12xf32>
    %197 = tpu.concatenate %194, %196, %10 in 1 : vector<16x8xf32>, vector<16x12xf32>, vector<16x1xf32> -> vector<16x21xf32>
    %cst_39 = arith.constant -5.000000e-01 : f32
    %198 = arith.mulf %cst_39, %170 : f32
    %199 = vector.broadcast %198 : f32 to vector<16x1xf32>
    %200 = arith.mulf %199, %192 : vector<16x1xf32>
    %201 = tpu.concatenate %173, %182, %200 in 1 : vector<16x8xf32>, vector<16x12xf32>, vector<16x1xf32> -> vector<16x21xf32>
    "tpu.trace_start"() <{level = 10 : i32, message = "ip,jp->ij"}> : () -> ()
    %cst_40 = arith.constant dense<0.000000e+00> : vector<16x16xf32>
    %202 = tpu.matmul %197, %201, %cst_40 {dimension_numbers = #tpu.dot_dimension_numbers<[1], [1], [0], [0], [0, 0, 1, 0], [], []>} : vector<16x21xf32>, vector<16x21xf32>, vector<16x16xf32> -> vector<16x16xf32>
    "tpu.trace_stop"() : () -> ()
    %c1_41 = arith.constant 1 : index
    %c0_42 = arith.constant 0 : index
    %203 = vector.load %arg7[%c1_41, %c0_42] : memref<4x16xf32, #tpu.memory_space<vmem>>, vector<1x16xf32>
    %204 = vector.shape_cast %203 : vector<1x16xf32> to vector<1x1x16xf32>
    %205 = vector.broadcast %204 : vector<1x1x16xf32> to vector<16x16x16xf32>
    %206 = arith.mulf %7, %205 : vector<16x16x16xf32>
    %cst_43 = arith.constant dense<0.000000e+00> : vector<16x16xf32>
    %207 = vector.multi_reduction <add>, %206, %cst_43 [2] : vector<16x16x16xf32> to vector<16x16xf32>
    %cst_44 = arith.constant 5.000000e-01 : f32
    %208 = arith.mulf %cst_44, %170 : f32
    %209 = vector.broadcast %208 : f32 to vector<16x1xf32>
    %210 = arith.mulf %209, %189 : vector<16x1xf32>
    %211 = vector.broadcast %210 : vector<16x1xf32> to vector<16x16xf32>
    %212 = arith.subf %202, %211 : vector<16x16xf32>
    %213 = arith.addf %212, %207 : vector<16x16xf32>
    %214 = vector.broadcast %171 : f32 to vector<16x16xf32>
    %215 = arith.addf %213, %214 : vector<16x16xf32>
    %216 = arith.addf %215, %9 : vector<16x16xf32>
    %cst_45 = arith.constant dense<0xFF800000> : vector<16xf32>
    %217 = vector.multi_reduction <maximumf>, %216, %cst_45 [1] : vector<16x16xf32> to vector<16xf32>
    %218 = vector.shape_cast %217 : vector<16xf32> to vector<16x1xf32>
    %219 = vector.broadcast %218 : vector<16x1xf32> to vector<16x16xf32>
    %220 = arith.subf %216, %219 : vector<16x16xf32>
    %221 = math.exp %220 : vector<16x16xf32>
    %cst_46 = arith.constant dense<0.000000e+00> : vector<16xf32>
    %222 = vector.multi_reduction <add>, %221, %cst_46 [1] : vector<16x16xf32> to vector<16xf32>
    %223 = vector.shape_cast %222 : vector<16xf32> to vector<16x1xf32>
    %224 = vector.broadcast %223 : vector<16x1xf32> to vector<16x16xf32>
    %225 = arith.divf %221, %224 : vector<16x16xf32>
    %cst_47 = arith.constant dense<0.000000e+00> : vector<16x8xf32>
    %226 = tpu.matmul %225, %174, %cst_47 {dimension_numbers = #tpu.dot_dimension_numbers<[1], [0], [0], [1], [0, 0, 1, 1], [], []>} : vector<16x16xf32>, vector<16x8xf32>, vector<16x8xf32> -> vector<16x8xf32>
    %cst_48 = arith.constant dense<0.000000e+00> : vector<16x24xf32>
    %227 = tpu.matmul %225, %186, %cst_48 {dimension_numbers = #tpu.dot_dimension_numbers<[1], [0], [0], [1], [0, 0, 1, 1], [], []>} : vector<16x16xf32>, vector<16x24xf32>, vector<16x24xf32> -> vector<16x24xf32>
    %228 = vector.extract_strided_slice %227 {offsets = [0, 0], sizes = [16, 8], strides = [1, 1]} : vector<16x24xf32> to vector<16x8xf32>
    %229 = vector.extract_strided_slice %227 {offsets = [0, 8], sizes = [16, 8], strides = [1, 1]} : vector<16x24xf32> to vector<16x8xf32>
    %230 = vector.extract_strided_slice %227 {offsets = [0, 16], sizes = [16, 8], strides = [1, 1]} : vector<16x24xf32> to vector<16x8xf32>
    %231 = vector.shape_cast %225 : vector<16x16xf32> to vector<16x16x1xf32>
    %232 = vector.broadcast %231 : vector<16x16x1xf32> to vector<16x16x16xf32>
    %233 = arith.mulf %232, %7 : vector<16x16x16xf32>
    %cst_49 = arith.constant dense<0.000000e+00> : vector<16x16xf32>
    %234 = vector.multi_reduction <add>, %233, %cst_49 [1] : vector<16x16x16xf32> to vector<16x16xf32>
    %c0_50 = arith.constant 0 : index
    %c2 = arith.constant 2 : index
    %235 = memref.load %arg1[%c0_50, %c2] : memref<2x4xf32, #tpu.memory_space<smem>>
    %c1_51 = arith.constant 1 : index
    %c2_52 = arith.constant 2 : index
    %236 = memref.load %arg1[%c1_51, %c2_52] : memref<2x4xf32, #tpu.memory_space<smem>>
    %237 = vector.extract_strided_slice %11 {offsets = [0, 16], sizes = [16, 8], strides = [1, 1]} : vector<16x32xf32> to vector<16x8xf32>
    %238 = vector.extract_strided_slice %12 {offsets = [0, 32], sizes = [16, 8], strides = [1, 1]} : vector<16x64xf32> to vector<16x8xf32>
    %239 = vector.extract_strided_slice %12 {offsets = [0, 40], sizes = [16, 8], strides = [1, 1]} : vector<16x64xf32> to vector<16x8xf32>
    %240 = vector.extract_strided_slice %31 {offsets = [0, 8], sizes = [16, 4], strides = [1, 1]} : vector<16x16xf32> to vector<16x4xf32>
    %241 = vector.extract_strided_slice %45 {offsets = [0, 8], sizes = [16, 4], strides = [1, 1]} : vector<16x16xf32> to vector<16x4xf32>
    %242 = vector.extract_strided_slice %59 {offsets = [0, 8], sizes = [16, 4], strides = [1, 1]} : vector<16x16xf32> to vector<16x4xf32>
    %243 = tpu.concatenate %240, %241, %242 in 1 : vector<16x4xf32>, vector<16x4xf32>, vector<16x4xf32> -> vector<16x12xf32>
    %244 = vector.extract_strided_slice %76 {offsets = [0, 24], sizes = [16, 4], strides = [1, 1]} : vector<16x48xf32> to vector<16x4xf32>
    %245 = vector.extract_strided_slice %90 {offsets = [0, 24], sizes = [16, 4], strides = [1, 1]} : vector<16x48xf32> to vector<16x4xf32>
    %246 = vector.extract_strided_slice %104 {offsets = [0, 24], sizes = [16, 4], strides = [1, 1]} : vector<16x48xf32> to vector<16x4xf32>
    %247 = tpu.concatenate %244, %245, %246 in 1 : vector<16x4xf32>, vector<16x4xf32>, vector<16x4xf32> -> vector<16x12xf32>
    %248 = vector.extract_strided_slice %76 {offsets = [0, 28], sizes = [16, 8], strides = [1, 1]} : vector<16x48xf32> to vector<16x8xf32>
    %249 = vector.extract_strided_slice %90 {offsets = [0, 28], sizes = [16, 8], strides = [1, 1]} : vector<16x48xf32> to vector<16x8xf32>
    %250 = vector.extract_strided_slice %104 {offsets = [0, 28], sizes = [16, 8], strides = [1, 1]} : vector<16x48xf32> to vector<16x8xf32>
    %251 = tpu.concatenate %248, %249, %250 in 1 : vector<16x8xf32>, vector<16x8xf32>, vector<16x8xf32> -> vector<16x24xf32>
    %252 = arith.mulf %243, %243 : vector<16x12xf32>
    %cst_53 = arith.constant dense<0.000000e+00> : vector<16xf32>
    %253 = vector.multi_reduction <add>, %252, %cst_53 [1] : vector<16x12xf32> to vector<16xf32>
    %254 = vector.shape_cast %253 : vector<16xf32> to vector<16x1xf32>
    %255 = arith.mulf %247, %247 : vector<16x12xf32>
    %cst_54 = arith.constant dense<0.000000e+00> : vector<16xf32>
    %256 = vector.multi_reduction <add>, %255, %cst_54 [1] : vector<16x12xf32> to vector<16xf32>
    %257 = vector.shape_cast %256 : vector<16xf32> to vector<16x1xf32>
    %cst_55 = arith.constant 0.204124153 : f32
    %258 = vector.broadcast %cst_55 : f32 to vector<16x8xf32>
    %259 = arith.mulf %258, %237 : vector<16x8xf32>
    %260 = vector.broadcast %235 : f32 to vector<16x12xf32>
    %261 = arith.mulf %260, %243 : vector<16x12xf32>
    %262 = tpu.concatenate %259, %261, %10 in 1 : vector<16x8xf32>, vector<16x12xf32>, vector<16x1xf32> -> vector<16x21xf32>
    %cst_56 = arith.constant -5.000000e-01 : f32
    %263 = arith.mulf %cst_56, %235 : f32
    %264 = vector.broadcast %263 : f32 to vector<16x1xf32>
    %265 = arith.mulf %264, %257 : vector<16x1xf32>
    %266 = tpu.concatenate %238, %247, %265 in 1 : vector<16x8xf32>, vector<16x12xf32>, vector<16x1xf32> -> vector<16x21xf32>
    "tpu.trace_start"() <{level = 10 : i32, message = "ip,jp->ij"}> : () -> ()
    %cst_57 = arith.constant dense<0.000000e+00> : vector<16x16xf32>
    %267 = tpu.matmul %262, %266, %cst_57 {dimension_numbers = #tpu.dot_dimension_numbers<[1], [1], [0], [0], [0, 0, 1, 0], [], []>} : vector<16x21xf32>, vector<16x21xf32>, vector<16x16xf32> -> vector<16x16xf32>
    "tpu.trace_stop"() : () -> ()
    %c2_58 = arith.constant 2 : index
    %c0_59 = arith.constant 0 : index
    %268 = vector.load %arg7[%c2_58, %c0_59] : memref<4x16xf32, #tpu.memory_space<vmem>>, vector<1x16xf32>
    %269 = vector.shape_cast %268 : vector<1x16xf32> to vector<1x1x16xf32>
    %270 = vector.broadcast %269 : vector<1x1x16xf32> to vector<16x16x16xf32>
    %271 = arith.mulf %7, %270 : vector<16x16x16xf32>
    %cst_60 = arith.constant dense<0.000000e+00> : vector<16x16xf32>
    %272 = vector.multi_reduction <add>, %271, %cst_60 [2] : vector<16x16x16xf32> to vector<16x16xf32>
    %cst_61 = arith.constant 5.000000e-01 : f32
    %273 = arith.mulf %cst_61, %235 : f32
    %274 = vector.broadcast %273 : f32 to vector<16x1xf32>
    %275 = arith.mulf %274, %254 : vector<16x1xf32>
    %276 = vector.broadcast %275 : vector<16x1xf32> to vector<16x16xf32>
    %277 = arith.subf %267, %276 : vector<16x16xf32>
    %278 = arith.addf %277, %272 : vector<16x16xf32>
    %279 = vector.broadcast %236 : f32 to vector<16x16xf32>
    %280 = arith.addf %278, %279 : vector<16x16xf32>
    %281 = arith.addf %280, %9 : vector<16x16xf32>
    %cst_62 = arith.constant dense<0xFF800000> : vector<16xf32>
    %282 = vector.multi_reduction <maximumf>, %281, %cst_62 [1] : vector<16x16xf32> to vector<16xf32>
    %283 = vector.shape_cast %282 : vector<16xf32> to vector<16x1xf32>
    %284 = vector.broadcast %283 : vector<16x1xf32> to vector<16x16xf32>
    %285 = arith.subf %281, %284 : vector<16x16xf32>
    %286 = math.exp %285 : vector<16x16xf32>
    %cst_63 = arith.constant dense<0.000000e+00> : vector<16xf32>
    %287 = vector.multi_reduction <add>, %286, %cst_63 [1] : vector<16x16xf32> to vector<16xf32>
    %288 = vector.shape_cast %287 : vector<16xf32> to vector<16x1xf32>
    %289 = vector.broadcast %288 : vector<16x1xf32> to vector<16x16xf32>
    %290 = arith.divf %286, %289 : vector<16x16xf32>
    %cst_64 = arith.constant dense<0.000000e+00> : vector<16x8xf32>
    %291 = tpu.matmul %290, %239, %cst_64 {dimension_numbers = #tpu.dot_dimension_numbers<[1], [0], [0], [1], [0, 0, 1, 1], [], []>} : vector<16x16xf32>, vector<16x8xf32>, vector<16x8xf32> -> vector<16x8xf32>
    %cst_65 = arith.constant dense<0.000000e+00> : vector<16x24xf32>
    %292 = tpu.matmul %290, %251, %cst_65 {dimension_numbers = #tpu.dot_dimension_numbers<[1], [0], [0], [1], [0, 0, 1, 1], [], []>} : vector<16x16xf32>, vector<16x24xf32>, vector<16x24xf32> -> vector<16x24xf32>
    %293 = vector.extract_strided_slice %292 {offsets = [0, 0], sizes = [16, 8], strides = [1, 1]} : vector<16x24xf32> to vector<16x8xf32>
    %294 = vector.extract_strided_slice %292 {offsets = [0, 8], sizes = [16, 8], strides = [1, 1]} : vector<16x24xf32> to vector<16x8xf32>
    %295 = vector.extract_strided_slice %292 {offsets = [0, 16], sizes = [16, 8], strides = [1, 1]} : vector<16x24xf32> to vector<16x8xf32>
    %296 = vector.shape_cast %290 : vector<16x16xf32> to vector<16x16x1xf32>
    %297 = vector.broadcast %296 : vector<16x16x1xf32> to vector<16x16x16xf32>
    %298 = arith.mulf %297, %7 : vector<16x16x16xf32>
    %cst_66 = arith.constant dense<0.000000e+00> : vector<16x16xf32>
    %299 = vector.multi_reduction <add>, %298, %cst_66 [1] : vector<16x16x16xf32> to vector<16x16xf32>
    %c0_67 = arith.constant 0 : index
    %c3 = arith.constant 3 : index
    %300 = memref.load %arg1[%c0_67, %c3] : memref<2x4xf32, #tpu.memory_space<smem>>
    %c1_68 = arith.constant 1 : index
    %c3_69 = arith.constant 3 : index
    %301 = memref.load %arg1[%c1_68, %c3_69] : memref<2x4xf32, #tpu.memory_space<smem>>
    %302 = vector.extract_strided_slice %11 {offsets = [0, 24], sizes = [16, 8], strides = [1, 1]} : vector<16x32xf32> to vector<16x8xf32>
    %303 = vector.extract_strided_slice %12 {offsets = [0, 48], sizes = [16, 8], strides = [1, 1]} : vector<16x64xf32> to vector<16x8xf32>
    %304 = vector.extract_strided_slice %12 {offsets = [0, 56], sizes = [16, 8], strides = [1, 1]} : vector<16x64xf32> to vector<16x8xf32>
    %305 = vector.extract_strided_slice %31 {offsets = [0, 12], sizes = [16, 4], strides = [1, 1]} : vector<16x16xf32> to vector<16x4xf32>
    %306 = vector.extract_strided_slice %45 {offsets = [0, 12], sizes = [16, 4], strides = [1, 1]} : vector<16x16xf32> to vector<16x4xf32>
    %307 = vector.extract_strided_slice %59 {offsets = [0, 12], sizes = [16, 4], strides = [1, 1]} : vector<16x16xf32> to vector<16x4xf32>
    %308 = tpu.concatenate %305, %306, %307 in 1 : vector<16x4xf32>, vector<16x4xf32>, vector<16x4xf32> -> vector<16x12xf32>
    %309 = vector.extract_strided_slice %76 {offsets = [0, 36], sizes = [16, 4], strides = [1, 1]} : vector<16x48xf32> to vector<16x4xf32>
    %310 = vector.extract_strided_slice %90 {offsets = [0, 36], sizes = [16, 4], strides = [1, 1]} : vector<16x48xf32> to vector<16x4xf32>
    %311 = vector.extract_strided_slice %104 {offsets = [0, 36], sizes = [16, 4], strides = [1, 1]} : vector<16x48xf32> to vector<16x4xf32>
    %312 = tpu.concatenate %309, %310, %311 in 1 : vector<16x4xf32>, vector<16x4xf32>, vector<16x4xf32> -> vector<16x12xf32>
    %313 = vector.extract_strided_slice %76 {offsets = [0, 40], sizes = [16, 8], strides = [1, 1]} : vector<16x48xf32> to vector<16x8xf32>
    %314 = vector.extract_strided_slice %90 {offsets = [0, 40], sizes = [16, 8], strides = [1, 1]} : vector<16x48xf32> to vector<16x8xf32>
    %315 = vector.extract_strided_slice %104 {offsets = [0, 40], sizes = [16, 8], strides = [1, 1]} : vector<16x48xf32> to vector<16x8xf32>
    %316 = tpu.concatenate %313, %314, %315 in 1 : vector<16x8xf32>, vector<16x8xf32>, vector<16x8xf32> -> vector<16x24xf32>
    %317 = arith.mulf %308, %308 : vector<16x12xf32>
    %cst_70 = arith.constant dense<0.000000e+00> : vector<16xf32>
    %318 = vector.multi_reduction <add>, %317, %cst_70 [1] : vector<16x12xf32> to vector<16xf32>
    %319 = vector.shape_cast %318 : vector<16xf32> to vector<16x1xf32>
    %320 = arith.mulf %312, %312 : vector<16x12xf32>
    %cst_71 = arith.constant dense<0.000000e+00> : vector<16xf32>
    %321 = vector.multi_reduction <add>, %320, %cst_71 [1] : vector<16x12xf32> to vector<16xf32>
    %322 = vector.shape_cast %321 : vector<16xf32> to vector<16x1xf32>
    %cst_72 = arith.constant 0.204124153 : f32
    %323 = vector.broadcast %cst_72 : f32 to vector<16x8xf32>
    %324 = arith.mulf %323, %302 : vector<16x8xf32>
    %325 = vector.broadcast %300 : f32 to vector<16x12xf32>
    %326 = arith.mulf %325, %308 : vector<16x12xf32>
    %327 = tpu.concatenate %324, %326, %10 in 1 : vector<16x8xf32>, vector<16x12xf32>, vector<16x1xf32> -> vector<16x21xf32>
    %cst_73 = arith.constant -5.000000e-01 : f32
    %328 = arith.mulf %cst_73, %300 : f32
    %329 = vector.broadcast %328 : f32 to vector<16x1xf32>
    %330 = arith.mulf %329, %322 : vector<16x1xf32>
    %331 = tpu.concatenate %303, %312, %330 in 1 : vector<16x8xf32>, vector<16x12xf32>, vector<16x1xf32> -> vector<16x21xf32>
    "tpu.trace_start"() <{level = 10 : i32, message = "ip,jp->ij"}> : () -> ()
    %cst_74 = arith.constant dense<0.000000e+00> : vector<16x16xf32>
    %332 = tpu.matmul %327, %331, %cst_74 {dimension_numbers = #tpu.dot_dimension_numbers<[1], [1], [0], [0], [0, 0, 1, 0], [], []>} : vector<16x21xf32>, vector<16x21xf32>, vector<16x16xf32> -> vector<16x16xf32>
    "tpu.trace_stop"() : () -> ()
    %c3_75 = arith.constant 3 : index
    %c0_76 = arith.constant 0 : index
    %333 = vector.load %arg7[%c3_75, %c0_76] : memref<4x16xf32, #tpu.memory_space<vmem>>, vector<1x16xf32>
    %334 = vector.shape_cast %333 : vector<1x16xf32> to vector<1x1x16xf32>
    %335 = vector.broadcast %334 : vector<1x1x16xf32> to vector<16x16x16xf32>
    %336 = arith.mulf %7, %335 : vector<16x16x16xf32>
    %cst_77 = arith.constant dense<0.000000e+00> : vector<16x16xf32>
    %337 = vector.multi_reduction <add>, %336, %cst_77 [2] : vector<16x16x16xf32> to vector<16x16xf32>
    %cst_78 = arith.constant 5.000000e-01 : f32
    %338 = arith.mulf %cst_78, %300 : f32
    %339 = vector.broadcast %338 : f32 to vector<16x1xf32>
    %340 = arith.mulf %339, %319 : vector<16x1xf32>
    %341 = vector.broadcast %340 : vector<16x1xf32> to vector<16x16xf32>
    %342 = arith.subf %332, %341 : vector<16x16xf32>
    %343 = arith.addf %342, %337 : vector<16x16xf32>
    %344 = vector.broadcast %301 : f32 to vector<16x16xf32>
    %345 = arith.addf %343, %344 : vector<16x16xf32>
    %346 = arith.addf %345, %9 : vector<16x16xf32>
    %cst_79 = arith.constant dense<0xFF800000> : vector<16xf32>
    %347 = vector.multi_reduction <maximumf>, %346, %cst_79 [1] : vector<16x16xf32> to vector<16xf32>
    %348 = vector.shape_cast %347 : vector<16xf32> to vector<16x1xf32>
    %349 = vector.broadcast %348 : vector<16x1xf32> to vector<16x16xf32>
    %350 = arith.subf %346, %349 : vector<16x16xf32>
    %351 = math.exp %350 : vector<16x16xf32>
    %cst_80 = arith.constant dense<0.000000e+00> : vector<16xf32>
    %352 = vector.multi_reduction <add>, %351, %cst_80 [1] : vector<16x16xf32> to vector<16xf32>
    %353 = vector.shape_cast %352 : vector<16xf32> to vector<16x1xf32>
    %354 = vector.broadcast %353 : vector<16x1xf32> to vector<16x16xf32>
    %355 = arith.divf %351, %354 : vector<16x16xf32>
    %cst_81 = arith.constant dense<0.000000e+00> : vector<16x8xf32>
    %356 = tpu.matmul %355, %304, %cst_81 {dimension_numbers = #tpu.dot_dimension_numbers<[1], [0], [0], [1], [0, 0, 1, 1], [], []>} : vector<16x16xf32>, vector<16x8xf32>, vector<16x8xf32> -> vector<16x8xf32>
    %cst_82 = arith.constant dense<0.000000e+00> : vector<16x24xf32>
    %357 = tpu.matmul %355, %316, %cst_82 {dimension_numbers = #tpu.dot_dimension_numbers<[1], [0], [0], [1], [0, 0, 1, 1], [], []>} : vector<16x16xf32>, vector<16x24xf32>, vector<16x24xf32> -> vector<16x24xf32>
    %358 = vector.extract_strided_slice %357 {offsets = [0, 0], sizes = [16, 8], strides = [1, 1]} : vector<16x24xf32> to vector<16x8xf32>
    %359 = vector.extract_strided_slice %357 {offsets = [0, 8], sizes = [16, 8], strides = [1, 1]} : vector<16x24xf32> to vector<16x8xf32>
    %360 = vector.extract_strided_slice %357 {offsets = [0, 16], sizes = [16, 8], strides = [1, 1]} : vector<16x24xf32> to vector<16x8xf32>
    %361 = vector.shape_cast %355 : vector<16x16xf32> to vector<16x16x1xf32>
    %362 = vector.broadcast %361 : vector<16x16x1xf32> to vector<16x16x16xf32>
    %363 = arith.mulf %362, %7 : vector<16x16x16xf32>
    %cst_83 = arith.constant dense<0.000000e+00> : vector<16x16xf32>
    %364 = vector.multi_reduction <add>, %363, %cst_83 [1] : vector<16x16x16xf32> to vector<16x16xf32>
    %365 = tpu.concatenate %161, %226, %291, %356 in 1 : vector<16x8xf32>, vector<16x8xf32>, vector<16x8xf32>, vector<16x8xf32> -> vector<16x32xf32>
    %366 = tpu.concatenate %163, %228, %293, %358 in 1 : vector<16x8xf32>, vector<16x8xf32>, vector<16x8xf32>, vector<16x8xf32> -> vector<16x32xf32>
    %367 = tpu.concatenate %164, %229, %294, %359 in 1 : vector<16x8xf32>, vector<16x8xf32>, vector<16x8xf32>, vector<16x8xf32> -> vector<16x32xf32>
    %368 = tpu.concatenate %165, %230, %295, %360 in 1 : vector<16x8xf32>, vector<16x8xf32>, vector<16x8xf32>, vector<16x8xf32> -> vector<16x32xf32>
    %369 = tpu.concatenate %169, %234, %299, %364 in 1 : vector<16x16xf32>, vector<16x16xf32>, vector<16x16xf32>, vector<16x16xf32> -> vector<16x64xf32>
    %370 = vector.extract_strided_slice %5 {offsets = [0, 0], sizes = [16, 1], strides = [1, 1]} : vector<16x3xf32> to vector<16x1xf32>
    %371 = vector.broadcast %370 : vector<16x1xf32> to vector<16x32xf32>
    %372 = arith.subf %366, %371 : vector<16x32xf32>
    %373 = vector.extract_strided_slice %5 {offsets = [0, 1], sizes = [16, 1], strides = [1, 1]} : vector<16x3xf32> to vector<16x1xf32>
    %374 = vector.broadcast %373 : vector<16x1xf32> to vector<16x32xf32>
    %375 = arith.subf %367, %374 : vector<16x32xf32>
    %376 = vector.extract_strided_slice %5 {offsets = [0, 2], sizes = [16, 1], strides = [1, 1]} : vector<16x3xf32> to vector<16x1xf32>
    %377 = vector.broadcast %376 : vector<16x1xf32> to vector<16x32xf32>
    %378 = arith.subf %368, %377 : vector<16x32xf32>
    %379 = vector.extract_strided_slice %3 {offsets = [0, 0], sizes = [16, 1], strides = [1, 1]} : vector<16x9xf32> to vector<16x1xf32>
    %380 = vector.broadcast %379 : vector<16x1xf32> to vector<16x32xf32>
    %381 = arith.mulf %380, %372 : vector<16x32xf32>
    %382 = vector.extract_strided_slice %3 {offsets = [0, 3], sizes = [16, 1], strides = [1, 1]} : vector<16x9xf32> to vector<16x1xf32>
    %383 = vector.broadcast %382 : vector<16x1xf32> to vector<16x32xf32>
    %384 = arith.mulf %383, %375 : vector<16x32xf32>
    %385 = arith.addf %381, %384 : vector<16x32xf32>
    %386 = vector.extract_strided_slice %3 {offsets = [0, 6], sizes = [16, 1], strides = [1, 1]} : vector<16x9xf32> to vector<16x1xf32>
    %387 = vector.broadcast %386 : vector<16x1xf32> to vector<16x32xf32>
    %388 = arith.mulf %387, %378 : vector<16x32xf32>
    %389 = arith.addf %385, %388 : vector<16x32xf32>
    %390 = vector.extract_strided_slice %3 {offsets = [0, 1], sizes = [16, 1], strides = [1, 1]} : vector<16x9xf32> to vector<16x1xf32>
    %391 = vector.broadcast %390 : vector<16x1xf32> to vector<16x32xf32>
    %392 = arith.mulf %391, %372 : vector<16x32xf32>
    %393 = vector.extract_strided_slice %3 {offsets = [0, 4], sizes = [16, 1], strides = [1, 1]} : vector<16x9xf32> to vector<16x1xf32>
    %394 = vector.broadcast %393 : vector<16x1xf32> to vector<16x32xf32>
    %395 = arith.mulf %394, %375 : vector<16x32xf32>
    %396 = arith.addf %392, %395 : vector<16x32xf32>
    %397 = vector.extract_strided_slice %3 {offsets = [0, 7], sizes = [16, 1], strides = [1, 1]} : vector<16x9xf32> to vector<16x1xf32>
    %398 = vector.broadcast %397 : vector<16x1xf32> to vector<16x32xf32>
    %399 = arith.mulf %398, %378 : vector<16x32xf32>
    %400 = arith.addf %396, %399 : vector<16x32xf32>
    %401 = vector.extract_strided_slice %3 {offsets = [0, 2], sizes = [16, 1], strides = [1, 1]} : vector<16x9xf32> to vector<16x1xf32>
    %402 = vector.broadcast %401 : vector<16x1xf32> to vector<16x32xf32>
    %403 = arith.mulf %402, %372 : vector<16x32xf32>
    %404 = vector.extract_strided_slice %3 {offsets = [0, 5], sizes = [16, 1], strides = [1, 1]} : vector<16x9xf32> to vector<16x1xf32>
    %405 = vector.broadcast %404 : vector<16x1xf32> to vector<16x32xf32>
    %406 = arith.mulf %405, %375 : vector<16x32xf32>
    %407 = arith.addf %403, %406 : vector<16x32xf32>
    %408 = vector.extract_strided_slice %3 {offsets = [0, 8], sizes = [16, 1], strides = [1, 1]} : vector<16x9xf32> to vector<16x1xf32>
    %409 = vector.broadcast %408 : vector<16x1xf32> to vector<16x32xf32>
    %410 = arith.mulf %409, %378 : vector<16x32xf32>
    %411 = arith.addf %407, %410 : vector<16x32xf32>
    %412 = arith.mulf %389, %389 : vector<16x32xf32>
    %413 = arith.mulf %400, %400 : vector<16x32xf32>
    %414 = arith.addf %412, %413 : vector<16x32xf32>
    %415 = arith.mulf %411, %411 : vector<16x32xf32>
    %416 = arith.addf %414, %415 : vector<16x32xf32>
    %cst_84 = arith.constant 9.99999993E-9 : f32
    %417 = vector.broadcast %cst_84 : f32 to vector<16x32xf32>
    %418 = arith.addf %416, %417 : vector<16x32xf32>
    %419 = math.sqrt %418 : vector<16x32xf32>
    %420 = tpu.concatenate %365, %389, %400, %411, %419, %369 in 1 : vector<16x32xf32>, vector<16x32xf32>, vector<16x32xf32>, vector<16x32xf32>, vector<16x32xf32>, vector<16x64xf32> -> vector<16x224xf32>
    %c0_85 = arith.constant 0 : index
    %c0_86 = arith.constant 0 : index
    %421 = vector.load %arg8[%c0_85, %c0_86] : memref<224x32xf32, #tpu.memory_space<vmem>>, vector<224x32xf32>
    %cst_87 = arith.constant dense<0.000000e+00> : vector<16x32xf32>
    %422 = tpu.matmul %420, %421, %cst_87 {dimension_numbers = #tpu.dot_dimension_numbers<[1], [0], [0], [1], [0, 0, 1, 1], [], []>} : vector<16x224xf32>, vector<224x32xf32>, vector<16x32xf32> -> vector<16x32xf32>
    %c0_88 = arith.constant 0 : index
    %c0_89 = arith.constant 0 : index
    %423 = vector.load %arg9[%c0_88, %c0_89] : memref<1x32xf32, #tpu.memory_space<vmem>>, vector<1x32xf32>
    %424 = vector.broadcast %423 : vector<1x32xf32> to vector<16x32xf32>
    %425 = arith.addf %422, %424 : vector<16x32xf32>
    %c0_90 = arith.constant 0 : index
    %c0_91 = arith.constant 0 : index
    %c0_92 = arith.constant 0 : index
    %426 = vector.load %arg10[%c0_90, %c0_91, %c0_92] : memref<1x16x32xf32, #tpu.memory_space<vmem>>, vector<1x16x32xf32>
    %427 = vector.shape_cast %426 : vector<1x16x32xf32> to vector<16x32xf32>
    %428 = vector.shape_cast %425 : vector<16x32xf32> to vector<1x16x32xf32>
    tpu.vector_store %arg10[%c0_90, %c0_91, %c0_92], %428 {strides = array<i32>} : memref<1x16x32xf32, #tpu.memory_space<vmem>>, vector<1x16x32xf32>,
    return
  }
  func.func @transform_0(%arg0: i32) -> (i32, i32) {
    %c0_i32 = arith.constant 0 : i32
    %c0_i32_0 = arith.constant 0 : i32
    %c0_i32_1 = arith.constant 0 : i32
    return %c0_i32, %c0_i32_0 : i32, i32
  }
  func.func @transform_1(%arg0: i32) -> (i32, i32, i32) {
    %c0_i32 = arith.constant 0 : i32
    %c0_i32_0 = arith.constant 0 : i32
    %c0_i32_1 = arith.constant 0 : i32
    return %arg0, %c0_i32, %c0_i32_0 : i32, i32, i32
  }
  func.func @transform_2(%arg0: i32) -> (i32, i32, i32) {
    %c0_i32 = arith.constant 0 : i32
    %c0_i32_0 = arith.constant 0 : i32
    %c0_i32_1 = arith.constant 0 : i32
    return %arg0, %c0_i32, %c0_i32_0 : i32, i32, i32
  }
  func.func @transform_3(%arg0: i32) -> (i32, i32, i32) {
    %c0_i32 = arith.constant 0 : i32
    %c0_i32_0 = arith.constant 0 : i32
    %c0_i32_1 = arith.constant 0 : i32
    return %arg0, %c0_i32, %c0_i32_0 : i32, i32, i32
  }
  func.func @transform_4(%arg0: i32) -> (i32, i32, i32, i32) {
    %c0_i32 = arith.constant 0 : i32
    %c0_i32_0 = arith.constant 0 : i32
    %c0_i32_1 = arith.constant 0 : i32
    %c0_i32_2 = arith.constant 0 : i32
    return %arg0, %c0_i32, %c0_i32_0, %c0_i32_1 : i32, i32, i32, i32
  }
  func.func @transform_5(%arg0: i32) -> (i32, i32, i32) {
    %c0_i32 = arith.constant 0 : i32
    %c0_i32_0 = arith.constant 0 : i32
    %c0_i32_1 = arith.constant 0 : i32
    return %arg0, %c0_i32, %c0_i32_0 : i32, i32, i32
  }
  func.func @transform_6(%arg0: i32) -> (i32, i32) {
    %c0_i32 = arith.constant 0 : i32
    %c0_i32_0 = arith.constant 0 : i32
    %c0_i32_1 = arith.constant 0 : i32
    return %c0_i32, %c0_i32_0 : i32, i32
  }
  func.func @transform_7(%arg0: i32) -> (i32, i32) {
    %c0_i32 = arith.constant 0 : i32
    %c0_i32_0 = arith.constant 0 : i32
    %c0_i32_1 = arith.constant 0 : i32
    return %c0_i32, %c0_i32_0 : i32, i32
  }
  func.func @transform_8(%arg0: i32) -> (i32, i32) {
    %c0_i32 = arith.constant 0 : i32
    %c0_i32_0 = arith.constant 0 : i32
    %c0_i32_1 = arith.constant 0 : i32
    return %c0_i32, %c0_i32_0 : i32, i32
  }
  func.func @transform_9(%arg0: i32) -> (i32, i32, i32) {
    %c0_i32 = arith.constant 0 : i32
    %c0_i32_0 = arith.constant 0 : i32
    %c0_i32_1 = arith.constant 0 : i32
    return %arg0, %c0_i32, %c0_i32_0 : i32, i32, i32
  }
}

</mosaic_0001>

<llo_original>
// kernel: ipa_forward_pallas.2
$region0: #{ipa_forward_pallas.2}
  #allocation0 [shape = 'u32[]', space=smem, size = 0x4, offset = 0x4, fixed_abs, tag = 'smem constant byte address 0x4 - core index']
  #allocation1 [shape = 'u32[72,128]{1,0:T(1,128)}', space=vmem, size = 0x9000, scoped, tag = 'internal scratch']
  %s0 = inlined_call_operand.vmem [shape: f32[32,32], index: 0, kind: input, shape index: {}]
  %s1 = inlined_call_operand.vmem [shape: f32[32,288], index: 1, kind: input, shape index: {}]
  %s2 = inlined_call_operand.vmem [shape: f32[1,288], index: 2, kind: input, shape index: {}]
  %s3 = inlined_call_operand.vmem [shape: f32[32,288], index: 3, kind: output, shape index: {}]
  %s4 = sld [smem:[#allocation0]]
  $region22: #{ipa_forward_pallas.2} parent=0
    _
  %s6 = ssub.s32 1, %s4
  %s7 = scalar_select 0, %s6, %s4
  // Predicated region
  $region2: #{ipa_forward_pallas.2} parent=0 // pred_check
    _
  $region3: #{ipa_forward_pallas.2} parent=0 // pred_check_branch
    %9 = sbr.rel (0) target = $region5
  $region4: #{ipa_forward_pallas.2} parent=0 // pred_region
    _
  $region5: #{ipa_forward_pallas.2} parent=0 // pred_fallthru
    _
  // Predicated region
  $region6: #{ipa_forward_pallas.2} parent=0 // pred_check
    _
  $region7: #{ipa_forward_pallas.2} parent=0 // pred_check_branch
    %11 = sbr.rel (0) target = $region9
  $region8: #{ipa_forward_pallas.2} parent=0 // pred_region
    _
  $region9: #{ipa_forward_pallas.2} parent=0 // pred_fallthru
    _
  // Predicated region
  $region10: #{ipa_forward_pallas.2} parent=0 // pred_check
    _
  $region11: #{ipa_forward_pallas.2} parent=0 // pred_check_branch
    %13 = sbr.rel (0) target = $region13
  $region12: #{ipa_forward_pallas.2} parent=0 // pred_region
    _
  $region13: #{ipa_forward_pallas.2} parent=0 // pred_fallthru
    _
  %v14 = vld [vmem:[%s0] sm:$0xff]
  %v15 = vld [vmem:[%s0 + $0x8] sm:$0xff]
  %v16 = vld [vmem:[%s0 + $0x10] sm:$0xff]
  %v17 = vld [vmem:[%s0 + $0x18] sm:$0xff]
  %v18 = vld [vmem:[%s1] sm:$0xff]
  %v19 = vld [vmem:[%s1 + $0x8] sm:$0xff]
  %v20 = vld [vmem:[%s1 + $0x10] sm:$0xff]
  %v21 = vld [vmem:[%s1 + $0x18] sm:$0xff]
  %v22 = vld [vmem:[%s1 + $0x20] sm:$0xff]
  %v23 = vld [vmem:[%s1 + $0x28] sm:$0xff]
  %v24 = vld [vmem:[%s1 + $0x30] sm:$0xff]
  %v25 = vld [vmem:[%s1 + $0x38] sm:$0xff]
  %v26 = vld [vmem:[%s1 + $0x40] sm:$0xff]
  %v27 = vld [vmem:[%s1 + $0x48] sm:$0xff]
  %v28 = vld [vmem:[%s1 + $0x50] sm:$0xff]
  %v29 = vld [vmem:[%s1 + $0x58] sm:$0xff]
  %v30 = vld [vmem:[%s2] sm:$0x7]
  %v32 = vperm.slane %v30, 0
  %v33 = vperm.slane %v30, 1
  %v34 = vperm.slane %v30, 2
  %vm38 = vcmask 261120
  %v40 = vsel %vm38, %v14, 0
  %v43 = vsel %vm38, %v15, 0
  %v46 = vsel %vm38, %v16, 0
  %v49 = vsel %vm38, %v17, 0
  %51 = vmatpush.msra.mxu0 0.0
  %52 = vmatpush.msra.mxu0 0.0
  %53 = vmatpush.msra.mxu0 0.0
  %54 = vmatpush.msra.mxu0 0.0
  %55 = vmatpush.msra.mxu0 0.0
  %56 = vmatpush.msra.mxu0 0.0
  %57 = vmatpush.msra.mxu0 0.0
  %58 = vmatpush.msra.mxu0 0.0
  %59 = vmatpush.msra.mxu0 0.0
  %60 = vmatpush.msra.mxu0 0.0
  %61 = vmatpush.msra.mxu0 0.0
  %62 = vmatpush.msra.mxu0 0.0
  %63 = vmatpush.msra.mxu0 %v27
  %64 = vmatpush.msra.mxu0 %v24
  %65 = vmatpush.msra.mxu0 %v21
  %66 = vmatpush.msra.mxu0 %v18
  %67 = vmatmul.f32.gmra.mxu0 %v40
  %v68 = vpop.f32.mrf.mxu0
  %v69 = vadd.f32 %v32, %v68
  %70 = vmatmul.f32.gmra.mxu0 %v43
  %v71 = vpop.f32.mrf.mxu0
  %v72 = vadd.f32 %v32, %v71
  %73 = vmatmul.f32.gmra.mxu0 %v46
  %v74 = vpop.f32.mrf.mxu0
  %v75 = vadd.f32 %v32, %v74
  %76 = vmatmul.f32.gmra.mxu0 %v49
  %v77 = vpop.f32.mrf.mxu0
  %v78 = vadd.f32 %v32, %v77
  %79 = vdwg.mxu0
  %80 = vmatpush.msra.mxu0 0.0
  %81 = vmatpush.msra.mxu0 0.0
  %82 = vmatpush.msra.mxu0 0.0
  %83 = vmatpush.msra.mxu0 0.0
  %84 = vmatpush.msra.mxu0 0.0
  %85 = vmatpush.msra.mxu0 0.0
  %86 = vmatpush.msra.mxu0 0.0
  %87 = vmatpush.msra.mxu0 0.0
  %88 = vmatpush.msra.mxu0 0.0
  %89 = vmatpush.msra.mxu0 0.0
  %90 = vmatpush.msra.mxu0 0.0
  %91 = vmatpush.msra.mxu0 0.0
  %92 = vmatpush.msra.mxu0 %v28
  %93 = vmatpush.msra.mxu0 %v25
  %94 = vmatpush.msra.mxu0 %v22
  %95 = vmatpush.msra.mxu0 %v19
  %96 = vmatmul.f32.gmra.mxu0 %v40
  %v97 = vpop.f32.mrf.mxu0
  %v98 = vadd.f32 %v33, %v97
  %99 = vmatmul.f32.gmra.mxu0 %v43
  %v100 = vpop.f32.mrf.mxu0
  %v101 = vadd.f32 %v33, %v100
  %102 = vmatmul.f32.gmra.mxu0 %v46
  %v103 = vpop.f32.mrf.mxu0
  %v104 = vadd.f32 %v33, %v103
  %105 = vmatmul.f32.gmra.mxu0 %v49
  %v106 = vpop.f32.mrf.mxu0
  %v107 = vadd.f32 %v33, %v106
  %108 = vdwg.mxu0
  %109 = vmatpush.msra.mxu0 0.0
  %110 = vmatpush.msra.mxu0 0.0
  %111 = vmatpush.msra.mxu0 0.0
  %112 = vmatpush.msra.mxu0 0.0
  %113 = vmatpush.msra.mxu0 0.0
  %114 = vmatpush.msra.mxu0 0.0
  %115 = vmatpush.msra.mxu0 0.0
  %116 = vmatpush.msra.mxu0 0.0
  %117 = vmatpush.msra.mxu0 0.0
  %118 = vmatpush.msra.mxu0 0.0
  %119 = vmatpush.msra.mxu0 0.0
  %120 = vmatpush.msra.mxu0 0.0
  %121 = vmatpush.msra.mxu0 %v29
  %122 = vmatpush.msra.mxu0 %v26
  %123 = vmatpush.msra.mxu0 %v23
  %124 = vmatpush.msra.mxu0 %v20
  %125 = vmatmul.f32.gmra.mxu0 %v40
  %v126 = vpop.f32.mrf.mxu0
  %v127 = vadd.f32 %v34, %v126
  %128 = vmatmul.f32.gmra.mxu0 %v43
  %v129 = vpop.f32.mrf.mxu0
  %v130 = vadd.f32 %v34, %v129
  %131 = vmatmul.f32.gmra.mxu0 %v46
  %v132 = vpop.f32.mrf.mxu0
  %v133 = vadd.f32 %v34, %v132
  %134 = vmatmul.f32.gmra.mxu0 %v49
  %v135 = vpop.f32.mrf.mxu0
  %v136 = vadd.f32 %v34, %v135
  %137 = vdwg.mxu0
  %138 = vst [vmem:[%s3] sm:$0xff] %v69
  %139 = vst [vmem:[%s3 + $0x8] sm:$0xff] %v98
  %140 = vst.msk [vmem:[%s3 + $0x10] sm:$0xff] %vm38, %v127
  %141 = vst [vmem:[%s3 + $0x18] sm:$0xff] %v72
  %142 = vst [vmem:[%s3 + $0x20] sm:$0xff] %v101
  %143 = vst.msk [vmem:[%s3 + $0x28] sm:$0xff] %vm38, %v130
  %144 = vst [vmem:[%s3 + $0x30] sm:$0xff] %v75
  %145 = vst [vmem:[%s3 + $0x38] sm:$0xff] %v104
  %146 = vst.msk [vmem:[%s3 + $0x40] sm:$0xff] %vm38, %v133
  %147 = vst [vmem:[%s3 + $0x48] sm:$0xff] %v78
  %148 = vst [vmem:[%s3 + $0x50] sm:$0xff] %v107
  %149 = vst.msk [vmem:[%s3 + $0x58] sm:$0xff] %vm38, %v136
  // Predicated region
  $region14: #{ipa_forward_pallas.2} parent=0 // pred_check
    _
  $region15: #{ipa_forward_pallas.2} parent=0 // pred_check_branch
    %151 = sbr.rel (0) target = $region17
  $region16: #{ipa_forward_pallas.2} parent=0 // pred_region
    _
  $region17: #{ipa_forward_pallas.2} parent=0 // pred_fallthru
    _
  // Predicated region
  $region18: #{ipa_forward_pallas.2} parent=0 // pred_check
    _
  $region19: #{ipa_forward_pallas.2} parent=0 // pred_check_branch
    %153 = sbr.rel (0) target = $region21
  $region20: #{ipa_forward_pallas.2} parent=0 // pred_region
    _
  $region21: #{ipa_forward_pallas.2} parent=0 // pred_fallthru
    _

// kernel: ipa_forward_pallas.3
$region0: #{ipa_forward_pallas.3}
  #allocation0 [shape = 'u32[]', space=smem, size = 0x4, offset = 0x4, fixed_abs, tag = 'smem constant byte address 0x4 - core index']
  #allocation1 [shape = 'u32[72,128]{1,0:T(1,128)}', space=vmem, size = 0x9000, scoped, tag = 'internal scratch']
  %s0 = inlined_call_operand.vmem [shape: f32[2,4], index: 0, kind: input, shape index: {}]
  %s1 = inlined_call_operand.vmem [shape: f32[2,16,288], index: 1, kind: input, shape index: {}]
  %s2 = inlined_call_operand.vmem [shape: f32[2,16,9], index: 2, kind: input, shape index: {}]
  %s3 = inlined_call_operand.vmem [shape: f32[2,16,3], index: 3, kind: input, shape index: {}]
  %s4 = inlined_call_operand.hbm [shape: f32[2,16,16,16], index: 4, kind: input, shape index: {}]
  %s5 = inlined_call_operand.vmem [shape: f32[2,16,16], index: 5, kind: input, shape index: {}]
  %s6 = inlined_call_operand.vmem [shape: f32[4,16], index: 6, kind: input, shape index: {}]
  %s7 = inlined_call_operand.vmem [shape: f32[224,32], index: 7, kind: input, shape index: {}]
  %s8 = inlined_call_operand.vmem [shape: f32[1,32], index: 8, kind: input, shape index: {}]
  %s9 = inlined_call_operand.hbm [shape: f32[2,16,32], index: 9, kind: output, shape index: {}]
  %s10 = sld [smem:[#allocation0]]
  $region77: #{ipa_forward_pallas.3} parent=0
    _
  %s12 = ssub.s32 1, %s10
  %s13 = scalar_select 0, %s12, %s10
  $region1: #{ipa_forward_pallas.3} parent=0
    #allocation2 [shape = 'u8[1024]{0}', space=smem, size = 0x400, scoped, tag = 'input window, operand 0, single buffered']
    #allocation3 [shape = 's32[2]{0}', space=sflag, size = 0x8, scoped, tag = 'scoped memory for ipa_forward_pallas.3']
    #allocation4 [shape = 's32[2]{0}', space=sflag, size = 0x8, scoped, tag = 'scoped memory for ipa_forward_pallas.3']
    #allocation5 [shape = 's32[2]{0}', space=sflag, size = 0x8, scoped, tag = 'scoped memory for ipa_forward_pallas.3']
    #allocation6 [shape = 'u8[262144]{0}', space=vmem, size = 0x40000, scoped, tag = 'input window, operand 4']
    #allocation7 [shape = 'u8[16384]{0}', space=vmem, size = 0x4000, scoped, tag = 'output window, operand 0']
    %14 = vsyncpa [#allocation5], 0
    %15 = vsyncpa [#allocation3], 0
    %s16 = scalar_lea.sflag [#allocation3], 1
    %17 = vsyncpa %s16, 0
    %18 = vsyncpa [#allocation4], 0
    %s19 = scalar_lea.sflag [#allocation4], 1
    %20 = vsyncpa %s19, 0
    loop: start=0, step=1, limit=4
    $region2: #{ipa_forward_pallas.3} parent=1 // loop_pre_header
      _
    $region3: #{ipa_forward_pallas.3} parent=1 // loop_header
      %s22 = sphi 0, %s26
      %p23 = scmp.ge.s32.totalorder %s22, 4
      %s30 = sphi 0, %s30
      %s32 = sphi 0, %s30
      %s33 = sphi 0, %s32
      %s47 = sphi 0, %s33
      %s53 = sphi 0, %s55
      %s56 = sphi 0, %s53
      %s57 = sphi 0, %s56
      %s73 = sphi 0, %s57
      %s79 = sphi 0, %s81
      %s82 = sphi 0, %s79
      %s83 = sphi 0, %s82
      %s99 = sphi 0, %s83
      %s105 = sphi 0, %s107
      %s108 = sphi 0, %s105
      %s109 = sphi 0, %s108
      %s125 = sphi 0, %s109
      %s131 = sphi 0, %s133
      %s134 = sphi 0, %s131
      %s135 = sphi 0, %s134
      %s151 = sphi 0, %s135
      %s157 = sphi 0, %s159
      %s160 = sphi 0, %s157
      %s161 = sphi 0, %s160
      %s177 = sphi 0, %s161
      %s181 = sphi 0, %s181
      %s183 = sphi 0, %s181
      %s184 = sphi 0, %s183
      %s198 = sphi 0, %s184
      %s202 = sphi 0, %s202
      %s204 = sphi 0, %s202
      %s205 = sphi 0, %s204
      %s219 = sphi 0, %s205
      %s223 = sphi 0, %s223
      %s225 = sphi 0, %s223
      %s226 = sphi 0, %s225
      %s240 = sphi 0, %s226
      %s246 = sphi 0, %s248
      %s249 = sphi 0, %s246
      %s250 = sphi 0, %s249
      %s266 = sphi 0, %s250
    $region4: #{ipa_forward_pallas.3} parent=1 // loop_header_branch
      %25 = sbr.rel (%p23) target = $region8
    $region5: #{ipa_forward_pallas.3} parent=1 // loop_body
      %s27 = ssub.s32 %s22, 1
      %s28 = ssub.s32 %s22, 2
      %s29 = sadd.s32 %s22, 1
      %s31 = sadd.s32 %s30, 1
      %p34 = scmp.eq.s32.totalorder %s22, 1
      %p35 = scmp.ne.s32.totalorder %s30, %s32
      %p36 = scmp.eq.s32.totalorder %s22, 0
      %p37 = por %p35, %p36
      %p38 = scmp.ne.s32.totalorder %s30, %s32
      %p39 = scmp.eq.s32.totalorder %s27, 1
      %p40 = por %p38, %p39
      %p41 = scmp.ne.s32.totalorder %s32, %s33
      %p42 = scmp.eq.s32.totalorder %s27, 0
      %p43 = por %p41, %p42
      %p44 = scmp.ne.s32.totalorder %s32, %s33
      %p45 = scmp.eq.s32.totalorder %s28, 1
      %p46 = por %p44, %p45
      %p48 = scmp.ne.s32.totalorder %s33, %s47
      %p49 = scmp.eq.s32.totalorder %s28, 0
      %p50 = por %p48, %p49
      %s51 = ssub.s32 %s22, %s29
      %p52 = scmp.eq.s32.totalorder %s51, 0
      %s54 = sadd.s32 %s53, 1
      %s55 = scalar_select %p52, %s53, %s54
      %p58 = pneg %p52
      %p59 = scmp.eq.s32.totalorder %s22, 1
      %p60 = por %p58, %p59
      %p61 = scmp.ne.s32.totalorder %s53, %s56
      %p62 = scmp.eq.s32.totalorder %s22, 0
      %p63 = por %p61, %p62
      %p64 = scmp.ne.s32.totalorder %s53, %s56
      %p65 = scmp.eq.s32.totalorder %s27, 1
      %p66 = por %p64, %p65
      %p67 = scmp.ne.s32.totalorder %s56, %s57
      %p68 = scmp.eq.s32.totalorder %s27, 0
      %p69 = por %p67, %p68
      %p70 = scmp.ne.s32.totalorder %s56, %s57
      %p71 = scmp.eq.s32.totalorder %s28, 1
      %p72 = por %p70, %p71
      %p74 = scmp.ne.s32.totalorder %s57, %s73
      %p75 = scmp.eq.s32.totalorder %s28, 0
      %p76 = por %p74, %p75
      %s77 = ssub.s32 %s22, %s29
      %p78 = scmp.eq.s32.totalorder %s77, 0
      %s80 = sadd.s32 %s79, 1
      %s81 = scalar_select %p78, %s79, %s80
      %p84 = pneg %p78
      %p85 = scmp.eq.s32.totalorder %s22, 1
      %p86 = por %p84, %p85
      %p87 = scmp.ne.s32.totalorder %s79, %s82
      %p88 = scmp.eq.s32.totalorder %s22, 0
      %p89 = por %p87, %p88
      %p90 = scmp.ne.s32.totalorder %s79, %s82
      %p91 = scmp.eq.s32.totalorder %s27, 1
      %p92 = por %p90, %p91
      %p93 = scmp.ne.s32.totalorder %s82, %s83
      %p94 = scmp.eq.s32.totalorder %s27, 0
      %p95 = por %p93, %p94
      %p96 = scmp.ne.s32.totalorder %s82, %s83
      %p97 = scmp.eq.s32.totalorder %s28, 1
      %p98 = por %p96, %p97
      %p100 = scmp.ne.s32.totalorder %s83, %s99
      %p101 = scmp.eq.s32.totalorder %s28, 0
      %p102 = por %p100, %p101
      %s103 = ssub.s32 %s22, %s29
      %p104 = scmp.eq.s32.totalorder %s103, 0
      %s106 = sadd.s32 %s105, 1
      %s107 = scalar_select %p104, %s105, %s106
      %p110 = pneg %p104
      %p111 = scmp.eq.s32.totalorder %s22, 1
      %p112 = por %p110, %p111
      %p113 = scmp.ne.s32.totalorder %s105, %s108
      %p114 = scmp.eq.s32.totalorder %s22, 0
      %p115 = por %p113, %p114
      %p116 = scmp.ne.s32.totalorder %s105, %s108
      %p117 = scmp.eq.s32.totalorder %s27, 1
      %p118 = por %p116, %p117
      %p119 = scmp.ne.s32.totalorder %s108, %s109
      %p120 = scmp.eq.s32.totalorder %s27, 0
      %p121 = por %p119, %p120
      %p122 = scmp.ne.s32.totalorder %s108, %s109
      %p123 = scmp.eq.s32.totalorder %s28, 1
      %p124 = por %p122, %p123
      %p126 = scmp.ne.s32.totalorder %s109, %s125
      %p127 = scmp.eq.s32.totalorder %s28, 0
      %p128 = por %p126, %p127
      %s129 = ssub.s32 %s22, %s29
      %p130 = scmp.eq.s32.totalorder %s129, 0
      %s132 = sadd.s32 %s131, 1
      %s133 = scalar_select %p130, %s131, %s132
      %p136 = pneg %p130
      %p137 = scmp.eq.s32.totalorder %s22, 1
      %p138 = por %p136, %p137
      %p139 = scmp.ne.s32.totalorder %s131, %s134
      %p140 = scmp.eq.s32.totalorder %s22, 0
      %p141 = por %p139, %p140
      %p142 = scmp.ne.s32.totalorder %s131, %s134
      %p143 = scmp.eq.s32.totalorder %s27, 1
      %p144 = por %p142, %p143
      %p145 = scmp.ne.s32.totalorder %s134, %s135
      %p146 = scmp.eq.s32.totalorder %s27, 0
      %p147 = por %p145, %p146
      %p148 = scmp.ne.s32.totalorder %s134, %s135
      %p149 = scmp.eq.s32.totalorder %s28, 1
      %p150 = por %p148, %p149
      %p152 = scmp.ne.s32.totalorder %s135, %s151
      %p153 = scmp.eq.s32.totalorder %s28, 0
      %p154 = por %p152, %p153
      %s155 = ssub.s32 %s22, %s29
      %p156 = scmp.eq.s32.totalorder %s155, 0
      %s158 = sadd.s32 %s157, 1
      %s159 = scalar_select %p156, %s157, %s158
      %p162 = pneg %p156
      %p163 = scmp.eq.s32.totalorder %s22, 1
      %p164 = por %p162, %p163
      %p165 = scmp.ne.s32.totalorder %s157, %s160
      %p166 = scmp.eq.s32.totalorder %s22, 0
      %p167 = por %p165, %p166
      %p168 = scmp.ne.s32.totalorder %s157, %s160
      %p169 = scmp.eq.s32.totalorder %s27, 1
      %p170 = por %p168, %p169
      %p171 = scmp.ne.s32.totalorder %s160, %s161
      %p172 = scmp.eq.s32.totalorder %s27, 0
      %p173 = por %p171, %p172
      %p174 = scmp.ne.s32.totalorder %s160, %s161
      %p175 = scmp.eq.s32.totalorder %s28, 1
      %p176 = por %p174, %p175
      %p178 = scmp.ne.s32.totalorder %s161, %s177
      %p179 = scmp.eq.s32.totalorder %s28, 0
      %p180 = por %p178, %p179
      %s182 = sadd.s32 %s181, 1
      %p185 = scmp.eq.s32.totalorder %s22, 1
      %p186 = scmp.ne.s32.totalorder %s181, %s183
      %p187 = scmp.eq.s32.totalorder %s22, 0
      %p188 = por %p186, %p187
      %p189 = scmp.ne.s32.totalorder %s181, %s183
      %p190 = scmp.eq.s32.totalorder %s27, 1
      %p191 = por %p189, %p190
      %p192 = scmp.ne.s32.totalorder %s183, %s184
      %p193 = scmp.eq.s32.totalorder %s27, 0
      %p194 = por %p192, %p193
      %p195 = scmp.ne.s32.totalorder %s183, %s184
      %p196 = scmp.eq.s32.totalorder %s28, 1
      %p197 = por %p195, %p196
      %p199 = scmp.ne.s32.totalorder %s184, %s198
      %p200 = scmp.eq.s32.totalorder %s28, 0
      %p201 = por %p199, %p200
      %s203 = sadd.s32 %s202, 1
      %p206 = scmp.eq.s32.totalorder %s22, 1
      %p207 = scmp.ne.s32.totalorder %s202, %s204
      %p208 = scmp.eq.s32.totalorder %s22, 0
      %p209 = por %p207, %p208
      %p210 = scmp.ne.s32.totalorder %s202, %s204
      %p211 = scmp.eq.s32.totalorder %s27, 1
      %p212 = por %p210, %p211
      %p213 = scmp.ne.s32.totalorder %s204, %s205
      %p214 = scmp.eq.s32.totalorder %s27, 0
      %p215 = por %p213, %p214
      %p216 = scmp.ne.s32.totalorder %s204, %s205
      %p217 = scmp.eq.s32.totalorder %s28, 1
      %p218 = por %p216, %p217
      %p220 = scmp.ne.s32.totalorder %s205, %s219
      %p221 = scmp.eq.s32.totalorder %s28, 0
      %p222 = por %p220, %p221
      %s224 = sadd.s32 %s223, 1
      %p227 = scmp.eq.s32.totalorder %s22, 1
      %p228 = scmp.ne.s32.totalorder %s223, %s225
      %p229 = scmp.eq.s32.totalorder %s22, 0
      %p230 = por %p228, %p229
      %p231 = scmp.ne.s32.totalorder %s223, %s225
      %p232 = scmp.eq.s32.totalorder %s27, 1
      %p233 = por %p231, %p232
      %p234 = scmp.ne.s32.totalorder %s225, %s226
      %p235 = scmp.eq.s32.totalorder %s27, 0
      %p236 = por %p234, %p235
      %p237 = scmp.ne.s32.totalorder %s225, %s226
      %p238 = scmp.eq.s32.totalorder %s28, 1
      %p239 = por %p237, %p238
      %p241 = scmp.ne.s32.totalorder %s226, %s240
      %p242 = scmp.eq.s32.totalorder %s28, 0
      %p243 = por %p241, %p242
      %s244 = ssub.s32 %s22, %s29
      %p245 = scmp.eq.s32.totalorder %s244, 0
      %s247 = sadd.s32 %s246, 1
      %s248 = scalar_select %p245, %s246, %s247
      %p251 = pneg %p245
      %p252 = scmp.eq.s32.totalorder %s22, 1
      %p253 = por %p251, %p252
      %p254 = scmp.ne.s32.totalorder %s246, %s249
      %p255 = scmp.eq.s32.totalorder %s22, 0
      %p256 = por %p254, %p255
      %p257 = scmp.ne.s32.totalorder %s246, %s249
      %p258 = scmp.eq.s32.totalorder %s27, 1
      %p259 = por %p257, %p258
      %p260 = scmp.ne.s32.totalorder %s249, %s250
      %p261 = scmp.eq.s32.totalorder %s27, 0
      %p262 = por %p260, %p261
      %p263 = scmp.ne.s32.totalorder %s249, %s250
      %p264 = scmp.eq.s32.totalorder %s28, 1
      %p265 = por %p263, %p264
      %p267 = scmp.ne.s32.totalorder %s250, %s266
      %p268 = scmp.eq.s32.totalorder %s28, 0
      %p269 = por %p267, %p268
      %p270 = scmp.le.s32.totalorder 1, %s22
      %p271 = scmp.lt.s32.totalorder %s22, 3
      %p272 = pnand %p270, %p271
      %p273 = pneg %p272
      // Predicated region
      $region9: #{ipa_forward_pallas.3} parent=5 // pred_check
        _
      $region10: #{ipa_forward_pallas.3} parent=5 // pred_check_branch
        %275 = sbr.rel (%p272) target = $region12
      $region11: #{ipa_forward_pallas.3} parent=5 // pred_region
        %s276 = ssub.s32 %s22, 1
        // Predicated region
        $region13: #{ipa_forward_pallas.3} parent=11 // pred_check
          %p277 = pneg %p43
        $region14: #{ipa_forward_pallas.3} parent=11 // pred_check_branch
          %279 = sbr.rel (%p277) target = $region16
        $region15: #{ipa_forward_pallas.3} parent=11 // pred_region
          %281 = vsyncadd [#allocation5], 0
          %s283 = sshll.u32 %s0, 4
          %s284 = int_to_ptr.vmem [resolvable:$true] %s283
          %286 = dma.vmem_to_smem %s284, 32, [#allocation2], [#allocation5]
        $region16: #{ipa_forward_pallas.3} parent=11 // pred_fallthru
          _
        // Predicated region
        $region17: #{ipa_forward_pallas.3} parent=11 // pred_check
          %p287 = pneg %p194
        $region18: #{ipa_forward_pallas.3} parent=11 // pred_check_branch
          %289 = sbr.rel (%p287) target = $region20
        $region19: #{ipa_forward_pallas.3} parent=11 // pred_region
          _
        $region20: #{ipa_forward_pallas.3} parent=11 // pred_fallthru
          _
        // Predicated region
        $region21: #{ipa_forward_pallas.3} parent=11 // pred_check
          %p290 = pneg %p215
        $region22: #{ipa_forward_pallas.3} parent=11 // pred_check_branch
          %292 = sbr.rel (%p290) target = $region24
        $region23: #{ipa_forward_pallas.3} parent=11 // pred_region
          _
        $region24: #{ipa_forward_pallas.3} parent=11 // pred_fallthru
          _
        // Predicated region
        $region25: #{ipa_forward_pallas.3} parent=11 // pred_check
          %p293 = pneg %p236
        $region26: #{ipa_forward_pallas.3} parent=11 // pred_check_branch
          %295 = sbr.rel (%p293) target = $region28
        $region27: #{ipa_forward_pallas.3} parent=11 // pred_region
          _
        $region28: #{ipa_forward_pallas.3} parent=11 // pred_fallthru
          _
      $region12: #{ipa_forward_pallas.3} parent=5 // pred_fallthru
        _
      %p296 = scmp.lt.s32.totalorder %s22, 2
      // Predicated region
      $region29: #{ipa_forward_pallas.3} parent=5 // pred_check
        %p297 = pneg %p296
      $region30: #{ipa_forward_pallas.3} parent=5 // pred_check_branch
        %299 = sbr.rel (%p297) target = $region32
      $region31: #{ipa_forward_pallas.3} parent=5 // pred_region
        // Predicated region
        $region33: #{ipa_forward_pallas.3} parent=31 // pred_check
          %p300 = pneg %p63
        $region34: #{ipa_forward_pallas.3} parent=31 // pred_check_branch
          %302 = sbr.rel (%p300) target = $region36
        $region35: #{ipa_forward_pallas.3} parent=31 // pred_region
          %p303 = scmp.lt.s32.totalorder %s22, 1
          %s304 = scalar_select %p303, %s22, 1
          %s305 = smul.addr %s304, 6
          %s306 = smul.addr %s305, 8
          %s307 = scalar_lea.vmem %s1, %s306
        $region36: #{ipa_forward_pallas.3} parent=31 // pred_fallthru
          _
        // Predicated region
        $region37: #{ipa_forward_pallas.3} parent=31 // pred_check
          %p308 = pneg %p89
        $region38: #{ipa_forward_pallas.3} parent=31 // pred_check_branch
          %310 = sbr.rel (%p308) target = $region40
        $region39: #{ipa_forward_pallas.3} parent=31 // pred_region
          %p311 = scmp.lt.s32.totalorder %s22, 1
          %s312 = scalar_select %p311, %s22, 1
          %s313 = smul.addr %s312, 2
          %s314 = smul.addr %s313, 8
          %s315 = scalar_lea.vmem %s2, %s314
        $region40: #{ipa_forward_pallas.3} parent=31 // pred_fallthru
          _
        // Predicated region
        $region41: #{ipa_forward_pallas.3} parent=31 // pred_check
          %p316 = pneg %p115
        $region42: #{ipa_forward_pallas.3} parent=31 // pred_check_branch
          %318 = sbr.rel (%p316) target = $region44
        $region43: #{ipa_forward_pallas.3} parent=31 // pred_region
          %p319 = scmp.lt.s32.totalorder %s22, 1
          %s320 = scalar_select %p319, %s22, 1
          %s321 = smul.addr %s320, 2
          %s322 = smul.addr %s321, 8
          %s323 = scalar_lea.vmem %s3, %s322
        $region44: #{ipa_forward_pallas.3} parent=31 // pred_fallthru
          _
        // Predicated region
        $region45: #{ipa_forward_pallas.3} parent=31 // pred_check
          %p324 = pneg %p141
        $region46: #{ipa_forward_pallas.3} parent=31 // pred_check_branch
          %326 = sbr.rel (%p324) target = $region48
        $region47: #{ipa_forward_pallas.3} parent=31 // pred_region
          %s327 = sand.u32 %s131, 1
          %s328 = scalar_lea.sflag [#allocation3], %s327
          %s329 = sand.u32 %s131, 1
          %s330 = smul.addr %s329, 256
          %s331 = scalar_lea.vmem [#allocation6], %s330
          %333 = vsyncadd %s328, 0
          %s334 = smul.addr %s22, 32
          %s335 = smul.addr %s334, 8
          %s336 = scalar_lea.hbm %s4, %s335
          %s337 = sshll.u32 %s336, 4
          %s338 = int_to_ptr.hbm [resolvable:$true] %s337
          %s339 = sshll.u32 %s331, 4
          %s340 = int_to_ptr.vmem [resolvable:$true] %s339
          %345 = dma.hbm_to_vmem [thread:$0]  %s338, 4096, %s340, %s328, 128, 128, 8
        $region48: #{ipa_forward_pallas.3} parent=31 // pred_fallthru
          _
        // Predicated region
        $region49: #{ipa_forward_pallas.3} parent=31 // pred_check
          %p346 = pneg %p167
        $region50: #{ipa_forward_pallas.3} parent=31 // pred_check_branch
          %348 = sbr.rel (%p346) target = $region52
        $region51: #{ipa_forward_pallas.3} parent=31 // pred_region
          %p349 = scmp.lt.s32.totalorder %s22, 1
          %s350 = scalar_select %p349, %s22, 1
          %s351 = smul.addr %s350, 2
          %s352 = smul.addr %s351, 8
          %s353 = scalar_lea.vmem %s5, %s352
        $region52: #{ipa_forward_pallas.3} parent=31 // pred_fallthru
          _
      $region32: #{ipa_forward_pallas.3} parent=5 // pred_fallthru
        _
      %p354 = scmp.le.s32.totalorder 1, %s22
      %p355 = scmp.lt.s32.totalorder %s22, 3
      %p356 = pnand %p354, %p355
      %p357 = pneg %p356
      // Predicated region
      $region53: #{ipa_forward_pallas.3} parent=5 // pred_check
        _
      $region54: #{ipa_forward_pallas.3} parent=5 // pred_check_branch
        %359 = sbr.rel (%p356) target = $region56
      $region55: #{ipa_forward_pallas.3} parent=5 // pred_region
        %s360 = ssub.s32 %s22, 1
        // Predicated region
        $region57: #{ipa_forward_pallas.3} parent=55 // pred_check
          %p361 = pneg %p43
        $region58: #{ipa_forward_pallas.3} parent=55 // pred_check_branch
          %363 = sbr.rel (%p361) target = $region60
        $region59: #{ipa_forward_pallas.3} parent=55 // pred_region
          %365 = dma.done [#allocation5], 32
        $region60: #{ipa_forward_pallas.3} parent=55 // pred_fallthru
          _
        %s366 = sand.u32 %s134, 1
        %s367 = scalar_lea.sflag [#allocation3], %s366
        %s368 = sand.u32 %s134, 1
        %s369 = smul.addr %s368, 256
        %s370 = scalar_lea.vmem [#allocation6], %s369
        // Predicated region
        $region61: #{ipa_forward_pallas.3} parent=55 // pred_check
          %p371 = pneg %p147
        $region62: #{ipa_forward_pallas.3} parent=55 // pred_check_branch
          %373 = sbr.rel (%p371) target = $region64
        $region63: #{ipa_forward_pallas.3} parent=55 // pred_region
          %375 = dma.done %s367, 4096
        $region64: #{ipa_forward_pallas.3} parent=55 // pred_fallthru
          _
        %376 = sfence
        %p377 = pneg %p43
        %p378 = pneg %p40
        %p379 = scmp.lt.s32.totalorder %s27, 1
        %s380 = scalar_select %p379, %s27, 1
        %s381 = smul.addr %s380, 6
        %s382 = smul.addr %s381, 8
        %s383 = scalar_lea.vmem %s1, %s382
        %p384 = pneg %p69
        %p385 = pneg %p66
        %p386 = scmp.lt.s32.totalorder %s27, 1
        %s387 = scalar_select %p386, %s27, 1
        %s388 = smul.addr %s387, 2
        %s389 = smul.addr %s388, 8
        %s390 = scalar_lea.vmem %s2, %s389
        %p391 = pneg %p95
        %p392 = pneg %p92
        %p393 = scmp.lt.s32.totalorder %s27, 1
        %s394 = scalar_select %p393, %s27, 1
        %s395 = smul.addr %s394, 2
        %s396 = smul.addr %s395, 8
        %s397 = scalar_lea.vmem %s3, %s396
        %p398 = pneg %p121
        %p399 = pneg %p118
        %s400 = sand.u32 %s134, 1
        %s401 = scalar_lea.sflag [#allocation3], %s400
        %s402 = sand.u32 %s134, 1
        %s403 = smul.addr %s402, 256
        %s404 = scalar_lea.vmem [#allocation6], %s403
        %p405 = pneg %p147
        %p406 = pneg %p144
        %p407 = scmp.lt.s32.totalorder %s27, 1
        %s408 = scalar_select %p407, %s27, 1
        %s409 = smul.addr %s408, 2
        %s410 = smul.addr %s409, 8
        %s411 = scalar_lea.vmem %s5, %s410
        %p412 = pneg %p173
        %p413 = pneg %p170
        %p414 = pneg %p194
        %p415 = pneg %p191
        %p416 = pneg %p215
        %p417 = pneg %p212
        %p418 = pneg %p236
        %p419 = pneg %p233
        %p420 = pneg %p262
        %p421 = pneg %p259
        %s422 = sand.u32 %s249, 1
        %s423 = scalar_lea.sflag [#allocation4], %s422
        %s424 = sand.u32 %s249, 1
        %s425 = smul.addr %s424, 16
        %s426 = scalar_lea.vmem [#allocation7], %s425
        %p427 = scmp.lt.s32.totalorder %s27, 1
        %s428 = scalar_select %p427, %s27, 1
        %s429 = smul.addr %s428, 6
        %s430 = smul.addr %s429, 8
        %s431 = scalar_lea.vmem %s1, %s430
        %p432 = scmp.lt.s32.totalorder %s27, 1
        %s433 = scalar_select %p432, %s27, 1
        %s434 = smul.addr %s433, 2
        %s435 = smul.addr %s434, 8
        %s436 = scalar_lea.vmem %s2, %s435
        %p437 = scmp.lt.s32.totalorder %s27, 1
        %s438 = scalar_select %p437, %s27, 1
        %s439 = smul.addr %s438, 2
        %s440 = smul.addr %s439, 8
        %s441 = scalar_lea.vmem %s3, %s440
        %p442 = scmp.lt.s32.totalorder %s27, 1
        %s443 = scalar_select %p442, %s27, 1
        %s444 = smul.addr %s443, 2
        %s445 = smul.addr %s444, 8
        %s446 = scalar_lea.vmem %s5, %s445
        %v447 = vld [vmem:[%s431] sm:$0xff]
        %v448 = vld [vmem:[%s431 + $0x8] sm:$0xff]
        %v449 = vld [vmem:[%s431 + $0x10] sm:$0xff]
        %v450 = vld [vmem:[%s431 + $0x18] sm:$0xff]
        %v451 = vld [vmem:[%s431 + $0x20] sm:$0xff]
        %v452 = vld [vmem:[%s431 + $0x28] sm:$0xff]
        %v453 = vld [vmem:[%s436] sm:$0xff]
        %v454 = vld [vmem:[%s436 + $0x8] sm:$0xff]
        %v455 = vld [vmem:[%s441] sm:$0xff]
        %v456 = vld [vmem:[%s441 + $0x8] sm:$0xff]
        %v457 = vld [vmem:[%s370] sm:$0xff]
        %v458 = vld [vmem:[%s370 + $0x8] sm:$0xff]
        %v459 = vld [vmem:[%s370 + $0x10] sm:$0xff]
        %v460 = vld [vmem:[%s370 + $0x18] sm:$0xff]
        %v461 = vld [vmem:[%s370 + $0x20] sm:$0xff]
        %v462 = vld [vmem:[%s370 + $0x28] sm:$0xff]
        %v463 = vld [vmem:[%s370 + $0x30] sm:$0xff]
        %v464 = vld [vmem:[%s370 + $0x38] sm:$0xff]
        %v465 = vld [vmem:[%s370 + $0x40] sm:$0xff]
        %v466 = vld [vmem:[%s370 + $0x48] sm:$0xff]
        %v467 = vld [vmem:[%s370 + $0x50] sm:$0xff]
        %v468 = vld [vmem:[%s370 + $0x58] sm:$0xff]
        %v469 = vld [vmem:[%s370 + $0x60] sm:$0xff]
        %v470 = vld [vmem:[%s370 + $0x68] sm:$0xff]
        %v471 = vld [vmem:[%s370 + $0x70] sm:$0xff]
        %v472 = vld [vmem:[%s370 + $0x78] sm:$0xff]
        %v473 = vld [vmem:[%s370 + $0x80] sm:$0xff]
        %v474 = vld [vmem:[%s370 + $0x88] sm:$0xff]
        %v475 = vld [vmem:[%s370 + $0x90] sm:$0xff]
        %v476 = vld [vmem:[%s370 + $0x98] sm:$0xff]
        %v477 = vld [vmem:[%s370 + $0xa0] sm:$0xff]
        %v478 = vld [vmem:[%s370 + $0xa8] sm:$0xff]
        %v479 = vld [vmem:[%s370 + $0xb0] sm:$0xff]
        %v480 = vld [vmem:[%s370 + $0xb8] sm:$0xff]
        %v481 = vld [vmem:[%s370 + $0xc0] sm:$0xff]
        %v482 = vld [vmem:[%s370 + $0xc8] sm:$0xff]
        %v483 = vld [vmem:[%s370 + $0xd0] sm:$0xff]
        %v484 = vld [vmem:[%s370 + $0xd8] sm:$0xff]
        %v485 = vld [vmem:[%s370 + $0xe0] sm:$0xff]
        %v486 = vld [vmem:[%s370 + $0xe8] sm:$0xff]
        %v487 = vld [vmem:[%s370 + $0xf0] sm:$0xff]
        %v488 = vld [vmem:[%s370 + $0xf8] sm:$0xff]
        %v489 = vld [vmem:[%s446] sm:$0xff]
        %v490 = vld [vmem:[%s446 + $0x8] sm:$0xff]
        %492 = vset.pattern.permute.xlu0 0
        %493 = vperm.xlu0 %492, %v453
        %v494 = vpop.permute.xlu0 %493
        %497 = vset.pattern.permute.xlu0 0
        %498 = vperm.xlu0 %497, %v454
        %v499 = vpop.permute.xlu0 %498
        %v501 = vmul.f32 %v494, %v447
        %v502 = vmul.f32 %v499, %v450
        %503 = vset.pattern.permute.xlu0 1
        %504 = vperm.xlu0 %503, %v453
        %v505 = vpop.permute.xlu0 %504
        %507 = vset.pattern.permute.xlu0 1
        %508 = vperm.xlu0 %507, %v454
        %v509 = vpop.permute.xlu0 %508
        %v511 = vmul.f32 %v505, %v447
        %v512 = vmul.f32 %v509, %v450
        %515 = vrot.lane.b32.xlu0 %v511, 112
        %v516 = vpop.permute.xlu0 %515
        %517 = vrot.lane.b32.xlu0 %v512, 112
        %v518 = vpop.permute.xlu0 %517
        %v521 = vadd.f32 %v501, %v516
        %v522 = vadd.f32 %v502, %v518
        %523 = vset.pattern.permute.xlu0 2
        %524 = vperm.xlu0 %523, %v453
        %v525 = vpop.permute.xlu0 %524
        %527 = vset.pattern.permute.xlu0 2
        %528 = vperm.xlu0 %527, %v454
        %v529 = vpop.permute.xlu0 %528
        %v531 = vmul.f32 %v525, %v448
        %v532 = vmul.f32 %v529, %v451
        %535 = vrot.lane.b32.xlu0 %v531, 96
        %v536 = vpop.permute.xlu0 %535
        %537 = vrot.lane.b32.xlu0 %v532, 96
        %v538 = vpop.permute.xlu0 %537
        %v541 = vadd.f32 %v521, %v536
        %v542 = vadd.f32 %v522, %v538
        %544 = vset.pattern.permute.xlu0 0
        %545 = vperm.xlu0 %544, %v455
        %v546 = vpop.permute.xlu0 %545
        %549 = vset.pattern.permute.xlu0 0
        %550 = vperm.xlu0 %549, %v456
        %v551 = vpop.permute.xlu0 %550
        %v553 = vadd.f32 %v541, %v546
        %v554 = vadd.f32 %v542, %v551
        %555 = vset.pattern.permute.xlu0 3
        %556 = vperm.xlu0 %555, %v453
        %v557 = vpop.permute.xlu0 %556
        %559 = vset.pattern.permute.xlu0 3
        %560 = vperm.xlu0 %559, %v454
        %v561 = vpop.permute.xlu0 %560
        %v563 = vmul.f32 %v557, %v447
        %v564 = vmul.f32 %v561, %v450
        %565 = vset.pattern.permute.xlu0 4
        %566 = vperm.xlu0 %565, %v453
        %v567 = vpop.permute.xlu0 %566
        %569 = vset.pattern.permute.xlu0 4
        %570 = vperm.xlu0 %569, %v454
        %v571 = vpop.permute.xlu0 %570
        %v573 = vmul.f32 %v567, %v447
        %v574 = vmul.f32 %v571, %v450
        %577 = vrot.lane.b32.xlu0 %v573, 112
        %v578 = vpop.permute.xlu0 %577
        %579 = vrot.lane.b32.xlu0 %v574, 112
        %v580 = vpop.permute.xlu0 %579
        %v583 = vadd.f32 %v563, %v578
        %v584 = vadd.f32 %v564, %v580
        %585 = vset.pattern.permute.xlu0 5
        %586 = vperm.xlu0 %585, %v453
        %v587 = vpop.permute.xlu0 %586
        %589 = vset.pattern.permute.xlu0 5
        %590 = vperm.xlu0 %589, %v454
        %v591 = vpop.permute.xlu0 %590
        %v593 = vmul.f32 %v587, %v448
        %v594 = vmul.f32 %v591, %v451
        %597 = vrot.lane.b32.xlu0 %v593, 96
        %v598 = vpop.permute.xlu0 %597
        %599 = vrot.lane.b32.xlu0 %v594, 96
        %v600 = vpop.permute.xlu0 %599
        %v603 = vadd.f32 %v583, %v598
        %v604 = vadd.f32 %v584, %v600
        %605 = vset.pattern.permute.xlu0 1
        %606 = vperm.xlu0 %605, %v455
        %v607 = vpop.permute.xlu0 %606
        %609 = vset.pattern.permute.xlu0 1
        %610 = vperm.xlu0 %609, %v456
        %v611 = vpop.permute.xlu0 %610
        %v613 = vadd.f32 %v603, %v607
        %v614 = vadd.f32 %v604, %v611
        %615 = vset.pattern.permute.xlu0 6
        %616 = vperm.xlu0 %615, %v453
        %v617 = vpop.permute.xlu0 %616
        %619 = vset.pattern.permute.xlu0 6
        %620 = vperm.xlu0 %619, %v454
        %v621 = vpop.permute.xlu0 %620
        %v623 = vmul.f32 %v617, %v447
        %v624 = vmul.f32 %v621, %v450
        %625 = vset.pattern.permute.xlu0 7
        %626 = vperm.xlu0 %625, %v453
        %v627 = vpop.permute.xlu0 %626
        %629 = vset.pattern.permute.xlu0 7
        %630 = vperm.xlu0 %629, %v454
        %v631 = vpop.permute.xlu0 %630
        %v633 = vmul.f32 %v627, %v447
        %v634 = vmul.f32 %v631, %v450
        %637 = vrot.lane.b32.xlu0 %v633, 112
        %v638 = vpop.permute.xlu0 %637
        %639 = vrot.lane.b32.xlu0 %v634, 112
        %v640 = vpop.permute.xlu0 %639
        %v643 = vadd.f32 %v623, %v638
        %v644 = vadd.f32 %v624, %v640
        %645 = vset.pattern.permute.xlu0 8
        %646 = vperm.xlu0 %645, %v453
        %v647 = vpop.permute.xlu0 %646
        %649 = vset.pattern.permute.xlu0 8
        %650 = vperm.xlu0 %649, %v454
        %v651 = vpop.permute.xlu0 %650
        %v653 = vmul.f32 %v647, %v448
        %v654 = vmul.f32 %v651, %v451
        %657 = vrot.lane.b32.xlu0 %v653, 96
        %v658 = vpop.permute.xlu0 %657
        %659 = vrot.lane.b32.xlu0 %v654, 96
        %v660 = vpop.permute.xlu0 %659
        %v663 = vadd.f32 %v643, %v658
        %v664 = vadd.f32 %v644, %v660
        %665 = vset.pattern.permute.xlu0 2
        %666 = vperm.xlu0 %665, %v455
        %v667 = vpop.permute.xlu0 %666
        %669 = vset.pattern.permute.xlu0 2
        %670 = vperm.xlu0 %669, %v456
        %v671 = vpop.permute.xlu0 %670
        %v673 = vadd.f32 %v663, %v667
        %v674 = vadd.f32 %v664, %v671
        %v675 = vmul.f32 %v494, %v448
        %v676 = vmul.f32 %v499, %v451
        %v677 = vmul.f32 %v505, %v448
        %v678 = vmul.f32 %v509, %v451
        %681 = vrot.lane.b32.xlu0 %v677, 80
        %v682 = vpop.permute.xlu0 %681
        %683 = vrot.lane.b32.xlu0 %v678, 80
        %v684 = vpop.permute.xlu0 %683
        %v687 = vadd.f32 %v675, %v682
        %v688 = vadd.f32 %v676, %v684
        %v689 = vmul.f32 %v525, %v449
        %v690 = vmul.f32 %v529, %v452
        %693 = vrot.lane.b32.xlu0 %v531, 32
        %v694 = vpop.permute.xlu0 %693
        %695 = vrot.lane.b32.xlu0 %v689, 32
        %v696 = vpop.permute.xlu0 %695
        %697 = vrot.lane.b32.xlu0 %v532, 32
        %v698 = vpop.permute.xlu0 %697
        %699 = vrot.lane.b32.xlu0 %v690, 32
        %v700 = vpop.permute.xlu0 %699
        %vm701 = vcmask 261120
        %v702 = vsel %vm701, %v694, %v696
        %v703 = vsel %vm701, %v698, %v700
        %v706 = vadd.f32 %v687, %v702
        %v707 = vadd.f32 %v688, %v703
        %v708 = vadd.f32 %v706, %v546
        %v709 = vadd.f32 %v707, %v551
        %v710 = vmul.f32 %v557, %v448
        %v711 = vmul.f32 %v561, %v451
        %v712 = vmul.f32 %v567, %v448
        %v713 = vmul.f32 %v571, %v451
        %716 = vrot.lane.b32.xlu0 %v712, 80
        %v717 = vpop.permute.xlu0 %716
        %718 = vrot.lane.b32.xlu0 %v713, 80
        %v719 = vpop.permute.xlu0 %718
        %v722 = vadd.f32 %v710, %v717
        %v723 = vadd.f32 %v711, %v719
        %v724 = vmul.f32 %v587, %v449
        %v725 = vmul.f32 %v591, %v452
        %728 = vrot.lane.b32.xlu0 %v593, 32
        %v729 = vpop.permute.xlu0 %728
        %730 = vrot.lane.b32.xlu0 %v724, 32
        %v731 = vpop.permute.xlu0 %730
        %732 = vrot.lane.b32.xlu0 %v594, 32
        %v733 = vpop.permute.xlu0 %732
        %734 = vrot.lane.b32.xlu0 %v725, 32
        %v735 = vpop.permute.xlu0 %734
        %v736 = vsel %vm701, %v729, %v731
        %v737 = vsel %vm701, %v733, %v735
        %v740 = vadd.f32 %v722, %v736
        %v741 = vadd.f32 %v723, %v737
        %v742 = vadd.f32 %v740, %v607
        %v743 = vadd.f32 %v741, %v611
        %v744 = vmul.f32 %v617, %v448
        %v745 = vmul.f32 %v621, %v451
        %v746 = vmul.f32 %v627, %v448
        %v747 = vmul.f32 %v631, %v451
        %750 = vrot.lane.b32.xlu0 %v746, 80
        %v751 = vpop.permute.xlu0 %750
        %752 = vrot.lane.b32.xlu0 %v747, 80
        %v753 = vpop.permute.xlu0 %752
        %v756 = vadd.f32 %v744, %v751
        %v757 = vadd.f32 %v745, %v753
        %v758 = vmul.f32 %v647, %v449
        %v759 = vmul.f32 %v651, %v452
        %762 = vrot.lane.b32.xlu0 %v653, 32
        %v763 = vpop.permute.xlu0 %762
        %764 = vrot.lane.b32.xlu0 %v758, 32
        %v765 = vpop.permute.xlu0 %764
        %766 = vrot.lane.b32.xlu0 %v654, 32
        %v767 = vpop.permute.xlu0 %766
        %768 = vrot.lane.b32.xlu0 %v759, 32
        %v769 = vpop.permute.xlu0 %768
        %v770 = vsel %vm701, %v763, %v765
        %v771 = vsel %vm701, %v767, %v769
        %v774 = vadd.f32 %v756, %v770
        %v775 = vadd.f32 %v757, %v771
        %v776 = vadd.f32 %v774, %v667
        %v777 = vadd.f32 %v775, %v671
        %s778 = sld [smem:[#allocation2]]
        %s779 = sld [smem:[#allocation2 + $0x80]]
        %782 = vrot.lane.b32.xlu0 %v553, 32
        %v783 = vpop.permute.xlu0 %782
        %784 = vrot.lane.b32.xlu0 %v554, 32
        %v785 = vpop.permute.xlu0 %784
        %790 = vrot.lane.b32.xlu0 %v613, 36
        %v791 = vpop.permute.xlu0 %790
        %792 = vrot.lane.b32.xlu0 %v614, 36
        %v793 = vpop.permute.xlu0 %792
        %798 = vrot.lane.b32.xlu0 %v673, 40
        %v799 = vpop.permute.xlu0 %798
        %800 = vrot.lane.b32.xlu0 %v674, 40
        %v801 = vpop.permute.xlu0 %800
        %vm804 = vcmask 31744
        %v805 = vsel %vm804, %v783, %v791
        %v806 = vsel %vm804, %v785, %v793
        %vm807 = vcmask 64512
        %v808 = vsel %vm807, %v805, %v799
        %v809 = vsel %vm807, %v806, %v801
        %812 = vrot.lane.b32.xlu0 %v708, 112
        %v813 = vpop.permute.xlu0 %812
        %814 = vrot.lane.b32.xlu0 %v709, 112
        %v815 = vpop.permute.xlu0 %814
        %820 = vrot.lane.b32.xlu0 %v742, 116
        %v821 = vpop.permute.xlu0 %820
        %822 = vrot.lane.b32.xlu0 %v743, 116
        %v823 = vpop.permute.xlu0 %822
        %828 = vrot.lane.b32.xlu0 %v776, 120
        %v829 = vpop.permute.xlu0 %828
        %830 = vrot.lane.b32.xlu0 %v777, 120
        %v831 = vpop.permute.xlu0 %830
        %v834 = vsel %vm804, %v813, %v821
        %v835 = vsel %vm804, %v815, %v823
        %v836 = vsel %vm807, %v834, %v829
        %v837 = vsel %vm807, %v835, %v831
        %838 = vrot.lane.b32.xlu0 %v708, 108
        %v839 = vpop.permute.xlu0 %838
        %840 = vrot.lane.b32.xlu0 %v709, 108
        %v841 = vpop.permute.xlu0 %840
        %844 = vrot.lane.b32.xlu0 %v776, 124
        %v845 = vpop.permute.xlu0 %844
        %846 = vrot.lane.b32.xlu0 %v777, 124
        %v847 = vpop.permute.xlu0 %846
        %v850 = vsel %vm807, %v839, %v821
        %v851 = vsel %vm807, %v841, %v823
        %vm852 = vcmask 130048
        %v853 = vsel %vm852, %v850, %v845
        %v854 = vsel %vm852, %v851, %v847
        %v855 = vmul.f32 %v808, %v808
        %v856 = vmul.f32 %v809, %v809
        %vm857 = vcmask 97280
        %v858 = vsel %vm857, %v855, 0.0
        %859 = vadd.xlane.f32.xlu0 %v858
        %v860 = vpop.xlane.xlu0 %859
        %v861 = vsel %vm857, %v856, 0.0
        %862 = vadd.xlane.f32.xlu0 %v861
        %v863 = vpop.xlane.xlu0 %862
        %v864 = vmul.f32 %v836, %v836
        %v865 = vmul.f32 %v837, %v837
        %v866 = vsel %vm857, %v864, 0.0
        %867 = vadd.xlane.f32.xlu0 %v866
        %v868 = vpop.xlane.xlu0 %867
        %v869 = vsel %vm857, %v865, 0.0
        %870 = vadd.xlane.f32.xlu0 %v869
        %v871 = vpop.xlane.xlu0 %870
        %v872 = vmul.f32 %v447, 0.20412415
        %v873 = vmul.f32 %v450, 0.20412415
        %v874 = vstv %s778
        %v875 = vmul.f32 %v874, %v808
        %v876 = vmul.f32 %v874, %v809
        %879 = vrot.lane.b32.xlu0 %v875, 8
        %v880 = vpop.permute.xlu0 %879
        %881 = vrot.lane.b32.xlu0 %v876, 8
        %v882 = vpop.permute.xlu0 %881
        %v885 = vsel %vm807, %v872, %v880
        %v886 = vsel %vm807, %v873, %v882
        %vm887 = vcmask 162816
        %v888 = vsel %vm887, %v885, 1.0
        %v889 = vsel %vm887, %v886, 1.0
        %s890 = smul.f32 %s778, -0.5
        %v891 = vstv %s890
        %v892 = vmul.f32 %v891, %v868
        %v893 = vmul.f32 %v891, %v871
        %896 = vrot.lane.b32.xlu0 %v447, 96
        %v897 = vpop.permute.xlu0 %896
        %898 = vrot.lane.b32.xlu0 %v450, 96
        %v899 = vpop.permute.xlu0 %898
        %904 = vrot.lane.b32.xlu0 %v836, 8
        %v905 = vpop.permute.xlu0 %904
        %906 = vrot.lane.b32.xlu0 %v837, 8
        %v907 = vpop.permute.xlu0 %906
        %v910 = vsel %vm807, %v897, %v905
        %v911 = vsel %vm807, %v899, %v907
        %v912 = vsel %vm887, %v910, %v892
        %v913 = vsel %vm887, %v911, %v893
        %vm914 = vcmask 171008
        %v916 = vsel %vm914, %v888, 0
        %v919 = vsel %vm914, %v889, 0
        %v922 = vsel %vm914, %v912, 0
        %v925 = vsel %vm914, %v913, 0
        %927 = vmatpush.xpose.msra.mxu0 0.0
        %928 = vmatpush.xpose.msra.mxu0 0.0
        %929 = vmatpush.xpose.msra.mxu0 0.0
        %930 = vmatpush.xpose.msra.mxu0 0.0
        %931 = vmatpush.xpose.msra.mxu0 0.0
        %932 = vmatpush.xpose.msra.mxu0 0.0
        %933 = vmatpush.xpose.msra.mxu0 0.0
        %934 = vmatpush.xpose.msra.mxu0 0.0
        %935 = vmatpush.xpose.msra.mxu0 0.0
        %936 = vmatpush.xpose.msra.mxu0 0.0
        %937 = vmatpush.xpose.msra.mxu0 0.0
        %938 = vmatpush.xpose.msra.mxu0 0.0
        %939 = vmatpush.xpose.msra.mxu0 0.0
        %940 = vmatpush.xpose.msra.mxu0 0.0
        %941 = vmatpush.xpose.msra.mxu0 %v925
        %942 = vmatpush.xpose.msra.mxu0 %v922
        %943 = vmatmul.f32.gmra.mxu0 %v916
        %v944 = vpop.f32.mrf.mxu0
        %v945 = vadd.f32 0.0, %v944
        %946 = vmatmul.f32.gmra.mxu0 %v919
        %v947 = vpop.f32.mrf.mxu0
        %v948 = vadd.f32 0.0, %v947
        %949 = vdwg.mxu0
        %v950 = vld [vmem:[%s6] sm:$0x1]
        %v951 = vperm.slane %v950, 0
        %v952 = vmul.f32 %v457, %v951
        %v953 = vmul.f32 %v458, %v951
        %v954 = vmul.f32 %v459, %v951
        %v955 = vmul.f32 %v460, %v951
        %v956 = vmul.f32 %v461, %v951
        %v957 = vmul.f32 %v462, %v951
        %v958 = vmul.f32 %v463, %v951
        %v959 = vmul.f32 %v464, %v951
        %v960 = vmul.f32 %v465, %v951
        %v961 = vmul.f32 %v466, %v951
        %v962 = vmul.f32 %v467, %v951
        %v963 = vmul.f32 %v468, %v951
        %v964 = vmul.f32 %v469, %v951
        %v965 = vmul.f32 %v470, %v951
        %v966 = vmul.f32 %v471, %v951
        %v967 = vmul.f32 %v472, %v951
        %v968 = vmul.f32 %v473, %v951
        %v969 = vmul.f32 %v474, %v951
        %v970 = vmul.f32 %v475, %v951
        %v971 = vmul.f32 %v476, %v951
        %v972 = vmul.f32 %v477, %v951
        %v973 = vmul.f32 %v478, %v951
        %v974 = vmul.f32 %v479, %v951
        %v975 = vmul.f32 %v480, %v951
        %v976 = vmul.f32 %v481, %v951
        %v977 = vmul.f32 %v482, %v951
        %v978 = vmul.f32 %v483, %v951
        %v979 = vmul.f32 %v484, %v951
        %v980 = vmul.f32 %v485, %v951
        %v981 = vmul.f32 %v486, %v951
        %v982 = vmul.f32 %v487, %v951
        %v983 = vmul.f32 %v488, %v951
        %v984 = vsel %vm852, %v952, 0.0
        %985 = vadd.xlane.f32.xlu0 %v984
        %v986 = vpop.xlane.xlu0 %985
        %v987 = vsel %vm852, %v953, 0.0
        %988 = vadd.xlane.f32.xlu0 %v987
        %v989 = vpop.xlane.xlu0 %988
        %v990 = vsel %vm852, %v954, 0.0
        %991 = vadd.xlane.f32.xlu0 %v990
        %v992 = vpop.xlane.xlu0 %991
        %v993 = vsel %vm852, %v955, 0.0
        %994 = vadd.xlane.f32.xlu0 %v993
        %v995 = vpop.xlane.xlu0 %994
        %v996 = vsel %vm852, %v956, 0.0
        %997 = vadd.xlane.f32.xlu0 %v996
        %v998 = vpop.xlane.xlu0 %997
        %v999 = vsel %vm852, %v957, 0.0
        %1000 = vadd.xlane.f32.xlu0 %v999
        %v1001 = vpop.xlane.xlu0 %1000
        %v1002 = vsel %vm852, %v958, 0.0
        %1003 = vadd.xlane.f32.xlu0 %v1002
        %v1004 = vpop.xlane.xlu0 %1003
        %v1005 = vsel %vm852, %v959, 0.0
        %1006 = vadd.xlane.f32.xlu0 %v1005
        %v1007 = vpop.xlane.xlu0 %1006
        %v1008 = vsel %vm852, %v960, 0.0
        %1009 = vadd.xlane.f32.xlu0 %v1008
        %v1010 = vpop.xlane.xlu0 %1009
        %v1011 = vsel %vm852, %v961, 0.0
        %1012 = vadd.xlane.f32.xlu0 %v1011
        %v1013 = vpop.xlane.xlu0 %1012
        %v1014 = vsel %vm852, %v962, 0.0
        %1015 = vadd.xlane.f32.xlu0 %v1014
        %v1016 = vpop.xlane.xlu0 %1015
        %v1017 = vsel %vm852, %v963, 0.0
        %1018 = vadd.xlane.f32.xlu0 %v1017
        %v1019 = vpop.xlane.xlu0 %1018
        %v1020 = vsel %vm852, %v964, 0.0
        %1021 = vadd.xlane.f32.xlu0 %v1020
        %v1022 = vpop.xlane.xlu0 %1021
        %v1023 = vsel %vm852, %v965, 0.0
        %1024 = vadd.xlane.f32.xlu0 %v1023
        %v1025 = vpop.xlane.xlu0 %1024
        %v1026 = vsel %vm852, %v966, 0.0
        %1027 = vadd.xlane.f32.xlu0 %v1026
        %v1028 = vpop.xlane.xlu0 %1027
        %v1029 = vsel %vm852, %v967, 0.0
        %1030 = vadd.xlane.f32.xlu0 %v1029
        %v1031 = vpop.xlane.xlu0 %1030
        %v1032 = vsel %vm852, %v968, 0.0
        %1033 = vadd.xlane.f32.xlu0 %v1032
        %v1034 = vpop.xlane.xlu0 %1033
        %v1035 = vsel %vm852, %v969, 0.0
        %1036 = vadd.xlane.f32.xlu0 %v1035
        %v1037 = vpop.xlane.xlu0 %1036
        %v1038 = vsel %vm852, %v970, 0.0
        %1039 = vadd.xlane.f32.xlu0 %v1038
        %v1040 = vpop.xlane.xlu0 %1039
        %v1041 = vsel %vm852, %v971, 0.0
        %1042 = vadd.xlane.f32.xlu0 %v1041
        %v1043 = vpop.xlane.xlu0 %1042
        %v1044 = vsel %vm852, %v972, 0.0
        %1045 = vadd.xlane.f32.xlu0 %v1044
        %v1046 = vpop.xlane.xlu0 %1045
        %v1047 = vsel %vm852, %v973, 0.0
        %1048 = vadd.xlane.f32.xlu0 %v1047
        %v1049 = vpop.xlane.xlu0 %1048
        %v1050 = vsel %vm852, %v974, 0.0
        %1051 = vadd.xlane.f32.xlu0 %v1050
        %v1052 = vpop.xlane.xlu0 %1051
        %v1053 = vsel %vm852, %v975, 0.0
        %1054 = vadd.xlane.f32.xlu0 %v1053
        %v1055 = vpop.xlane.xlu0 %1054
        %v1056 = vsel %vm852, %v976, 0.0
        %1057 = vadd.xlane.f32.xlu0 %v1056
        %v1058 = vpop.xlane.xlu0 %1057
        %v1059 = vsel %vm852, %v977, 0.0
        %1060 = vadd.xlane.f32.xlu0 %v1059
        %v1061 = vpop.xlane.xlu0 %1060
        %v1062 = vsel %vm852, %v978, 0.0
        %1063 = vadd.xlane.f32.xlu0 %v1062
        %v1064 = vpop.xlane.xlu0 %1063
        %v1065 = vsel %vm852, %v979, 0.0
        %1066 = vadd.xlane.f32.xlu0 %v1065
        %v1067 = vpop.xlane.xlu0 %1066
        %v1068 = vsel %vm852, %v980, 0.0
        %1069 = vadd.xlane.f32.xlu0 %v1068
        %v1070 = vpop.xlane.xlu0 %1069
        %v1071 = vsel %vm852, %v981, 0.0
        %1072 = vadd.xlane.f32.xlu0 %v1071
        %v1073 = vpop.xlane.xlu0 %1072
        %v1074 = vsel %vm852, %v982, 0.0
        %1075 = vadd.xlane.f32.xlu0 %v1074
        %v1076 = vpop.xlane.xlu0 %1075
        %v1077 = vsel %vm852, %v983, 0.0
        %1078 = vadd.xlane.f32.xlu0 %v1077
        %v1079 = vpop.xlane.xlu0 %1078
        %s1080 = smul.f32 %s778, 0.5
        %v1081 = vstv %s1080
        %v1082 = vmul.f32 %v1081, %v860
        %v1083 = vmul.f32 %v1081, %v863
        %v1084 = vsub.f32 %v945, %v1082
        %v1085 = vsub.f32 %v948, %v1083
        %v1118 = vlaneseq
        %v1119 = vand.u32 %v1118, 127
        %v1120 = vperm.slane %v986, %v1119
        %v1121 = vadd.s32 %v1119, 4294967288
        %v1122 = vperm.slane %v989, %v1121
        %vm1123 = vcmask 130112
        %v1124 = vsel %vm1123, %v1122, %v1120
        %v1125 = vperm.slane %v992, %v1119
        %v1126 = vperm.slane %v995, %v1121
        %v1127 = vsel %vm1123, %v1126, %v1125
        %v1128 = vperm.slane %v998, %v1119
        %v1129 = vperm.slane %v1001, %v1121
        %v1130 = vsel %vm1123, %v1129, %v1128
        %v1131 = vperm.slane %v1004, %v1119
        %v1132 = vperm.slane %v1007, %v1121
        %v1133 = vsel %vm1123, %v1132, %v1131
        %v1134 = vperm.slane %v1010, %v1119
        %v1135 = vperm.slane %v1013, %v1121
        %v1136 = vsel %vm1123, %v1135, %v1134
        %v1137 = vperm.slane %v1016, %v1119
        %v1138 = vperm.slane %v1019, %v1121
        %v1139 = vsel %vm1123, %v1138, %v1137
        %v1140 = vperm.slane %v1022, %v1119
        %v1141 = vperm.slane %v1025, %v1121
        %v1142 = vsel %vm1123, %v1141, %v1140
        %v1143 = vperm.slane %v1028, %v1119
        %v1144 = vperm.slane %v1031, %v1121
        %v1145 = vsel %vm1123, %v1144, %v1143
        %v1146 = vperm.slane %v1034, %v1119
        %v1147 = vperm.slane %v1037, %v1121
        %v1148 = vsel %vm1123, %v1147, %v1146
        %v1149 = vperm.slane %v1040, %v1119
        %v1150 = vperm.slane %v1043, %v1121
        %v1151 = vsel %vm1123, %v1150, %v1149
        %v1152 = vperm.slane %v1046, %v1119
        %v1153 = vperm.slane %v1049, %v1121
        %v1154 = vsel %vm1123, %v1153, %v1152
        %v1155 = vperm.slane %v1052, %v1119
        %v1156 = vperm.slane %v1055, %v1121
        %v1157 = vsel %vm1123, %v1156, %v1155
        %v1158 = vperm.slane %v1058, %v1119
        %v1159 = vperm.slane %v1061, %v1121
        %v1160 = vsel %vm1123, %v1159, %v1158
        %v1161 = vperm.slane %v1064, %v1119
        %v1162 = vperm.slane %v1067, %v1121
        %v1163 = vsel %vm1123, %v1162, %v1161
        %v1164 = vperm.slane %v1070, %v1119
        %v1165 = vperm.slane %v1073, %v1121
        %v1166 = vsel %vm1123, %v1165, %v1164
        %v1167 = vperm.slane %v1076, %v1119
        %v1168 = vperm.slane %v1079, %v1121
        %v1169 = vsel %vm1123, %v1168, %v1167
        %vm1170 = vcmask 1041409
        %v1171 = vsel %vm1170, %v1127, %v1124
        %vm1172 = vcmask 1042434
        %v1173 = vsel %vm1172, %v1130, %v1171
        %vm1174 = vcmask 1043459
        %v1175 = vsel %vm1174, %v1133, %v1173
        %vm1176 = vcmask 1044484
        %v1177 = vsel %vm1176, %v1136, %v1175
        %vm1178 = vcmask 1045509
        %v1179 = vsel %vm1178, %v1139, %v1177
        %vm1180 = vcmask 1046534
        %v1181 = vsel %vm1180, %v1142, %v1179
        %vm1182 = vcmask 1047559
        %v1183 = vsel %vm1182, %v1145, %v1181
        %v1184 = vsel %vm1170, %v1151, %v1148
        %v1185 = vsel %vm1172, %v1154, %v1184
        %v1186 = vsel %vm1174, %v1157, %v1185
        %v1187 = vsel %vm1176, %v1160, %v1186
        %v1188 = vsel %vm1178, %v1163, %v1187
        %v1189 = vsel %vm1180, %v1166, %v1188
        %v1190 = vsel %vm1182, %v1169, %v1189
        %v1193 = vadd.f32 %v1084, %v1183
        %v1194 = vadd.f32 %v1085, %v1190
        %v1195 = vstv %s779
        %v1196 = vadd.f32 %v1193, %v1195
        %v1197 = vadd.f32 %v1194, %v1195
        %v1198 = vadd.f32 %v1196, %v489
        %v1199 = vadd.f32 %v1197, %v490
        %v1200 = vsel %vm852, %v1198, -inf
        %1201 = vmax.xlane.f32.xlu0 %v1200
        %v1202 = vpop.xlane.xlu0 %1201
        %v1203 = vsel %vm852, %v1199, -inf
        %1204 = vmax.xlane.f32.xlu0 %v1203
        %v1205 = vpop.xlane.xlu0 %1204
        %v1206 = vsub.f32 %v1198, %v1202
        %v1207 = vsub.f32 %v1199, %v1205
        %v1208 = vmul.f32 %v1206, 1.442695
        %v1209 = vpow.pop %v1208
        %v1210 = vmul.f32 %v1207, 1.442695
        %v1211 = vpow.pop %v1210
        %v1212 = vsel %vm852, %v1209, 0.0
        %1213 = vadd.xlane.f32.xlu0 %v1212
        %v1214 = vpop.xlane.xlu0 %1213
        %v1215 = vsel %vm852, %v1211, 0.0
        %1216 = vadd.xlane.f32.xlu0 %v1215
        %v1217 = vpop.xlane.xlu0 %1216
        %v1218 = vrcp.pop %v1214
        %v1219 = vmul.f32 %v1214, %v1218
        %v1220 = vsub.f32 1.0, %v1219
        %v1221 = vmul.f32 %v1218, %v1220
        %v1222 = vadd.f32 %v1218, %v1221
        %vm1223 = vweird.f32 %v1214
        %vm1224 = vweird.f32 %v1218
        %vm1225 = vmor %vm1223, %vm1224
        %v1226 = vsel %vm1225, %v1218, %v1222
        %v1227 = vand.u32 2147483647, %v1214
        %vm1228 = vcmp.eq.f32.partialorder %v1227, 8.507059e+37
        %v1229 = vand.u32 %v1214, 2147483648
        %v1230 = vor.u32 1.1754944e-38, %v1229
        %v1231 = vsel %vm1228, %v1230, %v1226
        %v1232 = vmul.f32 %v1209, %v1231
        %v1233 = vrcp.pop %v1217
        %v1234 = vmul.f32 %v1217, %v1233
        %v1235 = vsub.f32 1.0, %v1234
        %v1236 = vmul.f32 %v1233, %v1235
        %v1237 = vadd.f32 %v1233, %v1236
        %vm1238 = vweird.f32 %v1217
        %vm1239 = vweird.f32 %v1233
        %vm1240 = vmor %vm1238, %vm1239
        %v1241 = vsel %vm1240, %v1233, %v1237
        %v1242 = vand.u32 2147483647, %v1217
        %vm1243 = vcmp.eq.f32.partialorder %v1242, 8.507059e+37
        %v1244 = vand.u32 %v1217, 2147483648
        %v1245 = vor.u32 1.1754944e-38, %v1244
        %v1246 = vsel %vm1243, %v1245, %v1241
        %v1247 = vmul.f32 %v1211, %v1246
        %1248 = vrot.lane.b32.xlu0 %v447, 88
        %v1249 = vpop.permute.xlu0 %1248
        %1250 = vrot.lane.b32.xlu0 %v450, 88
        %v1251 = vpop.permute.xlu0 %1250
        %v1255 = vsel %vm852, %v1232, 0
        %v1258 = vsel %vm852, %v1247, 0
        %1260 = vmatpush.msra.mxu0 0.0
        %1261 = vmatpush.msra.mxu0 0.0
        %1262 = vmatpush.msra.mxu0 0.0
        %1263 = vmatpush.msra.mxu0 0.0
        %1264 = vmatpush.msra.mxu0 0.0
        %1265 = vmatpush.msra.mxu0 0.0
        %1266 = vmatpush.msra.mxu0 0.0
        %1267 = vmatpush.msra.mxu0 0.0
        %1268 = vmatpush.msra.mxu0 0.0
        %1269 = vmatpush.msra.mxu0 0.0
        %1270 = vmatpush.msra.mxu0 0.0
        %1271 = vmatpush.msra.mxu0 0.0
        %1272 = vmatpush.msra.mxu0 0.0
        %1273 = vmatpush.msra.mxu0 0.0
        %1274 = vmatpush.msra.mxu0 %v1251
        %1275 = vmatpush.msra.mxu0 %v1249
        %1276 = vmatmul.f32.gmra.mxu0 %v1255
        %v1277 = vpop.f32.mrf.mxu0
        %v1278 = vadd.f32 0.0, %v1277
        %1279 = vmatmul.f32.gmra.mxu0 %v1258
        %v1280 = vpop.f32.mrf.mxu0
        %v1281 = vadd.f32 0.0, %v1280
        %1282 = vdwg.mxu0
        %1283 = vmatpush.msra.mxu0 0.0
        %1284 = vmatpush.msra.mxu0 0.0
        %1285 = vmatpush.msra.mxu0 0.0
        %1286 = vmatpush.msra.mxu0 0.0
        %1287 = vmatpush.msra.mxu0 0.0
        %1288 = vmatpush.msra.mxu0 0.0
        %1289 = vmatpush.msra.mxu0 0.0
        %1290 = vmatpush.msra.mxu0 0.0
        %1291 = vmatpush.msra.mxu0 0.0
        %1292 = vmatpush.msra.mxu0 0.0
        %1293 = vmatpush.msra.mxu0 0.0
        %1294 = vmatpush.msra.mxu0 0.0
        %1295 = vmatpush.msra.mxu0 0.0
        %1296 = vmatpush.msra.mxu0 0.0
        %1297 = vmatpush.msra.mxu0 %v854
        %1298 = vmatpush.msra.mxu0 %v853
        %1299 = vmatmul.f32.gmra.mxu0 %v1255
        %v1300 = vpop.f32.mrf.mxu0
        %v1301 = vadd.f32 0.0, %v1300
        %1302 = vmatmul.f32.gmra.mxu0 %v1258
        %v1303 = vpop.f32.mrf.mxu0
        %v1304 = vadd.f32 0.0, %v1303
        %1305 = vdwg.mxu0
        %v1306 = vperm.slane %v1232, 0
        %v1307 = vlaneseq
        %v1308 = vshrl.u32 %v1307, 7
        %1310 = vset.pattern.permute.xlu0 %v1308
        %1311 = vperm.xlu0 %1310, %v1306
        %v1312 = vpop.permute.xlu0 %1311
        %v1313 = vlaneseq
        %v1314 = vshrl.u32 %v1313, 7
        %v1315 = vadd.s32 %v1314, 8
        %1316 = vset.pattern.permute.xlu0 %v1315
        %1317 = vperm.xlu0 %1316, %v1306
        %v1318 = vpop.permute.xlu0 %1317
        %v1319 = vperm.slane %v1232, 1
        %v1320 = vlaneseq
        %v1321 = vshrl.u32 %v1320, 7
        %1323 = vset.pattern.permute.xlu0 %v1321
        %1324 = vperm.xlu0 %1323, %v1319
        %v1325 = vpop.permute.xlu0 %1324
        %v1326 = vlaneseq
        %v1327 = vshrl.u32 %v1326, 7
        %v1328 = vadd.s32 %v1327, 8
        %1329 = vset.pattern.permute.xlu0 %v1328
        %1330 = vperm.xlu0 %1329, %v1319
        %v1331 = vpop.permute.xlu0 %1330
        %v1332 = vperm.slane %v1232, 2
        %v1333 = vlaneseq
        %v1334 = vshrl.u32 %v1333, 7
        %1336 = vset.pattern.permute.xlu0 %v1334
        %1337 = vperm.xlu0 %1336, %v1332
        %v1338 = vpop.permute.xlu0 %1337
        %v1339 = vlaneseq
        %v1340 = vshrl.u32 %v1339, 7
        %v1341 = vadd.s32 %v1340, 8
        %1342 = vset.pattern.permute.xlu0 %v1341
        %1343 = vperm.xlu0 %1342, %v1332
        %v1344 = vpop.permute.xlu0 %1343
        %v1345 = vperm.slane %v1232, 3
        %v1346 = vlaneseq
        %v1347 = vshrl.u32 %v1346, 7
        %1349 = vset.pattern.permute.xlu0 %v1347
        %1350 = vperm.xlu0 %1349, %v1345
        %v1351 = vpop.permute.xlu0 %1350
        %v1352 = vlaneseq
        %v1353 = vshrl.u32 %v1352, 7
        %v1354 = vadd.s32 %v1353, 8
        %1355 = vset.pattern.permute.xlu0 %v1354
        %1356 = vperm.xlu0 %1355, %v1345
        %v1357 = vpop.permute.xlu0 %1356
        %v1358 = vperm.slane %v1232, 4
        %v1359 = vlaneseq
        %v1360 = vshrl.u32 %v1359, 7
        %1362 = vset.pattern.permute.xlu0 %v1360
        %1363 = vperm.xlu0 %1362, %v1358
        %v1364 = vpop.permute.xlu0 %1363
        %v1365 = vlaneseq
        %v1366 = vshrl.u32 %v1365, 7
        %v1367 = vadd.s32 %v1366, 8
        %1368 = vset.pattern.permute.xlu0 %v1367
        %1369 = vperm.xlu0 %1368, %v1358
        %v1370 = vpop.permute.xlu0 %1369
        %v1371 = vperm.slane %v1232, 5
        %v1372 = vlaneseq
        %v1373 = vshrl.u32 %v1372, 7
        %1375 = vset.pattern.permute.xlu0 %v1373
        %1376 = vperm.xlu0 %1375, %v1371
        %v1377 = vpop.permute.xlu0 %1376
        %v1378 = vlaneseq
        %v1379 = vshrl.u32 %v1378, 7
        %v1380 = vadd.s32 %v1379, 8
        %1381 = vset.pattern.permute.xlu0 %v1380
        %1382 = vperm.xlu0 %1381, %v1371
        %v1383 = vpop.permute.xlu0 %1382
        %v1384 = vperm.slane %v1232, 6
        %v1385 = vlaneseq
        %v1386 = vshrl.u32 %v1385, 7
        %1388 = vset.pattern.permute.xlu0 %v1386
        %1389 = vperm.xlu0 %1388, %v1384
        %v1390 = vpop.permute.xlu0 %1389
        %v1391 = vlaneseq
        %v1392 = vshrl.u32 %v1391, 7
        %v1393 = vadd.s32 %v1392, 8
        %1394 = vset.pattern.permute.xlu0 %v1393
        %1395 = vperm.xlu0 %1394, %v1384
        %v1396 = vpop.permute.xlu0 %1395
        %v1397 = vperm.slane %v1232, 7
        %v1398 = vlaneseq
        %v1399 = vshrl.u32 %v1398, 7
        %1401 = vset.pattern.permute.xlu0 %v1399
        %1402 = vperm.xlu0 %1401, %v1397
        %v1403 = vpop.permute.xlu0 %1402
        %v1404 = vlaneseq
        %v1405 = vshrl.u32 %v1404, 7
        %v1406 = vadd.s32 %v1405, 8
        %1407 = vset.pattern.permute.xlu0 %v1406
        %1408 = vperm.xlu0 %1407, %v1397
        %v1409 = vpop.permute.xlu0 %1408
        %v1410 = vperm.slane %v1247, 0
        %v1411 = vlaneseq
        %v1412 = vshrl.u32 %v1411, 7
        %1414 = vset.pattern.permute.xlu0 %v1412
        %1415 = vperm.xlu0 %1414, %v1410
        %v1416 = vpop.permute.xlu0 %1415
        %v1417 = vlaneseq
        %v1418 = vshrl.u32 %v1417, 7
        %v1419 = vadd.s32 %v1418, 8
        %1420 = vset.pattern.permute.xlu0 %v1419
        %1421 = vperm.xlu0 %1420, %v1410
        %v1422 = vpop.permute.xlu0 %1421
        %v1423 = vperm.slane %v1247, 1
        %v1424 = vlaneseq
        %v1425 = vshrl.u32 %v1424, 7
        %1427 = vset.pattern.permute.xlu0 %v1425
        %1428 = vperm.xlu0 %1427, %v1423
        %v1429 = vpop.permute.xlu0 %1428
        %v1430 = vlaneseq
        %v1431 = vshrl.u32 %v1430, 7
        %v1432 = vadd.s32 %v1431, 8
        %1433 = vset.pattern.permute.xlu0 %v1432
        %1434 = vperm.xlu0 %1433, %v1423
        %v1435 = vpop.permute.xlu0 %1434
        %v1436 = vperm.slane %v1247, 2
        %v1437 = vlaneseq
        %v1438 = vshrl.u32 %v1437, 7
        %1440 = vset.pattern.permute.xlu0 %v1438
        %1441 = vperm.xlu0 %1440, %v1436
        %v1442 = vpop.permute.xlu0 %1441
        %v1443 = vlaneseq
        %v1444 = vshrl.u32 %v1443, 7
        %v1445 = vadd.s32 %v1444, 8
        %1446 = vset.pattern.permute.xlu0 %v1445
        %1447 = vperm.xlu0 %1446, %v1436
        %v1448 = vpop.permute.xlu0 %1447
        %v1449 = vperm.slane %v1247, 3
        %v1450 = vlaneseq
        %v1451 = vshrl.u32 %v1450, 7
        %1453 = vset.pattern.permute.xlu0 %v1451
        %1454 = vperm.xlu0 %1453, %v1449
        %v1455 = vpop.permute.xlu0 %1454
        %v1456 = vlaneseq
        %v1457 = vshrl.u32 %v1456, 7
        %v1458 = vadd.s32 %v1457, 8
        %1459 = vset.pattern.permute.xlu0 %v1458
        %1460 = vperm.xlu0 %1459, %v1449
        %v1461 = vpop.permute.xlu0 %1460
        %v1462 = vperm.slane %v1247, 4
        %v1463 = vlaneseq
        %v1464 = vshrl.u32 %v1463, 7
        %1466 = vset.pattern.permute.xlu0 %v1464
        %1467 = vperm.xlu0 %1466, %v1462
        %v1468 = vpop.permute.xlu0 %1467
        %v1469 = vlaneseq
        %v1470 = vshrl.u32 %v1469, 7
        %v1471 = vadd.s32 %v1470, 8
        %1472 = vset.pattern.permute.xlu0 %v1471
        %1473 = vperm.xlu0 %1472, %v1462
        %v1474 = vpop.permute.xlu0 %1473
        %v1475 = vperm.slane %v1247, 5
        %v1476 = vlaneseq
        %v1477 = vshrl.u32 %v1476, 7
        %1479 = vset.pattern.permute.xlu0 %v1477
        %1480 = vperm.xlu0 %1479, %v1475
        %v1481 = vpop.permute.xlu0 %1480
        %v1482 = vlaneseq
        %v1483 = vshrl.u32 %v1482, 7
        %v1484 = vadd.s32 %v1483, 8
        %1485 = vset.pattern.permute.xlu0 %v1484
        %1486 = vperm.xlu0 %1485, %v1475
        %v1487 = vpop.permute.xlu0 %1486
        %v1488 = vperm.slane %v1247, 6
        %v1489 = vlaneseq
        %v1490 = vshrl.u32 %v1489, 7
        %1492 = vset.pattern.permute.xlu0 %v1490
        %1493 = vperm.xlu0 %1492, %v1488
        %v1494 = vpop.permute.xlu0 %1493
        %v1495 = vlaneseq
        %v1496 = vshrl.u32 %v1495, 7
        %v1497 = vadd.s32 %v1496, 8
        %1498 = vset.pattern.permute.xlu0 %v1497
        %1499 = vperm.xlu0 %1498, %v1488
        %v1500 = vpop.permute.xlu0 %1499
        %v1501 = vperm.slane %v1247, 7
        %v1502 = vlaneseq
        %v1503 = vshrl.u32 %v1502, 7
        %1505 = vset.pattern.permute.xlu0 %v1503
        %1506 = vperm.xlu0 %1505, %v1501
        %v1507 = vpop.permute.xlu0 %1506
        %v1508 = vlaneseq
        %v1509 = vshrl.u32 %v1508, 7
        %v1510 = vadd.s32 %v1509, 8
        %1511 = vset.pattern.permute.xlu0 %v1510
        %1512 = vperm.xlu0 %1511, %v1501
        %v1513 = vpop.permute.xlu0 %1512
        %v1514 = vmul.f32 %v1312, %v457
        %v1515 = vmul.f32 %v1318, %v458
        %v1516 = vmul.f32 %v1325, %v459
        %v1517 = vmul.f32 %v1331, %v460
        %v1518 = vmul.f32 %v1338, %v461
        %v1519 = vmul.f32 %v1344, %v462
        %v1520 = vmul.f32 %v1351, %v463
        %v1521 = vmul.f32 %v1357, %v464
        %v1522 = vmul.f32 %v1364, %v465
        %v1523 = vmul.f32 %v1370, %v466
        %v1524 = vmul.f32 %v1377, %v467
        %v1525 = vmul.f32 %v1383, %v468
        %v1526 = vmul.f32 %v1390, %v469
        %v1527 = vmul.f32 %v1396, %v470
        %v1528 = vmul.f32 %v1403, %v471
        %v1529 = vmul.f32 %v1409, %v472
        %v1530 = vmul.f32 %v1416, %v473
        %v1531 = vmul.f32 %v1422, %v474
        %v1532 = vmul.f32 %v1429, %v475
        %v1533 = vmul.f32 %v1435, %v476
        %v1534 = vmul.f32 %v1442, %v477
        %v1535 = vmul.f32 %v1448, %v478
        %v1536 = vmul.f32 %v1455, %v479
        %v1537 = vmul.f32 %v1461, %v480
        %v1538 = vmul.f32 %v1468, %v481
        %v1539 = vmul.f32 %v1474, %v482
        %v1540 = vmul.f32 %v1481, %v483
        %v1541 = vmul.f32 %v1487, %v484
        %v1542 = vmul.f32 %v1494, %v485
        %v1543 = vmul.f32 %v1500, %v486
        %v1544 = vmul.f32 %v1507, %v487
        %v1545 = vmul.f32 %v1513, %v488
        %v1546 = vsel %vm852, %v1514, 0.0
        %v1547 = vsel %vm852, %v1515, 0.0
        %v1548 = vadd.f32 %v1546, %v1547
        %v1549 = vrot.slane %v1548, 4
        %v1550 = vadd.f32 %v1548, %v1549
        %v1551 = vrot.slane %v1550, 2
        %v1552 = vadd.f32 %v1550, %v1551
        %v1553 = vrot.slane %v1552, 1
        %v1554 = vadd.f32 %v1552, %v1553
        %v1555 = vsel %vm852, %v1516, 0.0
        %v1556 = vsel %vm852, %v1517, 0.0
        %v1557 = vadd.f32 %v1555, %v1556
        %v1558 = vrot.slane %v1557, 4
        %v1559 = vadd.f32 %v1557, %v1558
        %v1560 = vrot.slane %v1559, 2
        %v1561 = vadd.f32 %v1559, %v1560
        %v1562 = vrot.slane %v1561, 1
        %v1563 = vadd.f32 %v1561, %v1562
        %v1564 = vsel %vm852, %v1518, 0.0
        %v1565 = vsel %vm852, %v1519, 0.0
        %v1566 = vadd.f32 %v1564, %v1565
        %v1567 = vrot.slane %v1566, 4
        %v1568 = vadd.f32 %v1566, %v1567
        %v1569 = vrot.slane %v1568, 2
        %v1570 = vadd.f32 %v1568, %v1569
        %v1571 = vrot.slane %v1570, 1
        %v1572 = vadd.f32 %v1570, %v1571
        %v1573 = vsel %vm852, %v1520, 0.0
        %v1574 = vsel %vm852, %v1521, 0.0
        %v1575 = vadd.f32 %v1573, %v1574
        %v1576 = vrot.slane %v1575, 4
        %v1577 = vadd.f32 %v1575, %v1576
        %v1578 = vrot.slane %v1577, 2
        %v1579 = vadd.f32 %v1577, %v1578
        %v1580 = vrot.slane %v1579, 1
        %v1581 = vadd.f32 %v1579, %v1580
        %v1582 = vsel %vm852, %v1522, 0.0
        %v1583 = vsel %vm852, %v1523, 0.0
        %v1584 = vadd.f32 %v1582, %v1583
        %v1585 = vrot.slane %v1584, 4
        %v1586 = vadd.f32 %v1584, %v1585
        %v1587 = vrot.slane %v1586, 2
        %v1588 = vadd.f32 %v1586, %v1587
        %v1589 = vrot.slane %v1588, 1
        %v1590 = vadd.f32 %v1588, %v1589
        %v1591 = vsel %vm852, %v1524, 0.0
        %v1592 = vsel %vm852, %v1525, 0.0
        %v1593 = vadd.f32 %v1591, %v1592
        %v1594 = vrot.slane %v1593, 4
        %v1595 = vadd.f32 %v1593, %v1594
        %v1596 = vrot.slane %v1595, 2
        %v1597 = vadd.f32 %v1595, %v1596
        %v1598 = vrot.slane %v1597, 1
        %v1599 = vadd.f32 %v1597, %v1598
        %v1600 = vsel %vm852, %v1526, 0.0
        %v1601 = vsel %vm852, %v1527, 0.0
        %v1602 = vadd.f32 %v1600, %v1601
        %v1603 = vrot.slane %v1602, 4
        %v1604 = vadd.f32 %v1602, %v1603
        %v1605 = vrot.slane %v1604, 2
        %v1606 = vadd.f32 %v1604, %v1605
        %v1607 = vrot.slane %v1606, 1
        %v1608 = vadd.f32 %v1606, %v1607
        %v1609 = vsel %vm852, %v1528, 0.0
        %v1610 = vsel %vm852, %v1529, 0.0
        %v1611 = vadd.f32 %v1609, %v1610
        %v1612 = vrot.slane %v1611, 4
        %v1613 = vadd.f32 %v1611, %v1612
        %v1614 = vrot.slane %v1613, 2
        %v1615 = vadd.f32 %v1613, %v1614
        %v1616 = vrot.slane %v1615, 1
        %v1617 = vadd.f32 %v1615, %v1616
        %v1618 = vsel %vm852, %v1530, 0.0
        %v1619 = vsel %vm852, %v1531, 0.0
        %v1620 = vadd.f32 %v1618, %v1619
        %v1621 = vrot.slane %v1620, 4
        %v1622 = vadd.f32 %v1620, %v1621
        %v1623 = vrot.slane %v1622, 2
        %v1624 = vadd.f32 %v1622, %v1623
        %v1625 = vrot.slane %v1624, 1
        %v1626 = vadd.f32 %v1624, %v1625
        %v1627 = vsel %vm852, %v1532, 0.0
        %v1628 = vsel %vm852, %v1533, 0.0
        %v1629 = vadd.f32 %v1627, %v1628
        %v1630 = vrot.slane %v1629, 4
        %v1631 = vadd.f32 %v1629, %v1630
        %v1632 = vrot.slane %v1631, 2
        %v1633 = vadd.f32 %v1631, %v1632
        %v1634 = vrot.slane %v1633, 1
        %v1635 = vadd.f32 %v1633, %v1634
        %v1636 = vsel %vm852, %v1534, 0.0
        %v1637 = vsel %vm852, %v1535, 0.0
        %v1638 = vadd.f32 %v1636, %v1637
        %v1639 = vrot.slane %v1638, 4
        %v1640 = vadd.f32 %v1638, %v1639
        %v1641 = vrot.slane %v1640, 2
        %v1642 = vadd.f32 %v1640, %v1641
        %v1643 = vrot.slane %v1642, 1
        %v1644 = vadd.f32 %v1642, %v1643
        %v1645 = vsel %vm852, %v1536, 0.0
        %v1646 = vsel %vm852, %v1537, 0.0
        %v1647 = vadd.f32 %v1645, %v1646
        %v1648 = vrot.slane %v1647, 4
        %v1649 = vadd.f32 %v1647, %v1648
        %v1650 = vrot.slane %v1649, 2
        %v1651 = vadd.f32 %v1649, %v1650
        %v1652 = vrot.slane %v1651, 1
        %v1653 = vadd.f32 %v1651, %v1652
        %v1654 = vsel %vm852, %v1538, 0.0
        %v1655 = vsel %vm852, %v1539, 0.0
        %v1656 = vadd.f32 %v1654, %v1655
        %v1657 = vrot.slane %v1656, 4
        %v1658 = vadd.f32 %v1656, %v1657
        %v1659 = vrot.slane %v1658, 2
        %v1660 = vadd.f32 %v1658, %v1659
        %v1661 = vrot.slane %v1660, 1
        %v1662 = vadd.f32 %v1660, %v1661
        %v1663 = vsel %vm852, %v1540, 0.0
        %v1664 = vsel %vm852, %v1541, 0.0
        %v1665 = vadd.f32 %v1663, %v1664
        %v1666 = vrot.slane %v1665, 4
        %v1667 = vadd.f32 %v1665, %v1666
        %v1668 = vrot.slane %v1667, 2
        %v1669 = vadd.f32 %v1667, %v1668
        %v1670 = vrot.slane %v1669, 1
        %v1671 = vadd.f32 %v1669, %v1670
        %v1672 = vsel %vm852, %v1542, 0.0
        %v1673 = vsel %vm852, %v1543, 0.0
        %v1674 = vadd.f32 %v1672, %v1673
        %v1675 = vrot.slane %v1674, 4
        %v1676 = vadd.f32 %v1674, %v1675
        %v1677 = vrot.slane %v1676, 2
        %v1678 = vadd.f32 %v1676, %v1677
        %v1679 = vrot.slane %v1678, 1
        %v1680 = vadd.f32 %v1678, %v1679
        %v1681 = vsel %vm852, %v1544, 0.0
        %v1682 = vsel %vm852, %v1545, 0.0
        %v1683 = vadd.f32 %v1681, %v1682
        %v1684 = vrot.slane %v1683, 4
        %v1685 = vadd.f32 %v1683, %v1684
        %v1686 = vrot.slane %v1685, 2
        %v1687 = vadd.f32 %v1685, %v1686
        %v1688 = vrot.slane %v1687, 1
        %v1689 = vadd.f32 %v1687, %v1688
        %s1690 = sld [smem:[#allocation2 + $0x1]]
        %s1691 = sld [smem:[#allocation2 + $0x81]]
        %1692 = vrot.lane.b32.xlu0 %v553, 28
        %v1693 = vpop.permute.xlu0 %1692
        %1694 = vrot.lane.b32.xlu0 %v554, 28
        %v1695 = vpop.permute.xlu0 %1694
        %1698 = vrot.lane.b32.xlu0 %v613, 32
        %v1699 = vpop.permute.xlu0 %1698
        %1700 = vrot.lane.b32.xlu0 %v614, 32
        %v1701 = vpop.permute.xlu0 %1700
        %1704 = vrot.lane.b32.xlu0 %v673, 36
        %v1705 = vpop.permute.xlu0 %1704
        %1706 = vrot.lane.b32.xlu0 %v674, 36
        %v1707 = vpop.permute.xlu0 %1706
        %v1710 = vsel %vm804, %v1693, %v1699
        %v1711 = vsel %vm804, %v1695, %v1701
        %v1712 = vsel %vm807, %v1710, %v1705
        %v1713 = vsel %vm807, %v1711, %v1707
        %1714 = vrot.lane.b32.xlu0 %v708, 100
        %v1715 = vpop.permute.xlu0 %1714
        %1716 = vrot.lane.b32.xlu0 %v709, 100
        %v1717 = vpop.permute.xlu0 %1716
        %1720 = vrot.lane.b32.xlu0 %v742, 104
        %v1721 = vpop.permute.xlu0 %1720
        %1722 = vrot.lane.b32.xlu0 %v743, 104
        %v1723 = vpop.permute.xlu0 %1722
        %1726 = vrot.lane.b32.xlu0 %v776, 108
        %v1727 = vpop.permute.xlu0 %1726
        %1728 = vrot.lane.b32.xlu0 %v777, 108
        %v1729 = vpop.permute.xlu0 %1728
        %v1732 = vsel %vm804, %v1715, %v1721
        %v1733 = vsel %vm804, %v1717, %v1723
        %v1734 = vsel %vm807, %v1732, %v1727
        %v1735 = vsel %vm807, %v1733, %v1729
        %1736 = vrot.lane.b32.xlu0 %v708, 96
        %v1737 = vpop.permute.xlu0 %1736
        %1738 = vrot.lane.b32.xlu0 %v709, 96
        %v1739 = vpop.permute.xlu0 %1738
        %1742 = vrot.lane.b32.xlu0 %v776, 112
        %v1743 = vpop.permute.xlu0 %1742
        %1744 = vrot.lane.b32.xlu0 %v777, 112
        %v1745 = vpop.permute.xlu0 %1744
        %v1748 = vsel %vm807, %v1737, %v1721
        %v1749 = vsel %vm807, %v1739, %v1723
        %v1750 = vsel %vm852, %v1748, %v1743
        %v1751 = vsel %vm852, %v1749, %v1745
        %v1752 = vmul.f32 %v1712, %v1712
        %v1753 = vmul.f32 %v1713, %v1713
        %v1754 = vsel %vm857, %v1752, 0.0
        %1755 = vadd.xlane.f32.xlu0 %v1754
        %v1756 = vpop.xlane.xlu0 %1755
        %v1757 = vsel %vm857, %v1753, 0.0
        %1758 = vadd.xlane.f32.xlu0 %v1757
        %v1759 = vpop.xlane.xlu0 %1758
        %v1760 = vmul.f32 %v1734, %v1734
        %v1761 = vmul.f32 %v1735, %v1735
        %v1762 = vsel %vm857, %v1760, 0.0
        %1763 = vadd.xlane.f32.xlu0 %v1762
        %v1764 = vpop.xlane.xlu0 %1763
        %v1765 = vsel %vm857, %v1761, 0.0
        %1766 = vadd.xlane.f32.xlu0 %v1765
        %v1767 = vpop.xlane.xlu0 %1766
        %v1768 = vstv %s1690
        %v1769 = vmul.f32 %v1768, %v1712
        %v1770 = vmul.f32 %v1768, %v1713
        %1773 = vrot.lane.b32.xlu0 %v872, 120
        %v1774 = vpop.permute.xlu0 %1773
        %1775 = vrot.lane.b32.xlu0 %v873, 120
        %v1776 = vpop.permute.xlu0 %1775
        %1781 = vrot.lane.b32.xlu0 %v1769, 8
        %v1782 = vpop.permute.xlu0 %1781
        %1783 = vrot.lane.b32.xlu0 %v1770, 8
        %v1784 = vpop.permute.xlu0 %1783
        %v1787 = vsel %vm807, %v1774, %v1782
        %v1788 = vsel %vm807, %v1776, %v1784
        %v1789 = vsel %vm887, %v1787, 1.0
        %v1790 = vsel %vm887, %v1788, 1.0
        %s1791 = smul.f32 %s1690, -0.5
        %v1792 = vstv %s1791
        %v1793 = vmul.f32 %v1792, %v1764
        %v1794 = vmul.f32 %v1792, %v1767
        %1795 = vrot.lane.b32.xlu0 %v447, 80
        %v1796 = vpop.permute.xlu0 %1795
        %1797 = vrot.lane.b32.xlu0 %v450, 80
        %v1798 = vpop.permute.xlu0 %1797
        %1803 = vrot.lane.b32.xlu0 %v1734, 8
        %v1804 = vpop.permute.xlu0 %1803
        %1805 = vrot.lane.b32.xlu0 %v1735, 8
        %v1806 = vpop.permute.xlu0 %1805
        %v1809 = vsel %vm807, %v1796, %v1804
        %v1810 = vsel %vm807, %v1798, %v1806
        %v1811 = vsel %vm887, %v1809, %v1793
        %v1812 = vsel %vm887, %v1810, %v1794
        %v1814 = vsel %vm914, %v1789, 0
        %v1817 = vsel %vm914, %v1790, 0
        %v1820 = vsel %vm914, %v1811, 0
        %v1823 = vsel %vm914, %v1812, 0
        %1825 = vmatpush.xpose.msra.mxu0 0.0
        %1826 = vmatpush.xpose.msra.mxu0 0.0
        %1827 = vmatpush.xpose.msra.mxu0 0.0
        %1828 = vmatpush.xpose.msra.mxu0 0.0
        %1829 = vmatpush.xpose.msra.mxu0 0.0
        %1830 = vmatpush.xpose.msra.mxu0 0.0
        %1831 = vmatpush.xpose.msra.mxu0 0.0
        %1832 = vmatpush.xpose.msra.mxu0 0.0
        %1833 = vmatpush.xpose.msra.mxu0 0.0
        %1834 = vmatpush.xpose.msra.mxu0 0.0
        %1835 = vmatpush.xpose.msra.mxu0 0.0
        %1836 = vmatpush.xpose.msra.mxu0 0.0
        %1837 = vmatpush.xpose.msra.mxu0 0.0
        %1838 = vmatpush.xpose.msra.mxu0 0.0
        %1839 = vmatpush.xpose.msra.mxu0 %v1823
        %1840 = vmatpush.xpose.msra.mxu0 %v1820
        %1841 = vmatmul.f32.gmra.mxu0 %v1814
        %v1842 = vpop.f32.mrf.mxu0
        %v1843 = vadd.f32 0.0, %v1842
        %1844 = vmatmul.f32.gmra.mxu0 %v1817
        %v1845 = vpop.f32.mrf.mxu0
        %v1846 = vadd.f32 0.0, %v1845
        %1847 = vdwg.mxu0
        %v1848 = vld [vmem:[%s6 + $0x1] sm:$0x1]
        %v1849 = vperm.slane %v1848, 0
        %v1850 = vmul.f32 %v457, %v1849
        %v1851 = vmul.f32 %v458, %v1849
        %v1852 = vmul.f32 %v459, %v1849
        %v1853 = vmul.f32 %v460, %v1849
        %v1854 = vmul.f32 %v461, %v1849
        %v1855 = vmul.f32 %v462, %v1849
        %v1856 = vmul.f32 %v463, %v1849
        %v1857 = vmul.f32 %v464, %v1849
        %v1858 = vmul.f32 %v465, %v1849
        %v1859 = vmul.f32 %v466, %v1849
        %v1860 = vmul.f32 %v467, %v1849
        %v1861 = vmul.f32 %v468, %v1849
        %v1862 = vmul.f32 %v469, %v1849
        %v1863 = vmul.f32 %v470, %v1849
        %v1864 = vmul.f32 %v471, %v1849
        %v1865 = vmul.f32 %v472, %v1849
        %v1866 = vmul.f32 %v473, %v1849
        %v1867 = vmul.f32 %v474, %v1849
        %v1868 = vmul.f32 %v475, %v1849
        %v1869 = vmul.f32 %v476, %v1849
        %v1870 = vmul.f32 %v477, %v1849
        %v1871 = vmul.f32 %v478, %v1849
        %v1872 = vmul.f32 %v479, %v1849
        %v1873 = vmul.f32 %v480, %v1849
        %v1874 = vmul.f32 %v481, %v1849
        %v1875 = vmul.f32 %v482, %v1849
        %v1876 = vmul.f32 %v483, %v1849
        %v1877 = vmul.f32 %v484, %v1849
        %v1878 = vmul.f32 %v485, %v1849
        %v1879 = vmul.f32 %v486, %v1849
        %v1880 = vmul.f32 %v487, %v1849
        %v1881 = vmul.f32 %v488, %v1849
        %v1882 = vsel %vm852, %v1850, 0.0
        %1883 = vadd.xlane.f32.xlu0 %v1882
        %v1884 = vpop.xlane.xlu0 %1883
        %v1885 = vsel %vm852, %v1851, 0.0
        %1886 = vadd.xlane.f32.xlu0 %v1885
        %v1887 = vpop.xlane.xlu0 %1886
        %v1888 = vsel %vm852, %v1852, 0.0
        %1889 = vadd.xlane.f32.xlu0 %v1888
        %v1890 = vpop.xlane.xlu0 %1889
        %v1891 = vsel %vm852, %v1853, 0.0
        %1892 = vadd.xlane.f32.xlu0 %v1891
        %v1893 = vpop.xlane.xlu0 %1892
        %v1894 = vsel %vm852, %v1854, 0.0
        %1895 = vadd.xlane.f32.xlu0 %v1894
        %v1896 = vpop.xlane.xlu0 %1895
        %v1897 = vsel %vm852, %v1855, 0.0
        %1898 = vadd.xlane.f32.xlu0 %v1897
        %v1899 = vpop.xlane.xlu0 %1898
        %v1900 = vsel %vm852, %v1856, 0.0
        %1901 = vadd.xlane.f32.xlu0 %v1900
        %v1902 = vpop.xlane.xlu0 %1901
        %v1903 = vsel %vm852, %v1857, 0.0
        %1904 = vadd.xlane.f32.xlu0 %v1903
        %v1905 = vpop.xlane.xlu0 %1904
        %v1906 = vsel %vm852, %v1858, 0.0
        %1907 = vadd.xlane.f32.xlu0 %v1906
        %v1908 = vpop.xlane.xlu0 %1907
        %v1909 = vsel %vm852, %v1859, 0.0
        %1910 = vadd.xlane.f32.xlu0 %v1909
        %v1911 = vpop.xlane.xlu0 %1910
        %v1912 = vsel %vm852, %v1860, 0.0
        %1913 = vadd.xlane.f32.xlu0 %v1912
        %v1914 = vpop.xlane.xlu0 %1913
        %v1915 = vsel %vm852, %v1861, 0.0
        %1916 = vadd.xlane.f32.xlu0 %v1915
        %v1917 = vpop.xlane.xlu0 %1916
        %v1918 = vsel %vm852, %v1862, 0.0
        %1919 = vadd.xlane.f32.xlu0 %v1918
        %v1920 = vpop.xlane.xlu0 %1919
        %v1921 = vsel %vm852, %v1863, 0.0
        %1922 = vadd.xlane.f32.xlu0 %v1921
        %v1923 = vpop.xlane.xlu0 %1922
        %v1924 = vsel %vm852, %v1864, 0.0
        %1925 = vadd.xlane.f32.xlu0 %v1924
        %v1926 = vpop.xlane.xlu0 %1925
        %v1927 = vsel %vm852, %v1865, 0.0
        %1928 = vadd.xlane.f32.xlu0 %v1927
        %v1929 = vpop.xlane.xlu0 %1928
        %v1930 = vsel %vm852, %v1866, 0.0
        %1931 = vadd.xlane.f32.xlu0 %v1930
        %v1932 = vpop.xlane.xlu0 %1931
        %v1933 = vsel %vm852, %v1867, 0.0
        %1934 = vadd.xlane.f32.xlu0 %v1933
        %v1935 = vpop.xlane.xlu0 %1934
        %v1936 = vsel %vm852, %v1868, 0.0
        %1937 = vadd.xlane.f32.xlu0 %v1936
        %v1938 = vpop.xlane.xlu0 %1937
        %v1939 = vsel %vm852, %v1869, 0.0
        %1940 = vadd.xlane.f32.xlu0 %v1939
        %v1941 = vpop.xlane.xlu0 %1940
        %v1942 = vsel %vm852, %v1870, 0.0
        %1943 = vadd.xlane.f32.xlu0 %v1942
        %v1944 = vpop.xlane.xlu0 %1943
        %v1945 = vsel %vm852, %v1871, 0.0
        %1946 = vadd.xlane.f32.xlu0 %v1945
        %v1947 = vpop.xlane.xlu0 %1946
        %v1948 = vsel %vm852, %v1872, 0.0
        %1949 = vadd.xlane.f32.xlu0 %v1948
        %v1950 = vpop.xlane.xlu0 %1949
        %v1951 = vsel %vm852, %v1873, 0.0
        %1952 = vadd.xlane.f32.xlu0 %v1951
        %v1953 = vpop.xlane.xlu0 %1952
        %v1954 = vsel %vm852, %v1874, 0.0
        %1955 = vadd.xlane.f32.xlu0 %v1954
        %v1956 = vpop.xlane.xlu0 %1955
        %v1957 = vsel %vm852, %v1875, 0.0
        %1958 = vadd.xlane.f32.xlu0 %v1957
        %v1959 = vpop.xlane.xlu0 %1958
        %v1960 = vsel %vm852, %v1876, 0.0
        %1961 = vadd.xlane.f32.xlu0 %v1960
        %v1962 = vpop.xlane.xlu0 %1961
        %v1963 = vsel %vm852, %v1877, 0.0
        %1964 = vadd.xlane.f32.xlu0 %v1963
        %v1965 = vpop.xlane.xlu0 %1964
        %v1966 = vsel %vm852, %v1878, 0.0
        %1967 = vadd.xlane.f32.xlu0 %v1966
        %v1968 = vpop.xlane.xlu0 %1967
        %v1969 = vsel %vm852, %v1879, 0.0
        %1970 = vadd.xlane.f32.xlu0 %v1969
        %v1971 = vpop.xlane.xlu0 %1970
        %v1972 = vsel %vm852, %v1880, 0.0
        %1973 = vadd.xlane.f32.xlu0 %v1972
        %v1974 = vpop.xlane.xlu0 %1973
        %v1975 = vsel %vm852, %v1881, 0.0
        %1976 = vadd.xlane.f32.xlu0 %v1975
        %v1977 = vpop.xlane.xlu0 %1976
        %s1978 = smul.f32 %s1690, 0.5
        %v1979 = vstv %s1978
        %v1980 = vmul.f32 %v1979, %v1756
        %v1981 = vmul.f32 %v1979, %v1759
        %v1982 = vsub.f32 %v1843, %v1980
        %v1983 = vsub.f32 %v1846, %v1981
        %v2016 = vperm.slane %v1884, %v1119
        %v2017 = vperm.slane %v1887, %v1121
        %v2018 = vsel %vm1123, %v2017, %v2016
        %v2019 = vperm.slane %v1890, %v1119
        %v2020 = vperm.slane %v1893, %v1121
        %v2021 = vsel %vm1123, %v2020, %v2019
        %v2022 = vperm.slane %v1896, %v1119
        %v2023 = vperm.slane %v1899, %v1121
        %v2024 = vsel %vm1123, %v2023, %v2022
        %v2025 = vperm.slane %v1902, %v1119
        %v2026 = vperm.slane %v1905, %v1121
        %v2027 = vsel %vm1123, %v2026, %v2025
        %v2028 = vperm.slane %v1908, %v1119
        %v2029 = vperm.slane %v1911, %v1121
        %v2030 = vsel %vm1123, %v2029, %v2028
        %v2031 = vperm.slane %v1914, %v1119
        %v2032 = vperm.slane %v1917, %v1121
        %v2033 = vsel %vm1123, %v2032, %v2031
        %v2034 = vperm.slane %v1920, %v1119
        %v2035 = vperm.slane %v1923, %v1121
        %v2036 = vsel %vm1123, %v2035, %v2034
        %v2037 = vperm.slane %v1926, %v1119
        %v2038 = vperm.slane %v1929, %v1121
        %v2039 = vsel %vm1123, %v2038, %v2037
        %v2040 = vperm.slane %v1932, %v1119
        %v2041 = vperm.slane %v1935, %v1121
        %v2042 = vsel %vm1123, %v2041, %v2040
        %v2043 = vperm.slane %v1938, %v1119
        %v2044 = vperm.slane %v1941, %v1121
        %v2045 = vsel %vm1123, %v2044, %v2043
        %v2046 = vperm.slane %v1944, %v1119
        %v2047 = vperm.slane %v1947, %v1121
        %v2048 = vsel %vm1123, %v2047, %v2046
        %v2049 = vperm.slane %v1950, %v1119
        %v2050 = vperm.slane %v1953, %v1121
        %v2051 = vsel %vm1123, %v2050, %v2049
        %v2052 = vperm.slane %v1956, %v1119
        %v2053 = vperm.slane %v1959, %v1121
        %v2054 = vsel %vm1123, %v2053, %v2052
        %v2055 = vperm.slane %v1962, %v1119
        %v2056 = vperm.slane %v1965, %v1121
        %v2057 = vsel %vm1123, %v2056, %v2055
        %v2058 = vperm.slane %v1968, %v1119
        %v2059 = vperm.slane %v1971, %v1121
        %v2060 = vsel %vm1123, %v2059, %v2058
        %v2061 = vperm.slane %v1974, %v1119
        %v2062 = vperm.slane %v1977, %v1121
        %v2063 = vsel %vm1123, %v2062, %v2061
        %v2064 = vsel %vm1170, %v2021, %v2018
        %v2065 = vsel %vm1172, %v2024, %v2064
        %v2066 = vsel %vm1174, %v2027, %v2065
        %v2067 = vsel %vm1176, %v2030, %v2066
        %v2068 = vsel %vm1178, %v2033, %v2067
        %v2069 = vsel %vm1180, %v2036, %v2068
        %v2070 = vsel %vm1182, %v2039, %v2069
        %v2071 = vsel %vm1170, %v2045, %v2042
        %v2072 = vsel %vm1172, %v2048, %v2071
        %v2073 = vsel %vm1174, %v2051, %v2072
        %v2074 = vsel %vm1176, %v2054, %v2073
        %v2075 = vsel %vm1178, %v2057, %v2074
        %v2076 = vsel %vm1180, %v2060, %v2075
        %v2077 = vsel %vm1182, %v2063, %v2076
        %v2080 = vadd.f32 %v1982, %v2070
        %v2081 = vadd.f32 %v1983, %v2077
        %v2082 = vstv %s1691
        %v2083 = vadd.f32 %v2080, %v2082
        %v2084 = vadd.f32 %v2081, %v2082
        %v2085 = vadd.f32 %v2083, %v489
        %v2086 = vadd.f32 %v2084, %v490
        %v2087 = vsel %vm852, %v2085, -inf
        %2088 = vmax.xlane.f32.xlu0 %v2087
        %v2089 = vpop.xlane.xlu0 %2088
        %v2090 = vsel %vm852, %v2086, -inf
        %2091 = vmax.xlane.f32.xlu0 %v2090
        %v2092 = vpop.xlane.xlu0 %2091
        %v2093 = vsub.f32 %v2085, %v2089
        %v2094 = vsub.f32 %v2086, %v2092
        %v2095 = vmul.f32 %v2093, 1.442695
        %v2096 = vpow.pop %v2095
        %v2097 = vmul.f32 %v2094, 1.442695
        %v2098 = vpow.pop %v2097
        %v2099 = vsel %vm852, %v2096, 0.0
        %2100 = vadd.xlane.f32.xlu0 %v2099
        %v2101 = vpop.xlane.xlu0 %2100
        %v2102 = vsel %vm852, %v2098, 0.0
        %2103 = vadd.xlane.f32.xlu0 %v2102
        %v2104 = vpop.xlane.xlu0 %2103
        %v2105 = vrcp.pop %v2101
        %v2106 = vmul.f32 %v2101, %v2105
        %v2107 = vsub.f32 1.0, %v2106
        %v2108 = vmul.f32 %v2105, %v2107
        %v2109 = vadd.f32 %v2105, %v2108
        %vm2110 = vweird.f32 %v2101
        %vm2111 = vweird.f32 %v2105
        %vm2112 = vmor %vm2110, %vm2111
        %v2113 = vsel %vm2112, %v2105, %v2109
        %v2114 = vand.u32 2147483647, %v2101
        %vm2115 = vcmp.eq.f32.partialorder %v2114, 8.507059e+37
        %v2116 = vand.u32 %v2101, 2147483648
        %v2117 = vor.u32 1.1754944e-38, %v2116
        %v2118 = vsel %vm2115, %v2117, %v2113
        %v2119 = vmul.f32 %v2096, %v2118
        %v2120 = vrcp.pop %v2104
        %v2121 = vmul.f32 %v2104, %v2120
        %v2122 = vsub.f32 1.0, %v2121
        %v2123 = vmul.f32 %v2120, %v2122
        %v2124 = vadd.f32 %v2120, %v2123
        %vm2125 = vweird.f32 %v2104
        %vm2126 = vweird.f32 %v2120
        %vm2127 = vmor %vm2125, %vm2126
        %v2128 = vsel %vm2127, %v2120, %v2124
        %v2129 = vand.u32 2147483647, %v2104
        %vm2130 = vcmp.eq.f32.partialorder %v2129, 8.507059e+37
        %v2131 = vand.u32 %v2104, 2147483648
        %v2132 = vor.u32 1.1754944e-38, %v2131
        %v2133 = vsel %vm2130, %v2132, %v2128
        %v2134 = vmul.f32 %v2098, %v2133
        %2135 = vrot.lane.b32.xlu0 %v447, 72
        %v2136 = vpop.permute.xlu0 %2135
        %2137 = vrot.lane.b32.xlu0 %v450, 72
        %v2138 = vpop.permute.xlu0 %2137
        %v2142 = vsel %vm852, %v2119, 0
        %v2145 = vsel %vm852, %v2134, 0
        %2147 = vmatpush.msra.mxu0 0.0
        %2148 = vmatpush.msra.mxu0 0.0
        %2149 = vmatpush.msra.mxu0 0.0
        %2150 = vmatpush.msra.mxu0 0.0
        %2151 = vmatpush.msra.mxu0 0.0
        %2152 = vmatpush.msra.mxu0 0.0
        %2153 = vmatpush.msra.mxu0 0.0
        %2154 = vmatpush.msra.mxu0 0.0
        %2155 = vmatpush.msra.mxu0 0.0
        %2156 = vmatpush.msra.mxu0 0.0
        %2157 = vmatpush.msra.mxu0 0.0
        %2158 = vmatpush.msra.mxu0 0.0
        %2159 = vmatpush.msra.mxu0 0.0
        %2160 = vmatpush.msra.mxu0 0.0
        %2161 = vmatpush.msra.mxu0 %v2138
        %2162 = vmatpush.msra.mxu0 %v2136
        %2163 = vmatmul.f32.gmra.mxu0 %v2142
        %v2164 = vpop.f32.mrf.mxu0
        %v2165 = vadd.f32 0.0, %v2164
        %2166 = vmatmul.f32.gmra.mxu0 %v2145
        %v2167 = vpop.f32.mrf.mxu0
        %v2168 = vadd.f32 0.0, %v2167
        %2169 = vdwg.mxu0
        %2170 = vmatpush.msra.mxu0 0.0
        %2171 = vmatpush.msra.mxu0 0.0
        %2172 = vmatpush.msra.mxu0 0.0
        %2173 = vmatpush.msra.mxu0 0.0
        %2174 = vmatpush.msra.mxu0 0.0
        %2175 = vmatpush.msra.mxu0 0.0
        %2176 = vmatpush.msra.mxu0 0.0
        %2177 = vmatpush.msra.mxu0 0.0
        %2178 = vmatpush.msra.mxu0 0.0
        %2179 = vmatpush.msra.mxu0 0.0
        %2180 = vmatpush.msra.mxu0 0.0
        %2181 = vmatpush.msra.mxu0 0.0
        %2182 = vmatpush.msra.mxu0 0.0
        %2183 = vmatpush.msra.mxu0 0.0
        %2184 = vmatpush.msra.mxu0 %v1751
        %2185 = vmatpush.msra.mxu0 %v1750
        %2186 = vmatmul.f32.gmra.mxu0 %v2142
        %v2187 = vpop.f32.mrf.mxu0
        %v2188 = vadd.f32 0.0, %v2187
        %2189 = vmatmul.f32.gmra.mxu0 %v2145
        %v2190 = vpop.f32.mrf.mxu0
        %v2191 = vadd.f32 0.0, %v2190
        %2192 = vdwg.mxu0
        %v2193 = vperm.slane %v2119, 0
        %v2194 = vlaneseq
        %v2195 = vshrl.u32 %v2194, 7
        %2197 = vset.pattern.permute.xlu0 %v2195
        %2198 = vperm.xlu0 %2197, %v2193
        %v2199 = vpop.permute.xlu0 %2198
        %v2200 = vlaneseq
        %v2201 = vshrl.u32 %v2200, 7
        %v2202 = vadd.s32 %v2201, 8
        %2203 = vset.pattern.permute.xlu0 %v2202
        %2204 = vperm.xlu0 %2203, %v2193
        %v2205 = vpop.permute.xlu0 %2204
        %v2206 = vperm.slane %v2119, 1
        %v2207 = vlaneseq
        %v2208 = vshrl.u32 %v2207, 7
        %2210 = vset.pattern.permute.xlu0 %v2208
        %2211 = vperm.xlu0 %2210, %v2206
        %v2212 = vpop.permute.xlu0 %2211
        %v2213 = vlaneseq
        %v2214 = vshrl.u32 %v2213, 7
        %v2215 = vadd.s32 %v2214, 8
        %2216 = vset.pattern.permute.xlu0 %v2215
        %2217 = vperm.xlu0 %2216, %v2206
        %v2218 = vpop.permute.xlu0 %2217
        %v2219 = vperm.slane %v2119, 2
        %v2220 = vlaneseq
        %v2221 = vshrl.u32 %v2220, 7
        %2223 = vset.pattern.permute.xlu0 %v2221
        %2224 = vperm.xlu0 %2223, %v2219
        %v2225 = vpop.permute.xlu0 %2224
        %v2226 = vlaneseq
        %v2227 = vshrl.u32 %v2226, 7
        %v2228 = vadd.s32 %v2227, 8
        %2229 = vset.pattern.permute.xlu0 %v2228
        %2230 = vperm.xlu0 %2229, %v2219
        %v2231 = vpop.permute.xlu0 %2230
        %v2232 = vperm.slane %v2119, 3
        %v2233 = vlaneseq
        %v2234 = vshrl.u32 %v2233, 7
        %2236 = vset.pattern.permute.xlu0 %v2234
        %2237 = vperm.xlu0 %2236, %v2232
        %v2238 = vpop.permute.xlu0 %2237
        %v2239 = vlaneseq
        %v2240 = vshrl.u32 %v2239, 7
        %v2241 = vadd.s32 %v2240, 8
        %2242 = vset.pattern.permute.xlu0 %v2241
        %2243 = vperm.xlu0 %2242, %v2232
        %v2244 = vpop.permute.xlu0 %2243
        %v2245 = vperm.slane %v2119, 4
        %v2246 = vlaneseq
        %v2247 = vshrl.u32 %v2246, 7
        %2249 = vset.pattern.permute.xlu0 %v2247
        %2250 = vperm.xlu0 %2249, %v2245
        %v2251 = vpop.permute.xlu0 %2250
        %v2252 = vlaneseq
        %v2253 = vshrl.u32 %v2252, 7
        %v2254 = vadd.s32 %v2253, 8
        %2255 = vset.pattern.permute.xlu0 %v2254
        %2256 = vperm.xlu0 %2255, %v2245
        %v2257 = vpop.permute.xlu0 %2256
        %v2258 = vperm.slane %v2119, 5
        %v2259 = vlaneseq
        %v2260 = vshrl.u32 %v2259, 7
        %2262 = vset.pattern.permute.xlu0 %v2260
        %2263 = vperm.xlu0 %2262, %v2258
        %v2264 = vpop.permute.xlu0 %2263
        %v2265 = vlaneseq
        %v2266 = vshrl.u32 %v2265, 7
        %v2267 = vadd.s32 %v2266, 8
        %2268 = vset.pattern.permute.xlu0 %v2267
        %2269 = vperm.xlu0 %2268, %v2258
        %v2270 = vpop.permute.xlu0 %2269
        %v2271 = vperm.slane %v2119, 6
        %v2272 = vlaneseq
        %v2273 = vshrl.u32 %v2272, 7
        %2275 = vset.pattern.permute.xlu0 %v2273
        %2276 = vperm.xlu0 %2275, %v2271
        %v2277 = vpop.permute.xlu0 %2276
        %v2278 = vlaneseq
        %v2279 = vshrl.u32 %v2278, 7
        %v2280 = vadd.s32 %v2279, 8
        %2281 = vset.pattern.permute.xlu0 %v2280
        %2282 = vperm.xlu0 %2281, %v2271
        %v2283 = vpop.permute.xlu0 %2282
        %v2284 = vperm.slane %v2119, 7
        %v2285 = vlaneseq
        %v2286 = vshrl.u32 %v2285, 7
        %2288 = vset.pattern.permute.xlu0 %v2286
        %2289 = vperm.xlu0 %2288, %v2284
        %v2290 = vpop.permute.xlu0 %2289
        %v2291 = vlaneseq
        %v2292 = vshrl.u32 %v2291, 7
        %v2293 = vadd.s32 %v2292, 8
        %2294 = vset.pattern.permute.xlu0 %v2293
        %2295 = vperm.xlu0 %2294, %v2284
        %v2296 = vpop.permute.xlu0 %2295
        %v2297 = vperm.slane %v2134, 0
        %v2298 = vlaneseq
        %v2299 = vshrl.u32 %v2298, 7
        %2301 = vset.pattern.permute.xlu0 %v2299
        %2302 = vperm.xlu0 %2301, %v2297
        %v2303 = vpop.permute.xlu0 %2302
        %v2304 = vlaneseq
        %v2305 = vshrl.u32 %v2304, 7
        %v2306 = vadd.s32 %v2305, 8
        %2307 = vset.pattern.permute.xlu0 %v2306
        %2308 = vperm.xlu0 %2307, %v2297
        %v2309 = vpop.permute.xlu0 %2308
        %v2310 = vperm.slane %v2134, 1
        %v2311 = vlaneseq
        %v2312 = vshrl.u32 %v2311, 7
        %2314 = vset.pattern.permute.xlu0 %v2312
        %2315 = vperm.xlu0 %2314, %v2310
        %v2316 = vpop.permute.xlu0 %2315
        %v2317 = vlaneseq
        %v2318 = vshrl.u32 %v2317, 7
        %v2319 = vadd.s32 %v2318, 8
        %2320 = vset.pattern.permute.xlu0 %v2319
        %2321 = vperm.xlu0 %2320, %v2310
        %v2322 = vpop.permute.xlu0 %2321
        %v2323 = vperm.slane %v2134, 2
        %v2324 = vlaneseq
        %v2325 = vshrl.u32 %v2324, 7
        %2327 = vset.pattern.permute.xlu0 %v2325
        %2328 = vperm.xlu0 %2327, %v2323
        %v2329 = vpop.permute.xlu0 %2328
        %v2330 = vlaneseq
        %v2331 = vshrl.u32 %v2330, 7
        %v2332 = vadd.s32 %v2331, 8
        %2333 = vset.pattern.permute.xlu0 %v2332
        %2334 = vperm.xlu0 %2333, %v2323
        %v2335 = vpop.permute.xlu0 %2334
        %v2336 = vperm.slane %v2134, 3
        %v2337 = vlaneseq
        %v2338 = vshrl.u32 %v2337, 7
        %2340 = vset.pattern.permute.xlu0 %v2338
        %2341 = vperm.xlu0 %2340, %v2336
        %v2342 = vpop.permute.xlu0 %2341
        %v2343 = vlaneseq
        %v2344 = vshrl.u32 %v2343, 7
        %v2345 = vadd.s32 %v2344, 8
        %2346 = vset.pattern.permute.xlu0 %v2345
        %2347 = vperm.xlu0 %2346, %v2336
        %v2348 = vpop.permute.xlu0 %2347
        %v2349 = vperm.slane %v2134, 4
        %v2350 = vlaneseq
        %v2351 = vshrl.u32 %v2350, 7
        %2353 = vset.pattern.permute.xlu0 %v2351
        %2354 = vperm.xlu0 %2353, %v2349
        %v2355 = vpop.permute.xlu0 %2354
        %v2356 = vlaneseq
        %v2357 = vshrl.u32 %v2356, 7
        %v2358 = vadd.s32 %v2357, 8
        %2359 = vset.pattern.permute.xlu0 %v2358
        %2360 = vperm.xlu0 %2359, %v2349
        %v2361 = vpop.permute.xlu0 %2360
        %v2362 = vperm.slane %v2134, 5
        %v2363 = vlaneseq
        %v2364 = vshrl.u32 %v2363, 7
        %2366 = vset.pattern.permute.xlu0 %v2364
        %2367 = vperm.xlu0 %2366, %v2362
        %v2368 = vpop.permute.xlu0 %2367
        %v2369 = vlaneseq
        %v2370 = vshrl.u32 %v2369, 7
        %v2371 = vadd.s32 %v2370, 8
        %2372 = vset.pattern.permute.xlu0 %v2371
        %2373 = vperm.xlu0 %2372, %v2362
        %v2374 = vpop.permute.xlu0 %2373
        %v2375 = vperm.slane %v2134, 6
        %v2376 = vlaneseq
        %v2377 = vshrl.u32 %v2376, 7
        %2379 = vset.pattern.permute.xlu0 %v2377
        %2380 = vperm.xlu0 %2379, %v2375
        %v2381 = vpop.permute.xlu0 %2380
        %v2382 = vlaneseq
        %v2383 = vshrl.u32 %v2382, 7
        %v2384 = vadd.s32 %v2383, 8
        %2385 = vset.pattern.permute.xlu0 %v2384
        %2386 = vperm.xlu0 %2385, %v2375
        %v2387 = vpop.permute.xlu0 %2386
        %v2388 = vperm.slane %v2134, 7
        %v2389 = vlaneseq
        %v2390 = vshrl.u32 %v2389, 7
        %2392 = vset.pattern.permute.xlu0 %v2390
        %2393 = vperm.xlu0 %2392, %v2388
        %v2394 = vpop.permute.xlu0 %2393
        %v2395 = vlaneseq
        %v2396 = vshrl.u32 %v2395, 7
        %v2397 = vadd.s32 %v2396, 8
        %2398 = vset.pattern.permute.xlu0 %v2397
        %2399 = vperm.xlu0 %2398, %v2388
        %v2400 = vpop.permute.xlu0 %2399
        %v2401 = vmul.f32 %v2199, %v457
        %v2402 = vmul.f32 %v2205, %v458
        %v2403 = vmul.f32 %v2212, %v459
        %v2404 = vmul.f32 %v2218, %v460
        %v2405 = vmul.f32 %v2225, %v461
        %v2406 = vmul.f32 %v2231, %v462
        %v2407 = vmul.f32 %v2238, %v463
        %v2408 = vmul.f32 %v2244, %v464
        %v2409 = vmul.f32 %v2251, %v465
        %v2410 = vmul.f32 %v2257, %v466
        %v2411 = vmul.f32 %v2264, %v467
        %v2412 = vmul.f32 %v2270, %v468
        %v2413 = vmul.f32 %v2277, %v469
        %v2414 = vmul.f32 %v2283, %v470
        %v2415 = vmul.f32 %v2290, %v471
        %v2416 = vmul.f32 %v2296, %v472
        %v2417 = vmul.f32 %v2303, %v473
        %v2418 = vmul.f32 %v2309, %v474
        %v2419 = vmul.f32 %v2316, %v475
        %v2420 = vmul.f32 %v2322, %v476
        %v2421 = vmul.f32 %v2329, %v477
        %v2422 = vmul.f32 %v2335, %v478
        %v2423 = vmul.f32 %v2342, %v479
        %v2424 = vmul.f32 %v2348, %v480
        %v2425 = vmul.f32 %v2355, %v481
        %v2426 = vmul.f32 %v2361, %v482
        %v2427 = vmul.f32 %v2368, %v483
        %v2428 = vmul.f32 %v2374, %v484
        %v2429 = vmul.f32 %v2381, %v485
        %v2430 = vmul.f32 %v2387, %v486
        %v2431 = vmul.f32 %v2394, %v487
        %v2432 = vmul.f32 %v2400, %v488
        %v2433 = vsel %vm852, %v2401, 0.0
        %v2434 = vsel %vm852, %v2402, 0.0
        %v2435 = vadd.f32 %v2433, %v2434
        %v2436 = vrot.slane %v2435, 4
        %v2437 = vadd.f32 %v2435, %v2436
        %v2438 = vrot.slane %v2437, 2
        %v2439 = vadd.f32 %v2437, %v2438
        %v2440 = vrot.slane %v2439, 1
        %v2441 = vadd.f32 %v2439, %v2440
        %v2442 = vsel %vm852, %v2403, 0.0
        %v2443 = vsel %vm852, %v2404, 0.0
        %v2444 = vadd.f32 %v2442, %v2443
        %v2445 = vrot.slane %v2444, 4
        %v2446 = vadd.f32 %v2444, %v2445
        %v2447 = vrot.slane %v2446, 2
        %v2448 = vadd.f32 %v2446, %v2447
        %v2449 = vrot.slane %v2448, 1
        %v2450 = vadd.f32 %v2448, %v2449
        %v2451 = vsel %vm852, %v2405, 0.0
        %v2452 = vsel %vm852, %v2406, 0.0
        %v2453 = vadd.f32 %v2451, %v2452
        %v2454 = vrot.slane %v2453, 4
        %v2455 = vadd.f32 %v2453, %v2454
        %v2456 = vrot.slane %v2455, 2
        %v2457 = vadd.f32 %v2455, %v2456
        %v2458 = vrot.slane %v2457, 1
        %v2459 = vadd.f32 %v2457, %v2458
        %v2460 = vsel %vm852, %v2407, 0.0
        %v2461 = vsel %vm852, %v2408, 0.0
        %v2462 = vadd.f32 %v2460, %v2461
        %v2463 = vrot.slane %v2462, 4
        %v2464 = vadd.f32 %v2462, %v2463
        %v2465 = vrot.slane %v2464, 2
        %v2466 = vadd.f32 %v2464, %v2465
        %v2467 = vrot.slane %v2466, 1
        %v2468 = vadd.f32 %v2466, %v2467
        %v2469 = vsel %vm852, %v2409, 0.0
        %v2470 = vsel %vm852, %v2410, 0.0
        %v2471 = vadd.f32 %v2469, %v2470
        %v2472 = vrot.slane %v2471, 4
        %v2473 = vadd.f32 %v2471, %v2472
        %v2474 = vrot.slane %v2473, 2
        %v2475 = vadd.f32 %v2473, %v2474
        %v2476 = vrot.slane %v2475, 1
        %v2477 = vadd.f32 %v2475, %v2476
        %v2478 = vsel %vm852, %v2411, 0.0
        %v2479 = vsel %vm852, %v2412, 0.0
        %v2480 = vadd.f32 %v2478, %v2479
        %v2481 = vrot.slane %v2480, 4
        %v2482 = vadd.f32 %v2480, %v2481
        %v2483 = vrot.slane %v2482, 2
        %v2484 = vadd.f32 %v2482, %v2483
        %v2485 = vrot.slane %v2484, 1
        %v2486 = vadd.f32 %v2484, %v2485
        %v2487 = vsel %vm852, %v2413, 0.0
        %v2488 = vsel %vm852, %v2414, 0.0
        %v2489 = vadd.f32 %v2487, %v2488
        %v2490 = vrot.slane %v2489, 4
        %v2491 = vadd.f32 %v2489, %v2490
        %v2492 = vrot.slane %v2491, 2
        %v2493 = vadd.f32 %v2491, %v2492
        %v2494 = vrot.slane %v2493, 1
        %v2495 = vadd.f32 %v2493, %v2494
        %v2496 = vsel %vm852, %v2415, 0.0
        %v2497 = vsel %vm852, %v2416, 0.0
        %v2498 = vadd.f32 %v2496, %v2497
        %v2499 = vrot.slane %v2498, 4
        %v2500 = vadd.f32 %v2498, %v2499
        %v2501 = vrot.slane %v2500, 2
        %v2502 = vadd.f32 %v2500, %v2501
        %v2503 = vrot.slane %v2502, 1
        %v2504 = vadd.f32 %v2502, %v2503
        %v2505 = vsel %vm852, %v2417, 0.0
        %v2506 = vsel %vm852, %v2418, 0.0
        %v2507 = vadd.f32 %v2505, %v2506
        %v2508 = vrot.slane %v2507, 4
        %v2509 = vadd.f32 %v2507, %v2508
        %v2510 = vrot.slane %v2509, 2
        %v2511 = vadd.f32 %v2509, %v2510
        %v2512 = vrot.slane %v2511, 1
        %v2513 = vadd.f32 %v2511, %v2512
        %v2514 = vsel %vm852, %v2419, 0.0
        %v2515 = vsel %vm852, %v2420, 0.0
        %v2516 = vadd.f32 %v2514, %v2515
        %v2517 = vrot.slane %v2516, 4
        %v2518 = vadd.f32 %v2516, %v2517
        %v2519 = vrot.slane %v2518, 2
        %v2520 = vadd.f32 %v2518, %v2519
        %v2521 = vrot.slane %v2520, 1
        %v2522 = vadd.f32 %v2520, %v2521
        %v2523 = vsel %vm852, %v2421, 0.0
        %v2524 = vsel %vm852, %v2422, 0.0
        %v2525 = vadd.f32 %v2523, %v2524
        %v2526 = vrot.slane %v2525, 4
        %v2527 = vadd.f32 %v2525, %v2526
        %v2528 = vrot.slane %v2527, 2
        %v2529 = vadd.f32 %v2527, %v2528
        %v2530 = vrot.slane %v2529, 1
        %v2531 = vadd.f32 %v2529, %v2530
        %v2532 = vsel %vm852, %v2423, 0.0
        %v2533 = vsel %vm852, %v2424, 0.0
        %v2534 = vadd.f32 %v2532, %v2533
        %v2535 = vrot.slane %v2534, 4
        %v2536 = vadd.f32 %v2534, %v2535
        %v2537 = vrot.slane %v2536, 2
        %v2538 = vadd.f32 %v2536, %v2537
        %v2539 = vrot.slane %v2538, 1
        %v2540 = vadd.f32 %v2538, %v2539
        %v2541 = vsel %vm852, %v2425, 0.0
        %v2542 = vsel %vm852, %v2426, 0.0
        %v2543 = vadd.f32 %v2541, %v2542
        %v2544 = vrot.slane %v2543, 4
        %v2545 = vadd.f32 %v2543, %v2544
        %v2546 = vrot.slane %v2545, 2
        %v2547 = vadd.f32 %v2545, %v2546
        %v2548 = vrot.slane %v2547, 1
        %v2549 = vadd.f32 %v2547, %v2548
        %v2550 = vsel %vm852, %v2427, 0.0
        %v2551 = vsel %vm852, %v2428, 0.0
        %v2552 = vadd.f32 %v2550, %v2551
        %v2553 = vrot.slane %v2552, 4
        %v2554 = vadd.f32 %v2552, %v2553
        %v2555 = vrot.slane %v2554, 2
        %v2556 = vadd.f32 %v2554, %v2555
        %v2557 = vrot.slane %v2556, 1
        %v2558 = vadd.f32 %v2556, %v2557
        %v2559 = vsel %vm852, %v2429, 0.0
        %v2560 = vsel %vm852, %v2430, 0.0
        %v2561 = vadd.f32 %v2559, %v2560
        %v2562 = vrot.slane %v2561, 4
        %v2563 = vadd.f32 %v2561, %v2562
        %v2564 = vrot.slane %v2563, 2
        %v2565 = vadd.f32 %v2563, %v2564
        %v2566 = vrot.slane %v2565, 1
        %v2567 = vadd.f32 %v2565, %v2566
        %v2568 = vsel %vm852, %v2431, 0.0
        %v2569 = vsel %vm852, %v2432, 0.0
        %v2570 = vadd.f32 %v2568, %v2569
        %v2571 = vrot.slane %v2570, 4
        %v2572 = vadd.f32 %v2570, %v2571
        %v2573 = vrot.slane %v2572, 2
        %v2574 = vadd.f32 %v2572, %v2573
        %v2575 = vrot.slane %v2574, 1
        %v2576 = vadd.f32 %v2574, %v2575
        %s2577 = sld [smem:[#allocation2 + $0x2]]
        %s2578 = sld [smem:[#allocation2 + $0x82]]
        %2579 = vrot.lane.b32.xlu0 %v553, 24
        %v2580 = vpop.permute.xlu0 %2579
        %2581 = vrot.lane.b32.xlu0 %v554, 24
        %v2582 = vpop.permute.xlu0 %2581
        %2585 = vrot.lane.b32.xlu0 %v613, 28
        %v2586 = vpop.permute.xlu0 %2585
        %2587 = vrot.lane.b32.xlu0 %v614, 28
        %v2588 = vpop.permute.xlu0 %2587
        %2591 = vrot.lane.b32.xlu0 %v673, 32
        %v2592 = vpop.permute.xlu0 %2591
        %2593 = vrot.lane.b32.xlu0 %v674, 32
        %v2594 = vpop.permute.xlu0 %2593
        %v2597 = vsel %vm804, %v2580, %v2586
        %v2598 = vsel %vm804, %v2582, %v2588
        %v2599 = vsel %vm807, %v2597, %v2592
        %v2600 = vsel %vm807, %v2598, %v2594
        %2601 = vrot.lane.b32.xlu0 %v708, 88
        %v2602 = vpop.permute.xlu0 %2601
        %2603 = vrot.lane.b32.xlu0 %v709, 88
        %v2604 = vpop.permute.xlu0 %2603
        %2607 = vrot.lane.b32.xlu0 %v742, 92
        %v2608 = vpop.permute.xlu0 %2607
        %2609 = vrot.lane.b32.xlu0 %v743, 92
        %v2610 = vpop.permute.xlu0 %2609
        %2613 = vrot.lane.b32.xlu0 %v776, 96
        %v2614 = vpop.permute.xlu0 %2613
        %2615 = vrot.lane.b32.xlu0 %v777, 96
        %v2616 = vpop.permute.xlu0 %2615
        %v2619 = vsel %vm804, %v2602, %v2608
        %v2620 = vsel %vm804, %v2604, %v2610
        %v2621 = vsel %vm807, %v2619, %v2614
        %v2622 = vsel %vm807, %v2620, %v2616
        %2623 = vrot.lane.b32.xlu0 %v708, 84
        %v2624 = vpop.permute.xlu0 %2623
        %2625 = vrot.lane.b32.xlu0 %v709, 84
        %v2626 = vpop.permute.xlu0 %2625
        %2629 = vrot.lane.b32.xlu0 %v776, 100
        %v2630 = vpop.permute.xlu0 %2629
        %2631 = vrot.lane.b32.xlu0 %v777, 100
        %v2632 = vpop.permute.xlu0 %2631
        %v2635 = vsel %vm807, %v2624, %v2608
        %v2636 = vsel %vm807, %v2626, %v2610
        %v2637 = vsel %vm852, %v2635, %v2630
        %v2638 = vsel %vm852, %v2636, %v2632
        %v2639 = vmul.f32 %v2599, %v2599
        %v2640 = vmul.f32 %v2600, %v2600
        %v2641 = vsel %vm857, %v2639, 0.0
        %2642 = vadd.xlane.f32.xlu0 %v2641
        %v2643 = vpop.xlane.xlu0 %2642
        %v2644 = vsel %vm857, %v2640, 0.0
        %2645 = vadd.xlane.f32.xlu0 %v2644
        %v2646 = vpop.xlane.xlu0 %2645
        %v2647 = vmul.f32 %v2621, %v2621
        %v2648 = vmul.f32 %v2622, %v2622
        %v2649 = vsel %vm857, %v2647, 0.0
        %2650 = vadd.xlane.f32.xlu0 %v2649
        %v2651 = vpop.xlane.xlu0 %2650
        %v2652 = vsel %vm857, %v2648, 0.0
        %2653 = vadd.xlane.f32.xlu0 %v2652
        %v2654 = vpop.xlane.xlu0 %2653
        %v2655 = vstv %s2577
        %v2656 = vmul.f32 %v2655, %v2599
        %v2657 = vmul.f32 %v2655, %v2600
        %2658 = vrot.lane.b32.xlu0 %v872, 112
        %v2659 = vpop.permute.xlu0 %2658
        %2660 = vrot.lane.b32.xlu0 %v873, 112
        %v2661 = vpop.permute.xlu0 %2660
        %2666 = vrot.lane.b32.xlu0 %v2656, 8
        %v2667 = vpop.permute.xlu0 %2666
        %2668 = vrot.lane.b32.xlu0 %v2657, 8
        %v2669 = vpop.permute.xlu0 %2668
        %v2672 = vsel %vm807, %v2659, %v2667
        %v2673 = vsel %vm807, %v2661, %v2669
        %v2674 = vsel %vm887, %v2672, 1.0
        %v2675 = vsel %vm887, %v2673, 1.0
        %s2676 = smul.f32 %s2577, -0.5
        %v2677 = vstv %s2676
        %v2678 = vmul.f32 %v2677, %v2651
        %v2679 = vmul.f32 %v2677, %v2654
        %2680 = vrot.lane.b32.xlu0 %v447, 64
        %v2681 = vpop.permute.xlu0 %2680
        %2682 = vrot.lane.b32.xlu0 %v450, 64
        %v2683 = vpop.permute.xlu0 %2682
        %2688 = vrot.lane.b32.xlu0 %v2621, 8
        %v2689 = vpop.permute.xlu0 %2688
        %2690 = vrot.lane.b32.xlu0 %v2622, 8
        %v2691 = vpop.permute.xlu0 %2690
        %v2694 = vsel %vm807, %v2681, %v2689
        %v2695 = vsel %vm807, %v2683, %v2691
        %v2696 = vsel %vm887, %v2694, %v2678
        %v2697 = vsel %vm887, %v2695, %v2679
        %v2699 = vsel %vm914, %v2674, 0
        %v2702 = vsel %vm914, %v2675, 0
        %v2705 = vsel %vm914, %v2696, 0
        %v2708 = vsel %vm914, %v2697, 0
        %2710 = vmatpush.xpose.msra.mxu0 0.0
        %2711 = vmatpush.xpose.msra.mxu0 0.0
        %2712 = vmatpush.xpose.msra.mxu0 0.0
        %2713 = vmatpush.xpose.msra.mxu0 0.0
        %2714 = vmatpush.xpose.msra.mxu0 0.0
        %2715 = vmatpush.xpose.msra.mxu0 0.0
        %2716 = vmatpush.xpose.msra.mxu0 0.0
        %2717 = vmatpush.xpose.msra.mxu0 0.0
        %2718 = vmatpush.xpose.msra.mxu0 0.0
        %2719 = vmatpush.xpose.msra.mxu0 0.0
        %2720 = vmatpush.xpose.msra.mxu0 0.0
        %2721 = vmatpush.xpose.msra.mxu0 0.0
        %2722 = vmatpush.xpose.msra.mxu0 0.0
        %2723 = vmatpush.xpose.msra.mxu0 0.0
        %2724 = vmatpush.xpose.msra.mxu0 %v2708
        %2725 = vmatpush.xpose.msra.mxu0 %v2705
        %2726 = vmatmul.f32.gmra.mxu0 %v2699
        %v2727 = vpop.f32.mrf.mxu0
        %v2728 = vadd.f32 0.0, %v2727
        %2729 = vmatmul.f32.gmra.mxu0 %v2702
        %v2730 = vpop.f32.mrf.mxu0
        %v2731 = vadd.f32 0.0, %v2730
        %2732 = vdwg.mxu0
        %v2733 = vld [vmem:[%s6 + $0x2] sm:$0x1]
        %v2734 = vperm.slane %v2733, 0
        %v2735 = vmul.f32 %v457, %v2734
        %v2736 = vmul.f32 %v458, %v2734
        %v2737 = vmul.f32 %v459, %v2734
        %v2738 = vmul.f32 %v460, %v2734
        %v2739 = vmul.f32 %v461, %v2734
        %v2740 = vmul.f32 %v462, %v2734
        %v2741 = vmul.f32 %v463, %v2734
        %v2742 = vmul.f32 %v464, %v2734
        %v2743 = vmul.f32 %v465, %v2734
        %v2744 = vmul.f32 %v466, %v2734
        %v2745 = vmul.f32 %v467, %v2734
        %v2746 = vmul.f32 %v468, %v2734
        %v2747 = vmul.f32 %v469, %v2734
        %v2748 = vmul.f32 %v470, %v2734
        %v2749 = vmul.f32 %v471, %v2734
        %v2750 = vmul.f32 %v472, %v2734
        %v2751 = vmul.f32 %v473, %v2734
        %v2752 = vmul.f32 %v474, %v2734
        %v2753 = vmul.f32 %v475, %v2734
        %v2754 = vmul.f32 %v476, %v2734
        %v2755 = vmul.f32 %v477, %v2734
        %v2756 = vmul.f32 %v478, %v2734
        %v2757 = vmul.f32 %v479, %v2734
        %v2758 = vmul.f32 %v480, %v2734
        %v2759 = vmul.f32 %v481, %v2734
        %v2760 = vmul.f32 %v482, %v2734
        %v2761 = vmul.f32 %v483, %v2734
        %v2762 = vmul.f32 %v484, %v2734
        %v2763 = vmul.f32 %v485, %v2734
        %v2764 = vmul.f32 %v486, %v2734
        %v2765 = vmul.f32 %v487, %v2734
        %v2766 = vmul.f32 %v488, %v2734
        %v2767 = vsel %vm852, %v2735, 0.0
        %2768 = vadd.xlane.f32.xlu0 %v2767
        %v2769 = vpop.xlane.xlu0 %2768
        %v2770 = vsel %vm852, %v2736, 0.0
        %2771 = vadd.xlane.f32.xlu0 %v2770
        %v2772 = vpop.xlane.xlu0 %2771
        %v2773 = vsel %vm852, %v2737, 0.0
        %2774 = vadd.xlane.f32.xlu0 %v2773
        %v2775 = vpop.xlane.xlu0 %2774
        %v2776 = vsel %vm852, %v2738, 0.0
        %2777 = vadd.xlane.f32.xlu0 %v2776
        %v2778 = vpop.xlane.xlu0 %2777
        %v2779 = vsel %vm852, %v2739, 0.0
        %2780 = vadd.xlane.f32.xlu0 %v2779
        %v2781 = vpop.xlane.xlu0 %2780
        %v2782 = vsel %vm852, %v2740, 0.0
        %2783 = vadd.xlane.f32.xlu0 %v2782
        %v2784 = vpop.xlane.xlu0 %2783
        %v2785 = vsel %vm852, %v2741, 0.0
        %2786 = vadd.xlane.f32.xlu0 %v2785
        %v2787 = vpop.xlane.xlu0 %2786
        %v2788 = vsel %vm852, %v2742, 0.0
        %2789 = vadd.xlane.f32.xlu0 %v2788
        %v2790 = vpop.xlane.xlu0 %2789
        %v2791 = vsel %vm852, %v2743, 0.0
        %2792 = vadd.xlane.f32.xlu0 %v2791
        %v2793 = vpop.xlane.xlu0 %2792
        %v2794 = vsel %vm852, %v2744, 0.0
        %2795 = vadd.xlane.f32.xlu0 %v2794
        %v2796 = vpop.xlane.xlu0 %2795
        %v2797 = vsel %vm852, %v2745, 0.0
        %2798 = vadd.xlane.f32.xlu0 %v2797
        %v2799 = vpop.xlane.xlu0 %2798
        %v2800 = vsel %vm852, %v2746, 0.0
        %2801 = vadd.xlane.f32.xlu0 %v2800
        %v2802 = vpop.xlane.xlu0 %2801
        %v2803 = vsel %vm852, %v2747, 0.0
        %2804 = vadd.xlane.f32.xlu0 %v2803
        %v2805 = vpop.xlane.xlu0 %2804
        %v2806 = vsel %vm852, %v2748, 0.0
        %2807 = vadd.xlane.f32.xlu0 %v2806
        %v2808 = vpop.xlane.xlu0 %2807
        %v2809 = vsel %vm852, %v2749, 0.0
        %2810 = vadd.xlane.f32.xlu0 %v2809
        %v2811 = vpop.xlane.xlu0 %2810
        %v2812 = vsel %vm852, %v2750, 0.0
        %2813 = vadd.xlane.f32.xlu0 %v2812
        %v2814 = vpop.xlane.xlu0 %2813
        %v2815 = vsel %vm852, %v2751, 0.0
        %2816 = vadd.xlane.f32.xlu0 %v2815
        %v2817 = vpop.xlane.xlu0 %2816
        %v2818 = vsel %vm852, %v2752, 0.0
        %2819 = vadd.xlane.f32.xlu0 %v2818
        %v2820 = vpop.xlane.xlu0 %2819
        %v2821 = vsel %vm852, %v2753, 0.0
        %2822 = vadd.xlane.f32.xlu0 %v2821
        %v2823 = vpop.xlane.xlu0 %2822
        %v2824 = vsel %vm852, %v2754, 0.0
        %2825 = vadd.xlane.f32.xlu0 %v2824
        %v2826 = vpop.xlane.xlu0 %2825
        %v2827 = vsel %vm852, %v2755, 0.0
        %2828 = vadd.xlane.f32.xlu0 %v2827
        %v2829 = vpop.xlane.xlu0 %2828
        %v2830 = vsel %vm852, %v2756, 0.0
        %2831 = vadd.xlane.f32.xlu0 %v2830
        %v2832 = vpop.xlane.xlu0 %2831
        %v2833 = vsel %vm852, %v2757, 0.0
        %2834 = vadd.xlane.f32.xlu0 %v2833
        %v2835 = vpop.xlane.xlu0 %2834
        %v2836 = vsel %vm852, %v2758, 0.0
        %2837 = vadd.xlane.f32.xlu0 %v2836
        %v2838 = vpop.xlane.xlu0 %2837
        %v2839 = vsel %vm852, %v2759, 0.0
        %2840 = vadd.xlane.f32.xlu0 %v2839
        %v2841 = vpop.xlane.xlu0 %2840
        %v2842 = vsel %vm852, %v2760, 0.0
        %2843 = vadd.xlane.f32.xlu0 %v2842
        %v2844 = vpop.xlane.xlu0 %2843
        %v2845 = vsel %vm852, %v2761, 0.0
        %2846 = vadd.xlane.f32.xlu0 %v2845
        %v2847 = vpop.xlane.xlu0 %2846
        %v2848 = vsel %vm852, %v2762, 0.0
        %2849 = vadd.xlane.f32.xlu0 %v2848
        %v2850 = vpop.xlane.xlu0 %2849
        %v2851 = vsel %vm852, %v2763, 0.0
        %2852 = vadd.xlane.f32.xlu0 %v2851
        %v2853 = vpop.xlane.xlu0 %2852
        %v2854 = vsel %vm852, %v2764, 0.0
        %2855 = vadd.xlane.f32.xlu0 %v2854
        %v2856 = vpop.xlane.xlu0 %2855
        %v2857 = vsel %vm852, %v2765, 0.0
        %2858 = vadd.xlane.f32.xlu0 %v2857
        %v2859 = vpop.xlane.xlu0 %2858
        %v2860 = vsel %vm852, %v2766, 0.0
        %2861 = vadd.xlane.f32.xlu0 %v2860
        %v2862 = vpop.xlane.xlu0 %2861
        %s2863 = smul.f32 %s2577, 0.5
        %v2864 = vstv %s2863
        %v2865 = vmul.f32 %v2864, %v2643
        %v2866 = vmul.f32 %v2864, %v2646
        %v2867 = vsub.f32 %v2728, %v2865
        %v2868 = vsub.f32 %v2731, %v2866
        %v2901 = vperm.slane %v2769, %v1119
        %v2902 = vperm.slane %v2772, %v1121
        %v2903 = vsel %vm1123, %v2902, %v2901
        %v2904 = vperm.slane %v2775, %v1119
        %v2905 = vperm.slane %v2778, %v1121
        %v2906 = vsel %vm1123, %v2905, %v2904
        %v2907 = vperm.slane %v2781, %v1119
        %v2908 = vperm.slane %v2784, %v1121
        %v2909 = vsel %vm1123, %v2908, %v2907
        %v2910 = vperm.slane %v2787, %v1119
        %v2911 = vperm.slane %v2790, %v1121
        %v2912 = vsel %vm1123, %v2911, %v2910
        %v2913 = vperm.slane %v2793, %v1119
        %v2914 = vperm.slane %v2796, %v1121
        %v2915 = vsel %vm1123, %v2914, %v2913
        %v2916 = vperm.slane %v2799, %v1119
        %v2917 = vperm.slane %v2802, %v1121
        %v2918 = vsel %vm1123, %v2917, %v2916
        %v2919 = vperm.slane %v2805, %v1119
        %v2920 = vperm.slane %v2808, %v1121
        %v2921 = vsel %vm1123, %v2920, %v2919
        %v2922 = vperm.slane %v2811, %v1119
        %v2923 = vperm.slane %v2814, %v1121
        %v2924 = vsel %vm1123, %v2923, %v2922
        %v2925 = vperm.slane %v2817, %v1119
        %v2926 = vperm.slane %v2820, %v1121
        %v2927 = vsel %vm1123, %v2926, %v2925
        %v2928 = vperm.slane %v2823, %v1119
        %v2929 = vperm.slane %v2826, %v1121
        %v2930 = vsel %vm1123, %v2929, %v2928
        %v2931 = vperm.slane %v2829, %v1119
        %v2932 = vperm.slane %v2832, %v1121
        %v2933 = vsel %vm1123, %v2932, %v2931
        %v2934 = vperm.slane %v2835, %v1119
        %v2935 = vperm.slane %v2838, %v1121
        %v2936 = vsel %vm1123, %v2935, %v2934
        %v2937 = vperm.slane %v2841, %v1119
        %v2938 = vperm.slane %v2844, %v1121
        %v2939 = vsel %vm1123, %v2938, %v2937
        %v2940 = vperm.slane %v2847, %v1119
        %v2941 = vperm.slane %v2850, %v1121
        %v2942 = vsel %vm1123, %v2941, %v2940
        %v2943 = vperm.slane %v2853, %v1119
        %v2944 = vperm.slane %v2856, %v1121
        %v2945 = vsel %vm1123, %v2944, %v2943
        %v2946 = vperm.slane %v2859, %v1119
        %v2947 = vperm.slane %v2862, %v1121
        %v2948 = vsel %vm1123, %v2947, %v2946
        %v2949 = vsel %vm1170, %v2906, %v2903
        %v2950 = vsel %vm1172, %v2909, %v2949
        %v2951 = vsel %vm1174, %v2912, %v2950
        %v2952 = vsel %vm1176, %v2915, %v2951
        %v2953 = vsel %vm1178, %v2918, %v2952
        %v2954 = vsel %vm1180, %v2921, %v2953
        %v2955 = vsel %vm1182, %v2924, %v2954
        %v2956 = vsel %vm1170, %v2930, %v2927
        %v2957 = vsel %vm1172, %v2933, %v2956
        %v2958 = vsel %vm1174, %v2936, %v2957
        %v2959 = vsel %vm1176, %v2939, %v2958
        %v2960 = vsel %vm1178, %v2942, %v2959
        %v2961 = vsel %vm1180, %v2945, %v2960
        %v2962 = vsel %vm1182, %v2948, %v2961
        %v2965 = vadd.f32 %v2867, %v2955
        %v2966 = vadd.f32 %v2868, %v2962
        %v2967 = vstv %s2578
        %v2968 = vadd.f32 %v2965, %v2967
        %v2969 = vadd.f32 %v2966, %v2967
        %v2970 = vadd.f32 %v2968, %v489
        %v2971 = vadd.f32 %v2969, %v490
        %v2972 = vsel %vm852, %v2970, -inf
        %2973 = vmax.xlane.f32.xlu0 %v2972
        %v2974 = vpop.xlane.xlu0 %2973
        %v2975 = vsel %vm852, %v2971, -inf
        %2976 = vmax.xlane.f32.xlu0 %v2975
        %v2977 = vpop.xlane.xlu0 %2976
        %v2978 = vsub.f32 %v2970, %v2974
        %v2979 = vsub.f32 %v2971, %v2977
        %v2980 = vmul.f32 %v2978, 1.442695
        %v2981 = vpow.pop %v2980
        %v2982 = vmul.f32 %v2979, 1.442695
        %v2983 = vpow.pop %v2982
        %v2984 = vsel %vm852, %v2981, 0.0
        %2985 = vadd.xlane.f32.xlu0 %v2984
        %v2986 = vpop.xlane.xlu0 %2985
        %v2987 = vsel %vm852, %v2983, 0.0
        %2988 = vadd.xlane.f32.xlu0 %v2987
        %v2989 = vpop.xlane.xlu0 %2988
        %v2990 = vrcp.pop %v2986
        %v2991 = vmul.f32 %v2986, %v2990
        %v2992 = vsub.f32 1.0, %v2991
        %v2993 = vmul.f32 %v2990, %v2992
        %v2994 = vadd.f32 %v2990, %v2993
        %vm2995 = vweird.f32 %v2986
        %vm2996 = vweird.f32 %v2990
        %vm2997 = vmor %vm2995, %vm2996
        %v2998 = vsel %vm2997, %v2990, %v2994
        %v2999 = vand.u32 2147483647, %v2986
        %vm3000 = vcmp.eq.f32.partialorder %v2999, 8.507059e+37
        %v3001 = vand.u32 %v2986, 2147483648
        %v3002 = vor.u32 1.1754944e-38, %v3001
        %v3003 = vsel %vm3000, %v3002, %v2998
        %v3004 = vmul.f32 %v2981, %v3003
        %v3005 = vrcp.pop %v2989
        %v3006 = vmul.f32 %v2989, %v3005
        %v3007 = vsub.f32 1.0, %v3006
        %v3008 = vmul.f32 %v3005, %v3007
        %v3009 = vadd.f32 %v3005, %v3008
        %vm3010 = vweird.f32 %v2989
        %vm3011 = vweird.f32 %v3005
        %vm3012 = vmor %vm3010, %vm3011
        %v3013 = vsel %vm3012, %v3005, %v3009
        %v3014 = vand.u32 2147483647, %v2989
        %vm3015 = vcmp.eq.f32.partialorder %v3014, 8.507059e+37
        %v3016 = vand.u32 %v2989, 2147483648
        %v3017 = vor.u32 1.1754944e-38, %v3016
        %v3018 = vsel %vm3015, %v3017, %v3013
        %v3019 = vmul.f32 %v2983, %v3018
        %3020 = vrot.lane.b32.xlu0 %v447, 56
        %v3021 = vpop.permute.xlu0 %3020
        %3022 = vrot.lane.b32.xlu0 %v450, 56
        %v3023 = vpop.permute.xlu0 %3022
        %v3027 = vsel %vm852, %v3004, 0
        %v3030 = vsel %vm852, %v3019, 0
        %3032 = vmatpush.msra.mxu0 0.0
        %3033 = vmatpush.msra.mxu0 0.0
        %3034 = vmatpush.msra.mxu0 0.0
        %3035 = vmatpush.msra.mxu0 0.0
        %3036 = vmatpush.msra.mxu0 0.0
        %3037 = vmatpush.msra.mxu0 0.0
        %3038 = vmatpush.msra.mxu0 0.0
        %3039 = vmatpush.msra.mxu0 0.0
        %3040 = vmatpush.msra.mxu0 0.0
        %3041 = vmatpush.msra.mxu0 0.0
        %3042 = vmatpush.msra.mxu0 0.0
        %3043 = vmatpush.msra.mxu0 0.0
        %3044 = vmatpush.msra.mxu0 0.0
        %3045 = vmatpush.msra.mxu0 0.0
        %3046 = vmatpush.msra.mxu0 %v3023
        %3047 = vmatpush.msra.mxu0 %v3021
        %3048 = vmatmul.f32.gmra.mxu0 %v3027
        %v3049 = vpop.f32.mrf.mxu0
        %v3050 = vadd.f32 0.0, %v3049
        %3051 = vmatmul.f32.gmra.mxu0 %v3030
        %v3052 = vpop.f32.mrf.mxu0
        %v3053 = vadd.f32 0.0, %v3052
        %3054 = vdwg.mxu0
        %3055 = vmatpush.msra.mxu0 0.0
        %3056 = vmatpush.msra.mxu0 0.0
        %3057 = vmatpush.msra.mxu0 0.0
        %3058 = vmatpush.msra.mxu0 0.0
        %3059 = vmatpush.msra.mxu0 0.0
        %3060 = vmatpush.msra.mxu0 0.0
        %3061 = vmatpush.msra.mxu0 0.0
        %3062 = vmatpush.msra.mxu0 0.0
        %3063 = vmatpush.msra.mxu0 0.0
        %3064 = vmatpush.msra.mxu0 0.0
        %3065 = vmatpush.msra.mxu0 0.0
        %3066 = vmatpush.msra.mxu0 0.0
        %3067 = vmatpush.msra.mxu0 0.0
        %3068 = vmatpush.msra.mxu0 0.0
        %3069 = vmatpush.msra.mxu0 %v2638
        %3070 = vmatpush.msra.mxu0 %v2637
        %3071 = vmatmul.f32.gmra.mxu0 %v3027
        %v3072 = vpop.f32.mrf.mxu0
        %v3073 = vadd.f32 0.0, %v3072
        %3074 = vmatmul.f32.gmra.mxu0 %v3030
        %v3075 = vpop.f32.mrf.mxu0
        %v3076 = vadd.f32 0.0, %v3075
        %3077 = vdwg.mxu0
        %v3078 = vperm.slane %v3004, 0
        %v3079 = vlaneseq
        %v3080 = vshrl.u32 %v3079, 7
        %3082 = vset.pattern.permute.xlu0 %v3080
        %3083 = vperm.xlu0 %3082, %v3078
        %v3084 = vpop.permute.xlu0 %3083
        %v3085 = vlaneseq
        %v3086 = vshrl.u32 %v3085, 7
        %v3087 = vadd.s32 %v3086, 8
        %3088 = vset.pattern.permute.xlu0 %v3087
        %3089 = vperm.xlu0 %3088, %v3078
        %v3090 = vpop.permute.xlu0 %3089
        %v3091 = vperm.slane %v3004, 1
        %v3092 = vlaneseq
        %v3093 = vshrl.u32 %v3092, 7
        %3095 = vset.pattern.permute.xlu0 %v3093
        %3096 = vperm.xlu0 %3095, %v3091
        %v3097 = vpop.permute.xlu0 %3096
        %v3098 = vlaneseq
        %v3099 = vshrl.u32 %v3098, 7
        %v3100 = vadd.s32 %v3099, 8
        %3101 = vset.pattern.permute.xlu0 %v3100
        %3102 = vperm.xlu0 %3101, %v3091
        %v3103 = vpop.permute.xlu0 %3102
        %v3104 = vperm.slane %v3004, 2
        %v3105 = vlaneseq
        %v3106 = vshrl.u32 %v3105, 7
        %3108 = vset.pattern.permute.xlu0 %v3106
        %3109 = vperm.xlu0 %3108, %v3104
        %v3110 = vpop.permute.xlu0 %3109
        %v3111 = vlaneseq
        %v3112 = vshrl.u32 %v3111, 7
        %v3113 = vadd.s32 %v3112, 8
        %3114 = vset.pattern.permute.xlu0 %v3113
        %3115 = vperm.xlu0 %3114, %v3104
        %v3116 = vpop.permute.xlu0 %3115
        %v3117 = vperm.slane %v3004, 3
        %v3118 = vlaneseq
        %v3119 = vshrl.u32 %v3118, 7
        %3121 = vset.pattern.permute.xlu0 %v3119
        %3122 = vperm.xlu0 %3121, %v3117
        %v3123 = vpop.permute.xlu0 %3122
        %v3124 = vlaneseq
        %v3125 = vshrl.u32 %v3124, 7
        %v3126 = vadd.s32 %v3125, 8
        %3127 = vset.pattern.permute.xlu0 %v3126
        %3128 = vperm.xlu0 %3127, %v3117
        %v3129 = vpop.permute.xlu0 %3128
        %v3130 = vperm.slane %v3004, 4
        %v3131 = vlaneseq
        %v3132 = vshrl.u32 %v3131, 7
        %3134 = vset.pattern.permute.xlu0 %v3132
        %3135 = vperm.xlu0 %3134, %v3130
        %v3136 = vpop.permute.xlu0 %3135
        %v3137 = vlaneseq
        %v3138 = vshrl.u32 %v3137, 7
        %v3139 = vadd.s32 %v3138, 8
        %3140 = vset.pattern.permute.xlu0 %v3139
        %3141 = vperm.xlu0 %3140, %v3130
        %v3142 = vpop.permute.xlu0 %3141
        %v3143 = vperm.slane %v3004, 5
        %v3144 = vlaneseq
        %v3145 = vshrl.u32 %v3144, 7
        %3147 = vset.pattern.permute.xlu0 %v3145
        %3148 = vperm.xlu0 %3147, %v3143
        %v3149 = vpop.permute.xlu0 %3148
        %v3150 = vlaneseq
        %v3151 = vshrl.u32 %v3150, 7
        %v3152 = vadd.s32 %v3151, 8
        %3153 = vset.pattern.permute.xlu0 %v3152
        %3154 = vperm.xlu0 %3153, %v3143
        %v3155 = vpop.permute.xlu0 %3154
        %v3156 = vperm.slane %v3004, 6
        %v3157 = vlaneseq
        %v3158 = vshrl.u32 %v3157, 7
        %3160 = vset.pattern.permute.xlu0 %v3158
        %3161 = vperm.xlu0 %3160, %v3156
        %v3162 = vpop.permute.xlu0 %3161
        %v3163 = vlaneseq
        %v3164 = vshrl.u32 %v3163, 7
        %v3165 = vadd.s32 %v3164, 8
        %3166 = vset.pattern.permute.xlu0 %v3165
        %3167 = vperm.xlu0 %3166, %v3156
        %v3168 = vpop.permute.xlu0 %3167
        %v3169 = vperm.slane %v3004, 7
        %v3170 = vlaneseq
        %v3171 = vshrl.u32 %v3170, 7
        %3173 = vset.pattern.permute.xlu0 %v3171
        %3174 = vperm.xlu0 %3173, %v3169
        %v3175 = vpop.permute.xlu0 %3174
        %v3176 = vlaneseq
        %v3177 = vshrl.u32 %v3176, 7
        %v3178 = vadd.s32 %v3177, 8
        %3179 = vset.pattern.permute.xlu0 %v3178
        %3180 = vperm.xlu0 %3179, %v3169
        %v3181 = vpop.permute.xlu0 %3180
        %v3182 = vperm.slane %v3019, 0
        %v3183 = vlaneseq
        %v3184 = vshrl.u32 %v3183, 7
        %3186 = vset.pattern.permute.xlu0 %v3184
        %3187 = vperm.xlu0 %3186, %v3182
        %v3188 = vpop.permute.xlu0 %3187
        %v3189 = vlaneseq
        %v3190 = vshrl.u32 %v3189, 7
        %v3191 = vadd.s32 %v3190, 8
        %3192 = vset.pattern.permute.xlu0 %v3191
        %3193 = vperm.xlu0 %3192, %v3182
        %v3194 = vpop.permute.xlu0 %3193
        %v3195 = vperm.slane %v3019, 1
        %v3196 = vlaneseq
        %v3197 = vshrl.u32 %v3196, 7
        %3199 = vset.pattern.permute.xlu0 %v3197
        %3200 = vperm.xlu0 %3199, %v3195
        %v3201 = vpop.permute.xlu0 %3200
        %v3202 = vlaneseq
        %v3203 = vshrl.u32 %v3202, 7
        %v3204 = vadd.s32 %v3203, 8
        %3205 = vset.pattern.permute.xlu0 %v3204
        %3206 = vperm.xlu0 %3205, %v3195
        %v3207 = vpop.permute.xlu0 %3206
        %v3208 = vperm.slane %v3019, 2
        %v3209 = vlaneseq
        %v3210 = vshrl.u32 %v3209, 7
        %3212 = vset.pattern.permute.xlu0 %v3210
        %3213 = vperm.xlu0 %3212, %v3208
        %v3214 = vpop.permute.xlu0 %3213
        %v3215 = vlaneseq
        %v3216 = vshrl.u32 %v3215, 7
        %v3217 = vadd.s32 %v3216, 8
        %3218 = vset.pattern.permute.xlu0 %v3217
        %3219 = vperm.xlu0 %3218, %v3208
        %v3220 = vpop.permute.xlu0 %3219
        %v3221 = vperm.slane %v3019, 3
        %v3222 = vlaneseq
        %v3223 = vshrl.u32 %v3222, 7
        %3225 = vset.pattern.permute.xlu0 %v3223
        %3226 = vperm.xlu0 %3225, %v3221
        %v3227 = vpop.permute.xlu0 %3226
        %v3228 = vlaneseq
        %v3229 = vshrl.u32 %v3228, 7
        %v3230 = vadd.s32 %v3229, 8
        %3231 = vset.pattern.permute.xlu0 %v3230
        %3232 = vperm.xlu0 %3231, %v3221
        %v3233 = vpop.permute.xlu0 %3232
        %v3234 = vperm.slane %v3019, 4
        %v3235 = vlaneseq
        %v3236 = vshrl.u32 %v3235, 7
        %3238 = vset.pattern.permute.xlu0 %v3236
        %3239 = vperm.xlu0 %3238, %v3234
        %v3240 = vpop.permute.xlu0 %3239
        %v3241 = vlaneseq
        %v3242 = vshrl.u32 %v3241, 7
        %v3243 = vadd.s32 %v3242, 8
        %3244 = vset.pattern.permute.xlu0 %v3243
        %3245 = vperm.xlu0 %3244, %v3234
        %v3246 = vpop.permute.xlu0 %3245
        %v3247 = vperm.slane %v3019, 5
        %v3248 = vlaneseq
        %v3249 = vshrl.u32 %v3248, 7
        %3251 = vset.pattern.permute.xlu0 %v3249
        %3252 = vperm.xlu0 %3251, %v3247
        %v3253 = vpop.permute.xlu0 %3252
        %v3254 = vlaneseq
        %v3255 = vshrl.u32 %v3254, 7
        %v3256 = vadd.s32 %v3255, 8
        %3257 = vset.pattern.permute.xlu0 %v3256
        %3258 = vperm.xlu0 %3257, %v3247
        %v3259 = vpop.permute.xlu0 %3258
        %v3260 = vperm.slane %v3019, 6
        %v3261 = vlaneseq
        %v3262 = vshrl.u32 %v3261, 7
        %3264 = vset.pattern.permute.xlu0 %v3262
        %3265 = vperm.xlu0 %3264, %v3260
        %v3266 = vpop.permute.xlu0 %3265
        %v3267 = vlaneseq
        %v3268 = vshrl.u32 %v3267, 7
        %v3269 = vadd.s32 %v3268, 8
        %3270 = vset.pattern.permute.xlu0 %v3269
        %3271 = vperm.xlu0 %3270, %v3260
        %v3272 = vpop.permute.xlu0 %3271
        %v3273 = vperm.slane %v3019, 7
        %v3274 = vlaneseq
        %v3275 = vshrl.u32 %v3274, 7
        %3277 = vset.pattern.permute.xlu0 %v3275
        %3278 = vperm.xlu0 %3277, %v3273
        %v3279 = vpop.permute.xlu0 %3278
        %v3280 = vlaneseq
        %v3281 = vshrl.u32 %v3280, 7
        %v3282 = vadd.s32 %v3281, 8
        %3283 = vset.pattern.permute.xlu0 %v3282
        %3284 = vperm.xlu0 %3283, %v3273
        %v3285 = vpop.permute.xlu0 %3284
        %v3286 = vmul.f32 %v3084, %v457
        %v3287 = vmul.f32 %v3090, %v458
        %v3288 = vmul.f32 %v3097, %v459
        %v3289 = vmul.f32 %v3103, %v460
        %v3290 = vmul.f32 %v3110, %v461
        %v3291 = vmul.f32 %v3116, %v462
        %v3292 = vmul.f32 %v3123, %v463
        %v3293 = vmul.f32 %v3129, %v464
        %v3294 = vmul.f32 %v3136, %v465
        %v3295 = vmul.f32 %v3142, %v466
        %v3296 = vmul.f32 %v3149, %v467
        %v3297 = vmul.f32 %v3155, %v468
        %v3298 = vmul.f32 %v3162, %v469
        %v3299 = vmul.f32 %v3168, %v470
        %v3300 = vmul.f32 %v3175, %v471
        %v3301 = vmul.f32 %v3181, %v472
        %v3302 = vmul.f32 %v3188, %v473
        %v3303 = vmul.f32 %v3194, %v474
        %v3304 = vmul.f32 %v3201, %v475
        %v3305 = vmul.f32 %v3207, %v476
        %v3306 = vmul.f32 %v3214, %v477
        %v3307 = vmul.f32 %v3220, %v478
        %v3308 = vmul.f32 %v3227, %v479
        %v3309 = vmul.f32 %v3233, %v480
        %v3310 = vmul.f32 %v3240, %v481
        %v3311 = vmul.f32 %v3246, %v482
        %v3312 = vmul.f32 %v3253, %v483
        %v3313 = vmul.f32 %v3259, %v484
        %v3314 = vmul.f32 %v3266, %v485
        %v3315 = vmul.f32 %v3272, %v486
        %v3316 = vmul.f32 %v3279, %v487
        %v3317 = vmul.f32 %v3285, %v488
        %v3318 = vsel %vm852, %v3286, 0.0
        %v3319 = vsel %vm852, %v3287, 0.0
        %v3320 = vadd.f32 %v3318, %v3319
        %v3321 = vrot.slane %v3320, 4
        %v3322 = vadd.f32 %v3320, %v3321
        %v3323 = vrot.slane %v3322, 2
        %v3324 = vadd.f32 %v3322, %v3323
        %v3325 = vrot.slane %v3324, 1
        %v3326 = vadd.f32 %v3324, %v3325
        %v3327 = vsel %vm852, %v3288, 0.0
        %v3328 = vsel %vm852, %v3289, 0.0
        %v3329 = vadd.f32 %v3327, %v3328
        %v3330 = vrot.slane %v3329, 4
        %v3331 = vadd.f32 %v3329, %v3330
        %v3332 = vrot.slane %v3331, 2
        %v3333 = vadd.f32 %v3331, %v3332
        %v3334 = vrot.slane %v3333, 1
        %v3335 = vadd.f32 %v3333, %v3334
        %v3336 = vsel %vm852, %v3290, 0.0
        %v3337 = vsel %vm852, %v3291, 0.0
        %v3338 = vadd.f32 %v3336, %v3337
        %v3339 = vrot.slane %v3338, 4
        %v3340 = vadd.f32 %v3338, %v3339
        %v3341 = vrot.slane %v3340, 2
        %v3342 = vadd.f32 %v3340, %v3341
        %v3343 = vrot.slane %v3342, 1
        %v3344 = vadd.f32 %v3342, %v3343
        %v3345 = vsel %vm852, %v3292, 0.0
        %v3346 = vsel %vm852, %v3293, 0.0
        %v3347 = vadd.f32 %v3345, %v3346
        %v3348 = vrot.slane %v3347, 4
        %v3349 = vadd.f32 %v3347, %v3348
        %v3350 = vrot.slane %v3349, 2
        %v3351 = vadd.f32 %v3349, %v3350
        %v3352 = vrot.slane %v3351, 1
        %v3353 = vadd.f32 %v3351, %v3352
        %v3354 = vsel %vm852, %v3294, 0.0
        %v3355 = vsel %vm852, %v3295, 0.0
        %v3356 = vadd.f32 %v3354, %v3355
        %v3357 = vrot.slane %v3356, 4
        %v3358 = vadd.f32 %v3356, %v3357
        %v3359 = vrot.slane %v3358, 2
        %v3360 = vadd.f32 %v3358, %v3359
        %v3361 = vrot.slane %v3360, 1
        %v3362 = vadd.f32 %v3360, %v3361
        %v3363 = vsel %vm852, %v3296, 0.0
        %v3364 = vsel %vm852, %v3297, 0.0
        %v3365 = vadd.f32 %v3363, %v3364
        %v3366 = vrot.slane %v3365, 4
        %v3367 = vadd.f32 %v3365, %v3366
        %v3368 = vrot.slane %v3367, 2
        %v3369 = vadd.f32 %v3367, %v3368
        %v3370 = vrot.slane %v3369, 1
        %v3371 = vadd.f32 %v3369, %v3370
        %v3372 = vsel %vm852, %v3298, 0.0
        %v3373 = vsel %vm852, %v3299, 0.0
        %v3374 = vadd.f32 %v3372, %v3373
        %v3375 = vrot.slane %v3374, 4
        %v3376 = vadd.f32 %v3374, %v3375
        %v3377 = vrot.slane %v3376, 2
        %v3378 = vadd.f32 %v3376, %v3377
        %v3379 = vrot.slane %v3378, 1
        %v3380 = vadd.f32 %v3378, %v3379
        %v3381 = vsel %vm852, %v3300, 0.0
        %v3382 = vsel %vm852, %v3301, 0.0
        %v3383 = vadd.f32 %v3381, %v3382
        %v3384 = vrot.slane %v3383, 4
        %v3385 = vadd.f32 %v3383, %v3384
        %v3386 = vrot.slane %v3385, 2
        %v3387 = vadd.f32 %v3385, %v3386
        %v3388 = vrot.slane %v3387, 1
        %v3389 = vadd.f32 %v3387, %v3388
        %v3390 = vsel %vm852, %v3302, 0.0
        %v3391 = vsel %vm852, %v3303, 0.0
        %v3392 = vadd.f32 %v3390, %v3391
        %v3393 = vrot.slane %v3392, 4
        %v3394 = vadd.f32 %v3392, %v3393
        %v3395 = vrot.slane %v3394, 2
        %v3396 = vadd.f32 %v3394, %v3395
        %v3397 = vrot.slane %v3396, 1
        %v3398 = vadd.f32 %v3396, %v3397
        %v3399 = vsel %vm852, %v3304, 0.0
        %v3400 = vsel %vm852, %v3305, 0.0
        %v3401 = vadd.f32 %v3399, %v3400
        %v3402 = vrot.slane %v3401, 4
        %v3403 = vadd.f32 %v3401, %v3402
        %v3404 = vrot.slane %v3403, 2
        %v3405 = vadd.f32 %v3403, %v3404
        %v3406 = vrot.slane %v3405, 1
        %v3407 = vadd.f32 %v3405, %v3406
        %v3408 = vsel %vm852, %v3306, 0.0
        %v3409 = vsel %vm852, %v3307, 0.0
        %v3410 = vadd.f32 %v3408, %v3409
        %v3411 = vrot.slane %v3410, 4
        %v3412 = vadd.f32 %v3410, %v3411
        %v3413 = vrot.slane %v3412, 2
        %v3414 = vadd.f32 %v3412, %v3413
        %v3415 = vrot.slane %v3414, 1
        %v3416 = vadd.f32 %v3414, %v3415
        %v3417 = vsel %vm852, %v3308, 0.0
        %v3418 = vsel %vm852, %v3309, 0.0
        %v3419 = vadd.f32 %v3417, %v3418
        %v3420 = vrot.slane %v3419, 4
        %v3421 = vadd.f32 %v3419, %v3420
        %v3422 = vrot.slane %v3421, 2
        %v3423 = vadd.f32 %v3421, %v3422
        %v3424 = vrot.slane %v3423, 1
        %v3425 = vadd.f32 %v3423, %v3424
        %v3426 = vsel %vm852, %v3310, 0.0
        %v3427 = vsel %vm852, %v3311, 0.0
        %v3428 = vadd.f32 %v3426, %v3427
        %v3429 = vrot.slane %v3428, 4
        %v3430 = vadd.f32 %v3428, %v3429
        %v3431 = vrot.slane %v3430, 2
        %v3432 = vadd.f32 %v3430, %v3431
        %v3433 = vrot.slane %v3432, 1
        %v3434 = vadd.f32 %v3432, %v3433
        %v3435 = vsel %vm852, %v3312, 0.0
        %v3436 = vsel %vm852, %v3313, 0.0
        %v3437 = vadd.f32 %v3435, %v3436
        %v3438 = vrot.slane %v3437, 4
        %v3439 = vadd.f32 %v3437, %v3438
        %v3440 = vrot.slane %v3439, 2
        %v3441 = vadd.f32 %v3439, %v3440
        %v3442 = vrot.slane %v3441, 1
        %v3443 = vadd.f32 %v3441, %v3442
        %v3444 = vsel %vm852, %v3314, 0.0
        %v3445 = vsel %vm852, %v3315, 0.0
        %v3446 = vadd.f32 %v3444, %v3445
        %v3447 = vrot.slane %v3446, 4
        %v3448 = vadd.f32 %v3446, %v3447
        %v3449 = vrot.slane %v3448, 2
        %v3450 = vadd.f32 %v3448, %v3449
        %v3451 = vrot.slane %v3450, 1
        %v3452 = vadd.f32 %v3450, %v3451
        %v3453 = vsel %vm852, %v3316, 0.0
        %v3454 = vsel %vm852, %v3317, 0.0
        %v3455 = vadd.f32 %v3453, %v3454
        %v3456 = vrot.slane %v3455, 4
        %v3457 = vadd.f32 %v3455, %v3456
        %v3458 = vrot.slane %v3457, 2
        %v3459 = vadd.f32 %v3457, %v3458
        %v3460 = vrot.slane %v3459, 1
        %v3461 = vadd.f32 %v3459, %v3460
        %s3462 = sld [smem:[#allocation2 + $0x3]]
        %s3463 = sld [smem:[#allocation2 + $0x83]]
        %3464 = vrot.lane.b32.xlu0 %v553, 20
        %v3465 = vpop.permute.xlu0 %3464
        %3466 = vrot.lane.b32.xlu0 %v554, 20
        %v3467 = vpop.permute.xlu0 %3466
        %3470 = vrot.lane.b32.xlu0 %v613, 24
        %v3471 = vpop.permute.xlu0 %3470
        %3472 = vrot.lane.b32.xlu0 %v614, 24
        %v3473 = vpop.permute.xlu0 %3472
        %3476 = vrot.lane.b32.xlu0 %v673, 28
        %v3477 = vpop.permute.xlu0 %3476
        %3478 = vrot.lane.b32.xlu0 %v674, 28
        %v3479 = vpop.permute.xlu0 %3478
        %v3482 = vsel %vm804, %v3465, %v3471
        %v3483 = vsel %vm804, %v3467, %v3473
        %v3484 = vsel %vm807, %v3482, %v3477
        %v3485 = vsel %vm807, %v3483, %v3479
        %3486 = vrot.lane.b32.xlu0 %v708, 76
        %v3487 = vpop.permute.xlu0 %3486
        %3488 = vrot.lane.b32.xlu0 %v709, 76
        %v3489 = vpop.permute.xlu0 %3488
        %3492 = vrot.lane.b32.xlu0 %v742, 80
        %v3493 = vpop.permute.xlu0 %3492
        %3494 = vrot.lane.b32.xlu0 %v743, 80
        %v3495 = vpop.permute.xlu0 %3494
        %3498 = vrot.lane.b32.xlu0 %v776, 84
        %v3499 = vpop.permute.xlu0 %3498
        %3500 = vrot.lane.b32.xlu0 %v777, 84
        %v3501 = vpop.permute.xlu0 %3500
        %v3504 = vsel %vm804, %v3487, %v3493
        %v3505 = vsel %vm804, %v3489, %v3495
        %v3506 = vsel %vm807, %v3504, %v3499
        %v3507 = vsel %vm807, %v3505, %v3501
        %3508 = vrot.lane.b32.xlu0 %v708, 72
        %v3509 = vpop.permute.xlu0 %3508
        %3510 = vrot.lane.b32.xlu0 %v709, 72
        %v3511 = vpop.permute.xlu0 %3510
        %3514 = vrot.lane.b32.xlu0 %v776, 88
        %v3515 = vpop.permute.xlu0 %3514
        %3516 = vrot.lane.b32.xlu0 %v777, 88
        %v3517 = vpop.permute.xlu0 %3516
        %v3520 = vsel %vm807, %v3509, %v3493
        %v3521 = vsel %vm807, %v3511, %v3495
        %v3522 = vsel %vm852, %v3520, %v3515
        %v3523 = vsel %vm852, %v3521, %v3517
        %v3524 = vmul.f32 %v3484, %v3484
        %v3525 = vmul.f32 %v3485, %v3485
        %v3526 = vsel %vm857, %v3524, 0.0
        %3527 = vadd.xlane.f32.xlu0 %v3526
        %v3528 = vpop.xlane.xlu0 %3527
        %v3529 = vsel %vm857, %v3525, 0.0
        %3530 = vadd.xlane.f32.xlu0 %v3529
        %v3531 = vpop.xlane.xlu0 %3530
        %v3532 = vmul.f32 %v3506, %v3506
        %v3533 = vmul.f32 %v3507, %v3507
        %v3534 = vsel %vm857, %v3532, 0.0
        %3535 = vadd.xlane.f32.xlu0 %v3534
        %v3536 = vpop.xlane.xlu0 %3535
        %v3537 = vsel %vm857, %v3533, 0.0
        %3538 = vadd.xlane.f32.xlu0 %v3537
        %v3539 = vpop.xlane.xlu0 %3538
        %v3540 = vstv %s3462
        %v3541 = vmul.f32 %v3540, %v3484
        %v3542 = vmul.f32 %v3540, %v3485
        %3543 = vrot.lane.b32.xlu0 %v872, 104
        %v3544 = vpop.permute.xlu0 %3543
        %3545 = vrot.lane.b32.xlu0 %v873, 104
        %v3546 = vpop.permute.xlu0 %3545
        %3551 = vrot.lane.b32.xlu0 %v3541, 8
        %v3552 = vpop.permute.xlu0 %3551
        %3553 = vrot.lane.b32.xlu0 %v3542, 8
        %v3554 = vpop.permute.xlu0 %3553
        %v3557 = vsel %vm807, %v3544, %v3552
        %v3558 = vsel %vm807, %v3546, %v3554
        %v3559 = vsel %vm887, %v3557, 1.0
        %v3560 = vsel %vm887, %v3558, 1.0
        %s3561 = smul.f32 %s3462, -0.5
        %v3562 = vstv %s3561
        %v3563 = vmul.f32 %v3562, %v3536
        %v3564 = vmul.f32 %v3562, %v3539
        %3565 = vrot.lane.b32.xlu0 %v447, 48
        %v3566 = vpop.permute.xlu0 %3565
        %3567 = vrot.lane.b32.xlu0 %v450, 48
        %v3568 = vpop.permute.xlu0 %3567
        %3573 = vrot.lane.b32.xlu0 %v3506, 8
        %v3574 = vpop.permute.xlu0 %3573
        %3575 = vrot.lane.b32.xlu0 %v3507, 8
        %v3576 = vpop.permute.xlu0 %3575
        %v3579 = vsel %vm807, %v3566, %v3574
        %v3580 = vsel %vm807, %v3568, %v3576
        %v3581 = vsel %vm887, %v3579, %v3563
        %v3582 = vsel %vm887, %v3580, %v3564
        %v3584 = vsel %vm914, %v3559, 0
        %v3587 = vsel %vm914, %v3560, 0
        %v3590 = vsel %vm914, %v3581, 0
        %v3593 = vsel %vm914, %v3582, 0
        %3595 = vmatpush.xpose.msra.mxu0 0.0
        %3596 = vmatpush.xpose.msra.mxu0 0.0
        %3597 = vmatpush.xpose.msra.mxu0 0.0
        %3598 = vmatpush.xpose.msra.mxu0 0.0
        %3599 = vmatpush.xpose.msra.mxu0 0.0
        %3600 = vmatpush.xpose.msra.mxu0 0.0
        %3601 = vmatpush.xpose.msra.mxu0 0.0
        %3602 = vmatpush.xpose.msra.mxu0 0.0
        %3603 = vmatpush.xpose.msra.mxu0 0.0
        %3604 = vmatpush.xpose.msra.mxu0 0.0
        %3605 = vmatpush.xpose.msra.mxu0 0.0
        %3606 = vmatpush.xpose.msra.mxu0 0.0
        %3607 = vmatpush.xpose.msra.mxu0 0.0
        %3608 = vmatpush.xpose.msra.mxu0 0.0
        %3609 = vmatpush.xpose.msra.mxu0 %v3593
        %3610 = vmatpush.xpose.msra.mxu0 %v3590
        %3611 = vmatmul.f32.gmra.mxu0 %v3584
        %v3612 = vpop.f32.mrf.mxu0
        %v3613 = vadd.f32 0.0, %v3612
        %3614 = vmatmul.f32.gmra.mxu0 %v3587
        %v3615 = vpop.f32.mrf.mxu0
        %v3616 = vadd.f32 0.0, %v3615
        %3617 = vdwg.mxu0
        %v3618 = vld [vmem:[%s6 + $0x3] sm:$0x1]
        %v3619 = vperm.slane %v3618, 0
        %v3620 = vmul.f32 %v457, %v3619
        %v3621 = vmul.f32 %v458, %v3619
        %v3622 = vmul.f32 %v459, %v3619
        %v3623 = vmul.f32 %v460, %v3619
        %v3624 = vmul.f32 %v461, %v3619
        %v3625 = vmul.f32 %v462, %v3619
        %v3626 = vmul.f32 %v463, %v3619
        %v3627 = vmul.f32 %v464, %v3619
        %v3628 = vmul.f32 %v465, %v3619
        %v3629 = vmul.f32 %v466, %v3619
        %v3630 = vmul.f32 %v467, %v3619
        %v3631 = vmul.f32 %v468, %v3619
        %v3632 = vmul.f32 %v469, %v3619
        %v3633 = vmul.f32 %v470, %v3619
        %v3634 = vmul.f32 %v471, %v3619
        %v3635 = vmul.f32 %v472, %v3619
        %v3636 = vmul.f32 %v473, %v3619
        %v3637 = vmul.f32 %v474, %v3619
        %v3638 = vmul.f32 %v475, %v3619
        %v3639 = vmul.f32 %v476, %v3619
        %v3640 = vmul.f32 %v477, %v3619
        %v3641 = vmul.f32 %v478, %v3619
        %v3642 = vmul.f32 %v479, %v3619
        %v3643 = vmul.f32 %v480, %v3619
        %v3644 = vmul.f32 %v481, %v3619
        %v3645 = vmul.f32 %v482, %v3619
        %v3646 = vmul.f32 %v483, %v3619
        %v3647 = vmul.f32 %v484, %v3619
        %v3648 = vmul.f32 %v485, %v3619
        %v3649 = vmul.f32 %v486, %v3619
        %v3650 = vmul.f32 %v487, %v3619
        %v3651 = vmul.f32 %v488, %v3619
        %v3652 = vsel %vm852, %v3620, 0.0
        %3653 = vadd.xlane.f32.xlu0 %v3652
        %v3654 = vpop.xlane.xlu0 %3653
        %v3655 = vsel %vm852, %v3621, 0.0
        %3656 = vadd.xlane.f32.xlu0 %v3655
        %v3657 = vpop.xlane.xlu0 %3656
        %v3658 = vsel %vm852, %v3622, 0.0
        %3659 = vadd.xlane.f32.xlu0 %v3658
        %v3660 = vpop.xlane.xlu0 %3659
        %v3661 = vsel %vm852, %v3623, 0.0
        %3662 = vadd.xlane.f32.xlu0 %v3661
        %v3663 = vpop.xlane.xlu0 %3662
        %v3664 = vsel %vm852, %v3624, 0.0
        %3665 = vadd.xlane.f32.xlu0 %v3664
        %v3666 = vpop.xlane.xlu0 %3665
        %v3667 = vsel %vm852, %v3625, 0.0
        %3668 = vadd.xlane.f32.xlu0 %v3667
        %v3669 = vpop.xlane.xlu0 %3668
        %v3670 = vsel %vm852, %v3626, 0.0
        %3671 = vadd.xlane.f32.xlu0 %v3670
        %v3672 = vpop.xlane.xlu0 %3671
        %v3673 = vsel %vm852, %v3627, 0.0
        %3674 = vadd.xlane.f32.xlu0 %v3673
        %v3675 = vpop.xlane.xlu0 %3674
        %v3676 = vsel %vm852, %v3628, 0.0
        %3677 = vadd.xlane.f32.xlu0 %v3676
        %v3678 = vpop.xlane.xlu0 %3677
        %v3679 = vsel %vm852, %v3629, 0.0
        %3680 = vadd.xlane.f32.xlu0 %v3679
        %v3681 = vpop.xlane.xlu0 %3680
        %v3682 = vsel %vm852, %v3630, 0.0
        %3683 = vadd.xlane.f32.xlu0 %v3682
        %v3684 = vpop.xlane.xlu0 %3683
        %v3685 = vsel %vm852, %v3631, 0.0
        %3686 = vadd.xlane.f32.xlu0 %v3685
        %v3687 = vpop.xlane.xlu0 %3686
        %v3688 = vsel %vm852, %v3632, 0.0
        %3689 = vadd.xlane.f32.xlu0 %v3688
        %v3690 = vpop.xlane.xlu0 %3689
        %v3691 = vsel %vm852, %v3633, 0.0
        %3692 = vadd.xlane.f32.xlu0 %v3691
        %v3693 = vpop.xlane.xlu0 %3692
        %v3694 = vsel %vm852, %v3634, 0.0
        %3695 = vadd.xlane.f32.xlu0 %v3694
        %v3696 = vpop.xlane.xlu0 %3695
        %v3697 = vsel %vm852, %v3635, 0.0
        %3698 = vadd.xlane.f32.xlu0 %v3697
        %v3699 = vpop.xlane.xlu0 %3698
        %v3700 = vsel %vm852, %v3636, 0.0
        %3701 = vadd.xlane.f32.xlu0 %v3700
        %v3702 = vpop.xlane.xlu0 %3701
        %v3703 = vsel %vm852, %v3637, 0.0
        %3704 = vadd.xlane.f32.xlu0 %v3703
        %v3705 = vpop.xlane.xlu0 %3704
        %v3706 = vsel %vm852, %v3638, 0.0
        %3707 = vadd.xlane.f32.xlu0 %v3706
        %v3708 = vpop.xlane.xlu0 %3707
        %v3709 = vsel %vm852, %v3639, 0.0
        %3710 = vadd.xlane.f32.xlu0 %v3709
        %v3711 = vpop.xlane.xlu0 %3710
        %v3712 = vsel %vm852, %v3640, 0.0
        %3713 = vadd.xlane.f32.xlu0 %v3712
        %v3714 = vpop.xlane.xlu0 %3713
        %v3715 = vsel %vm852, %v3641, 0.0
        %3716 = vadd.xlane.f32.xlu0 %v3715
        %v3717 = vpop.xlane.xlu0 %3716
        %v3718 = vsel %vm852, %v3642, 0.0
        %3719 = vadd.xlane.f32.xlu0 %v3718
        %v3720 = vpop.xlane.xlu0 %3719
        %v3721 = vsel %vm852, %v3643, 0.0
        %3722 = vadd.xlane.f32.xlu0 %v3721
        %v3723 = vpop.xlane.xlu0 %3722
        %v3724 = vsel %vm852, %v3644, 0.0
        %3725 = vadd.xlane.f32.xlu0 %v3724
        %v3726 = vpop.xlane.xlu0 %3725
        %v3727 = vsel %vm852, %v3645, 0.0
        %3728 = vadd.xlane.f32.xlu0 %v3727
        %v3729 = vpop.xlane.xlu0 %3728
        %v3730 = vsel %vm852, %v3646, 0.0
        %3731 = vadd.xlane.f32.xlu0 %v3730
        %v3732 = vpop.xlane.xlu0 %3731
        %v3733 = vsel %vm852, %v3647, 0.0
        %3734 = vadd.xlane.f32.xlu0 %v3733
        %v3735 = vpop.xlane.xlu0 %3734
        %v3736 = vsel %vm852, %v3648, 0.0
        %3737 = vadd.xlane.f32.xlu0 %v3736
        %v3738 = vpop.xlane.xlu0 %3737
        %v3739 = vsel %vm852, %v3649, 0.0
        %3740 = vadd.xlane.f32.xlu0 %v3739
        %v3741 = vpop.xlane.xlu0 %3740
        %v3742 = vsel %vm852, %v3650, 0.0
        %3743 = vadd.xlane.f32.xlu0 %v3742
        %v3744 = vpop.xlane.xlu0 %3743
        %v3745 = vsel %vm852, %v3651, 0.0
        %3746 = vadd.xlane.f32.xlu0 %v3745
        %v3747 = vpop.xlane.xlu0 %3746
        %s3748 = smul.f32 %s3462, 0.5
        %v3749 = vstv %s3748
        %v3750 = vmul.f32 %v3749, %v3528
        %v3751 = vmul.f32 %v3749, %v3531
        %v3752 = vsub.f32 %v3613, %v3750
        %v3753 = vsub.f32 %v3616, %v3751
        %v3786 = vperm.slane %v3654, %v1119
        %v3787 = vperm.slane %v3657, %v1121
        %v3788 = vsel %vm1123, %v3787, %v3786
        %v3789 = vperm.slane %v3660, %v1119
        %v3790 = vperm.slane %v3663, %v1121
        %v3791 = vsel %vm1123, %v3790, %v3789
        %v3792 = vperm.slane %v3666, %v1119
        %v3793 = vperm.slane %v3669, %v1121
        %v3794 = vsel %vm1123, %v3793, %v3792
        %v3795 = vperm.slane %v3672, %v1119
        %v3796 = vperm.slane %v3675, %v1121
        %v3797 = vsel %vm1123, %v3796, %v3795
        %v3798 = vperm.slane %v3678, %v1119
        %v3799 = vperm.slane %v3681, %v1121
        %v3800 = vsel %vm1123, %v3799, %v3798
        %v3801 = vperm.slane %v3684, %v1119
        %v3802 = vperm.slane %v3687, %v1121
        %v3803 = vsel %vm1123, %v3802, %v3801
        %v3804 = vperm.slane %v3690, %v1119
        %v3805 = vperm.slane %v3693, %v1121
        %v3806 = vsel %vm1123, %v3805, %v3804
        %v3807 = vperm.slane %v3696, %v1119
        %v3808 = vperm.slane %v3699, %v1121
        %v3809 = vsel %vm1123, %v3808, %v3807
        %v3810 = vperm.slane %v3702, %v1119
        %v3811 = vperm.slane %v3705, %v1121
        %v3812 = vsel %vm1123, %v3811, %v3810
        %v3813 = vperm.slane %v3708, %v1119
        %v3814 = vperm.slane %v3711, %v1121
        %v3815 = vsel %vm1123, %v3814, %v3813
        %v3816 = vperm.slane %v3714, %v1119
        %v3817 = vperm.slane %v3717, %v1121
        %v3818 = vsel %vm1123, %v3817, %v3816
        %v3819 = vperm.slane %v3720, %v1119
        %v3820 = vperm.slane %v3723, %v1121
        %v3821 = vsel %vm1123, %v3820, %v3819
        %v3822 = vperm.slane %v3726, %v1119
        %v3823 = vperm.slane %v3729, %v1121
        %v3824 = vsel %vm1123, %v3823, %v3822
        %v3825 = vperm.slane %v3732, %v1119
        %v3826 = vperm.slane %v3735, %v1121
        %v3827 = vsel %vm1123, %v3826, %v3825
        %v3828 = vperm.slane %v3738, %v1119
        %v3829 = vperm.slane %v3741, %v1121
        %v3830 = vsel %vm1123, %v3829, %v3828
        %v3831 = vperm.slane %v3744, %v1119
        %v3832 = vperm.slane %v3747, %v1121
        %v3833 = vsel %vm1123, %v3832, %v3831
        %v3834 = vsel %vm1170, %v3791, %v3788
        %v3835 = vsel %vm1172, %v3794, %v3834
        %v3836 = vsel %vm1174, %v3797, %v3835
        %v3837 = vsel %vm1176, %v3800, %v3836
        %v3838 = vsel %vm1178, %v3803, %v3837
        %v3839 = vsel %vm1180, %v3806, %v3838
        %v3840 = vsel %vm1182, %v3809, %v3839
        %v3841 = vsel %vm1170, %v3815, %v3812
        %v3842 = vsel %vm1172, %v3818, %v3841
        %v3843 = vsel %vm1174, %v3821, %v3842
        %v3844 = vsel %vm1176, %v3824, %v3843
        %v3845 = vsel %vm1178, %v3827, %v3844
        %v3846 = vsel %vm1180, %v3830, %v3845
        %v3847 = vsel %vm1182, %v3833, %v3846
        %v3850 = vadd.f32 %v3752, %v3840
        %v3851 = vadd.f32 %v3753, %v3847
        %v3852 = vstv %s3463
        %v3853 = vadd.f32 %v3850, %v3852
        %v3854 = vadd.f32 %v3851, %v3852
        %v3855 = vadd.f32 %v3853, %v489
        %v3856 = vadd.f32 %v3854, %v490
        %v3857 = vsel %vm852, %v3855, -inf
        %3858 = vmax.xlane.f32.xlu0 %v3857
        %v3859 = vpop.xlane.xlu0 %3858
        %v3860 = vsel %vm852, %v3856, -inf
        %3861 = vmax.xlane.f32.xlu0 %v3860
        %v3862 = vpop.xlane.xlu0 %3861
        %v3863 = vsub.f32 %v3855, %v3859
        %v3864 = vsub.f32 %v3856, %v3862
        %v3865 = vmul.f32 %v3863, 1.442695
        %v3866 = vpow.pop %v3865
        %v3867 = vmul.f32 %v3864, 1.442695
        %v3868 = vpow.pop %v3867
        %v3869 = vsel %vm852, %v3866, 0.0
        %3870 = vadd.xlane.f32.xlu0 %v3869
        %v3871 = vpop.xlane.xlu0 %3870
        %v3872 = vsel %vm852, %v3868, 0.0
        %3873 = vadd.xlane.f32.xlu0 %v3872
        %v3874 = vpop.xlane.xlu0 %3873
        %v3875 = vrcp.pop %v3871
        %v3876 = vmul.f32 %v3871, %v3875
        %v3877 = vsub.f32 1.0, %v3876
        %v3878 = vmul.f32 %v3875, %v3877
        %v3879 = vadd.f32 %v3875, %v3878
        %vm3880 = vweird.f32 %v3871
        %vm3881 = vweird.f32 %v3875
        %vm3882 = vmor %vm3880, %vm3881
        %v3883 = vsel %vm3882, %v3875, %v3879
        %v3884 = vand.u32 2147483647, %v3871
        %vm3885 = vcmp.eq.f32.partialorder %v3884, 8.507059e+37
        %v3886 = vand.u32 %v3871, 2147483648
        %v3887 = vor.u32 1.1754944e-38, %v3886
        %v3888 = vsel %vm3885, %v3887, %v3883
        %v3889 = vmul.f32 %v3866, %v3888
        %v3890 = vrcp.pop %v3874
        %v3891 = vmul.f32 %v3874, %v3890
        %v3892 = vsub.f32 1.0, %v3891
        %v3893 = vmul.f32 %v3890, %v3892
        %v3894 = vadd.f32 %v3890, %v3893
        %vm3895 = vweird.f32 %v3874
        %vm3896 = vweird.f32 %v3890
        %vm3897 = vmor %vm3895, %vm3896
        %v3898 = vsel %vm3897, %v3890, %v3894
        %v3899 = vand.u32 2147483647, %v3874
        %vm3900 = vcmp.eq.f32.partialorder %v3899, 8.507059e+37
        %v3901 = vand.u32 %v3874, 2147483648
        %v3902 = vor.u32 1.1754944e-38, %v3901
        %v3903 = vsel %vm3900, %v3902, %v3898
        %v3904 = vmul.f32 %v3868, %v3903
        %3905 = vrot.lane.b32.xlu0 %v447, 40
        %v3906 = vpop.permute.xlu0 %3905
        %3907 = vrot.lane.b32.xlu0 %v450, 40
        %v3908 = vpop.permute.xlu0 %3907
        %v3912 = vsel %vm852, %v3889, 0
        %v3915 = vsel %vm852, %v3904, 0
        %3917 = vmatpush.msra.mxu0 0.0
        %3918 = vmatpush.msra.mxu0 0.0
        %3919 = vmatpush.msra.mxu0 0.0
        %3920 = vmatpush.msra.mxu0 0.0
        %3921 = vmatpush.msra.mxu0 0.0
        %3922 = vmatpush.msra.mxu0 0.0
        %3923 = vmatpush.msra.mxu0 0.0
        %3924 = vmatpush.msra.mxu0 0.0
        %3925 = vmatpush.msra.mxu0 0.0
        %3926 = vmatpush.msra.mxu0 0.0
        %3927 = vmatpush.msra.mxu0 0.0
        %3928 = vmatpush.msra.mxu0 0.0
        %3929 = vmatpush.msra.mxu0 0.0
        %3930 = vmatpush.msra.mxu0 0.0
        %3931 = vmatpush.msra.mxu0 %v3908
        %3932 = vmatpush.msra.mxu0 %v3906
        %3933 = vmatmul.f32.gmra.mxu0 %v3912
        %v3934 = vpop.f32.mrf.mxu0
        %v3935 = vadd.f32 0.0, %v3934
        %3936 = vmatmul.f32.gmra.mxu0 %v3915
        %v3937 = vpop.f32.mrf.mxu0
        %v3938 = vadd.f32 0.0, %v3937
        %3939 = vdwg.mxu0
        %3940 = vmatpush.msra.mxu0 0.0
        %3941 = vmatpush.msra.mxu0 0.0
        %3942 = vmatpush.msra.mxu0 0.0
        %3943 = vmatpush.msra.mxu0 0.0
        %3944 = vmatpush.msra.mxu0 0.0
        %3945 = vmatpush.msra.mxu0 0.0
        %3946 = vmatpush.msra.mxu0 0.0
        %3947 = vmatpush.msra.mxu0 0.0
        %3948 = vmatpush.msra.mxu0 0.0
        %3949 = vmatpush.msra.mxu0 0.0
        %3950 = vmatpush.msra.mxu0 0.0
        %3951 = vmatpush.msra.mxu0 0.0
        %3952 = vmatpush.msra.mxu0 0.0
        %3953 = vmatpush.msra.mxu0 0.0
        %3954 = vmatpush.msra.mxu0 %v3523
        %3955 = vmatpush.msra.mxu0 %v3522
        %3956 = vmatmul.f32.gmra.mxu0 %v3912
        %v3957 = vpop.f32.mrf.mxu0
        %v3958 = vadd.f32 0.0, %v3957
        %3959 = vmatmul.f32.gmra.mxu0 %v3915
        %v3960 = vpop.f32.mrf.mxu0
        %v3961 = vadd.f32 0.0, %v3960
        %3962 = vdwg.mxu0
        %v3963 = vperm.slane %v3889, 0
        %v3964 = vlaneseq
        %v3965 = vshrl.u32 %v3964, 7
        %3967 = vset.pattern.permute.xlu0 %v3965
        %3968 = vperm.xlu0 %3967, %v3963
        %v3969 = vpop.permute.xlu0 %3968
        %v3970 = vlaneseq
        %v3971 = vshrl.u32 %v3970, 7
        %v3972 = vadd.s32 %v3971, 8
        %3973 = vset.pattern.permute.xlu0 %v3972
        %3974 = vperm.xlu0 %3973, %v3963
        %v3975 = vpop.permute.xlu0 %3974
        %v3976 = vperm.slane %v3889, 1
        %v3977 = vlaneseq
        %v3978 = vshrl.u32 %v3977, 7
        %3980 = vset.pattern.permute.xlu0 %v3978
        %3981 = vperm.xlu0 %3980, %v3976
        %v3982 = vpop.permute.xlu0 %3981
        %v3983 = vlaneseq
        %v3984 = vshrl.u32 %v3983, 7
        %v3985 = vadd.s32 %v3984, 8
        %3986 = vset.pattern.permute.xlu0 %v3985
        %3987 = vperm.xlu0 %3986, %v3976
        %v3988 = vpop.permute.xlu0 %3987
        %v3989 = vperm.slane %v3889, 2
        %v3990 = vlaneseq
        %v3991 = vshrl.u32 %v3990, 7
        %3993 = vset.pattern.permute.xlu0 %v3991
        %3994 = vperm.xlu0 %3993, %v3989
        %v3995 = vpop.permute.xlu0 %3994
        %v3996 = vlaneseq
        %v3997 = vshrl.u32 %v3996, 7
        %v3998 = vadd.s32 %v3997, 8
        %3999 = vset.pattern.permute.xlu0 %v3998
        %4000 = vperm.xlu0 %3999, %v3989
        %v4001 = vpop.permute.xlu0 %4000
        %v4002 = vperm.slane %v3889, 3
        %v4003 = vlaneseq
        %v4004 = vshrl.u32 %v4003, 7
        %4006 = vset.pattern.permute.xlu0 %v4004
        %4007 = vperm.xlu0 %4006, %v4002
        %v4008 = vpop.permute.xlu0 %4007
        %v4009 = vlaneseq
        %v4010 = vshrl.u32 %v4009, 7
        %v4011 = vadd.s32 %v4010, 8
        %4012 = vset.pattern.permute.xlu0 %v4011
        %4013 = vperm.xlu0 %4012, %v4002
        %v4014 = vpop.permute.xlu0 %4013
        %v4015 = vperm.slane %v3889, 4
        %v4016 = vlaneseq
        %v4017 = vshrl.u32 %v4016, 7
        %4019 = vset.pattern.permute.xlu0 %v4017
        %4020 = vperm.xlu0 %4019, %v4015
        %v4021 = vpop.permute.xlu0 %4020
        %v4022 = vlaneseq
        %v4023 = vshrl.u32 %v4022, 7
        %v4024 = vadd.s32 %v4023, 8
        %4025 = vset.pattern.permute.xlu0 %v4024
        %4026 = vperm.xlu0 %4025, %v4015
        %v4027 = vpop.permute.xlu0 %4026
        %v4028 = vperm.slane %v3889, 5
        %v4029 = vlaneseq
        %v4030 = vshrl.u32 %v4029, 7
        %4032 = vset.pattern.permute.xlu0 %v4030
        %4033 = vperm.xlu0 %4032, %v4028
        %v4034 = vpop.permute.xlu0 %4033
        %v4035 = vlaneseq
        %v4036 = vshrl.u32 %v4035, 7
        %v4037 = vadd.s32 %v4036, 8
        %4038 = vset.pattern.permute.xlu0 %v4037
        %4039 = vperm.xlu0 %4038, %v4028
        %v4040 = vpop.permute.xlu0 %4039
        %v4041 = vperm.slane %v3889, 6
        %v4042 = vlaneseq
        %v4043 = vshrl.u32 %v4042, 7
        %4045 = vset.pattern.permute.xlu0 %v4043
        %4046 = vperm.xlu0 %4045, %v4041
        %v4047 = vpop.permute.xlu0 %4046
        %v4048 = vlaneseq
        %v4049 = vshrl.u32 %v4048, 7
        %v4050 = vadd.s32 %v4049, 8
        %4051 = vset.pattern.permute.xlu0 %v4050
        %4052 = vperm.xlu0 %4051, %v4041
        %v4053 = vpop.permute.xlu0 %4052
        %v4054 = vperm.slane %v3889, 7
        %v4055 = vlaneseq
        %v4056 = vshrl.u32 %v4055, 7
        %4058 = vset.pattern.permute.xlu0 %v4056
        %4059 = vperm.xlu0 %4058, %v4054
        %v4060 = vpop.permute.xlu0 %4059
        %v4061 = vlaneseq
        %v4062 = vshrl.u32 %v4061, 7
        %v4063 = vadd.s32 %v4062, 8
        %4064 = vset.pattern.permute.xlu0 %v4063
        %4065 = vperm.xlu0 %4064, %v4054
        %v4066 = vpop.permute.xlu0 %4065
        %v4067 = vperm.slane %v3904, 0
        %v4068 = vlaneseq
        %v4069 = vshrl.u32 %v4068, 7
        %4071 = vset.pattern.permute.xlu0 %v4069
        %4072 = vperm.xlu0 %4071, %v4067
        %v4073 = vpop.permute.xlu0 %4072
        %v4074 = vlaneseq
        %v4075 = vshrl.u32 %v4074, 7
        %v4076 = vadd.s32 %v4075, 8
        %4077 = vset.pattern.permute.xlu0 %v4076
        %4078 = vperm.xlu0 %4077, %v4067
        %v4079 = vpop.permute.xlu0 %4078
        %v4080 = vperm.slane %v3904, 1
        %v4081 = vlaneseq
        %v4082 = vshrl.u32 %v4081, 7
        %4084 = vset.pattern.permute.xlu0 %v4082
        %4085 = vperm.xlu0 %4084, %v4080
        %v4086 = vpop.permute.xlu0 %4085
        %v4087 = vlaneseq
        %v4088 = vshrl.u32 %v4087, 7
        %v4089 = vadd.s32 %v4088, 8
        %4090 = vset.pattern.permute.xlu0 %v4089
        %4091 = vperm.xlu0 %4090, %v4080
        %v4092 = vpop.permute.xlu0 %4091
        %v4093 = vperm.slane %v3904, 2
        %v4094 = vlaneseq
        %v4095 = vshrl.u32 %v4094, 7
        %4097 = vset.pattern.permute.xlu0 %v4095
        %4098 = vperm.xlu0 %4097, %v4093
        %v4099 = vpop.permute.xlu0 %4098
        %v4100 = vlaneseq
        %v4101 = vshrl.u32 %v4100, 7
        %v4102 = vadd.s32 %v4101, 8
        %4103 = vset.pattern.permute.xlu0 %v4102
        %4104 = vperm.xlu0 %4103, %v4093
        %v4105 = vpop.permute.xlu0 %4104
        %v4106 = vperm.slane %v3904, 3
        %v4107 = vlaneseq
        %v4108 = vshrl.u32 %v4107, 7
        %4110 = vset.pattern.permute.xlu0 %v4108
        %4111 = vperm.xlu0 %4110, %v4106
        %v4112 = vpop.permute.xlu0 %4111
        %v4113 = vlaneseq
        %v4114 = vshrl.u32 %v4113, 7
        %v4115 = vadd.s32 %v4114, 8
        %4116 = vset.pattern.permute.xlu0 %v4115
        %4117 = vperm.xlu0 %4116, %v4106
        %v4118 = vpop.permute.xlu0 %4117
        %v4119 = vperm.slane %v3904, 4
        %v4120 = vlaneseq
        %v4121 = vshrl.u32 %v4120, 7
        %4123 = vset.pattern.permute.xlu0 %v4121
        %4124 = vperm.xlu0 %4123, %v4119
        %v4125 = vpop.permute.xlu0 %4124
        %v4126 = vlaneseq
        %v4127 = vshrl.u32 %v4126, 7
        %v4128 = vadd.s32 %v4127, 8
        %4129 = vset.pattern.permute.xlu0 %v4128
        %4130 = vperm.xlu0 %4129, %v4119
        %v4131 = vpop.permute.xlu0 %4130
        %v4132 = vperm.slane %v3904, 5
        %v4133 = vlaneseq
        %v4134 = vshrl.u32 %v4133, 7
        %4136 = vset.pattern.permute.xlu0 %v4134
        %4137 = vperm.xlu0 %4136, %v4132
        %v4138 = vpop.permute.xlu0 %4137
        %v4139 = vlaneseq
        %v4140 = vshrl.u32 %v4139, 7
        %v4141 = vadd.s32 %v4140, 8
        %4142 = vset.pattern.permute.xlu0 %v4141
        %4143 = vperm.xlu0 %4142, %v4132
        %v4144 = vpop.permute.xlu0 %4143
        %v4145 = vperm.slane %v3904, 6
        %v4146 = vlaneseq
        %v4147 = vshrl.u32 %v4146, 7
        %4149 = vset.pattern.permute.xlu0 %v4147
        %4150 = vperm.xlu0 %4149, %v4145
        %v4151 = vpop.permute.xlu0 %4150
        %v4152 = vlaneseq
        %v4153 = vshrl.u32 %v4152, 7
        %v4154 = vadd.s32 %v4153, 8
        %4155 = vset.pattern.permute.xlu0 %v4154
        %4156 = vperm.xlu0 %4155, %v4145
        %v4157 = vpop.permute.xlu0 %4156
        %v4158 = vperm.slane %v3904, 7
        %v4159 = vlaneseq
        %v4160 = vshrl.u32 %v4159, 7
        %4162 = vset.pattern.permute.xlu0 %v4160
        %4163 = vperm.xlu0 %4162, %v4158
        %v4164 = vpop.permute.xlu0 %4163
        %v4165 = vlaneseq
        %v4166 = vshrl.u32 %v4165, 7
        %v4167 = vadd.s32 %v4166, 8
        %4168 = vset.pattern.permute.xlu0 %v4167
        %4169 = vperm.xlu0 %4168, %v4158
        %v4170 = vpop.permute.xlu0 %4169
        %v4171 = vmul.f32 %v3969, %v457
        %v4172 = vmul.f32 %v3975, %v458
        %v4173 = vmul.f32 %v3982, %v459
        %v4174 = vmul.f32 %v3988, %v460
        %v4175 = vmul.f32 %v3995, %v461
        %v4176 = vmul.f32 %v4001, %v462
        %v4177 = vmul.f32 %v4008, %v463
        %v4178 = vmul.f32 %v4014, %v464
        %v4179 = vmul.f32 %v4021, %v465
        %v4180 = vmul.f32 %v4027, %v466
        %v4181 = vmul.f32 %v4034, %v467
        %v4182 = vmul.f32 %v4040, %v468
        %v4183 = vmul.f32 %v4047, %v469
        %v4184 = vmul.f32 %v4053, %v470
        %v4185 = vmul.f32 %v4060, %v471
        %v4186 = vmul.f32 %v4066, %v472
        %v4187 = vmul.f32 %v4073, %v473
        %v4188 = vmul.f32 %v4079, %v474
        %v4189 = vmul.f32 %v4086, %v475
        %v4190 = vmul.f32 %v4092, %v476
        %v4191 = vmul.f32 %v4099, %v477
        %v4192 = vmul.f32 %v4105, %v478
        %v4193 = vmul.f32 %v4112, %v479
        %v4194 = vmul.f32 %v4118, %v480
        %v4195 = vmul.f32 %v4125, %v481
        %v4196 = vmul.f32 %v4131, %v482
        %v4197 = vmul.f32 %v4138, %v483
        %v4198 = vmul.f32 %v4144, %v484
        %v4199 = vmul.f32 %v4151, %v485
        %v4200 = vmul.f32 %v4157, %v486
        %v4201 = vmul.f32 %v4164, %v487
        %v4202 = vmul.f32 %v4170, %v488
        %v4203 = vsel %vm852, %v4171, 0.0
        %v4204 = vsel %vm852, %v4172, 0.0
        %v4205 = vadd.f32 %v4203, %v4204
        %v4206 = vrot.slane %v4205, 4
        %v4207 = vadd.f32 %v4205, %v4206
        %v4208 = vrot.slane %v4207, 2
        %v4209 = vadd.f32 %v4207, %v4208
        %v4210 = vrot.slane %v4209, 1
        %v4211 = vadd.f32 %v4209, %v4210
        %v4212 = vsel %vm852, %v4173, 0.0
        %v4213 = vsel %vm852, %v4174, 0.0
        %v4214 = vadd.f32 %v4212, %v4213
        %v4215 = vrot.slane %v4214, 4
        %v4216 = vadd.f32 %v4214, %v4215
        %v4217 = vrot.slane %v4216, 2
        %v4218 = vadd.f32 %v4216, %v4217
        %v4219 = vrot.slane %v4218, 1
        %v4220 = vadd.f32 %v4218, %v4219
        %v4221 = vsel %vm852, %v4175, 0.0
        %v4222 = vsel %vm852, %v4176, 0.0
        %v4223 = vadd.f32 %v4221, %v4222
        %v4224 = vrot.slane %v4223, 4
        %v4225 = vadd.f32 %v4223, %v4224
        %v4226 = vrot.slane %v4225, 2
        %v4227 = vadd.f32 %v4225, %v4226
        %v4228 = vrot.slane %v4227, 1
        %v4229 = vadd.f32 %v4227, %v4228
        %v4230 = vsel %vm852, %v4177, 0.0
        %v4231 = vsel %vm852, %v4178, 0.0
        %v4232 = vadd.f32 %v4230, %v4231
        %v4233 = vrot.slane %v4232, 4
        %v4234 = vadd.f32 %v4232, %v4233
        %v4235 = vrot.slane %v4234, 2
        %v4236 = vadd.f32 %v4234, %v4235
        %v4237 = vrot.slane %v4236, 1
        %v4238 = vadd.f32 %v4236, %v4237
        %v4239 = vsel %vm852, %v4179, 0.0
        %v4240 = vsel %vm852, %v4180, 0.0
        %v4241 = vadd.f32 %v4239, %v4240
        %v4242 = vrot.slane %v4241, 4
        %v4243 = vadd.f32 %v4241, %v4242
        %v4244 = vrot.slane %v4243, 2
        %v4245 = vadd.f32 %v4243, %v4244
        %v4246 = vrot.slane %v4245, 1
        %v4247 = vadd.f32 %v4245, %v4246
        %v4248 = vsel %vm852, %v4181, 0.0
        %v4249 = vsel %vm852, %v4182, 0.0
        %v4250 = vadd.f32 %v4248, %v4249
        %v4251 = vrot.slane %v4250, 4
        %v4252 = vadd.f32 %v4250, %v4251
        %v4253 = vrot.slane %v4252, 2
        %v4254 = vadd.f32 %v4252, %v4253
        %v4255 = vrot.slane %v4254, 1
        %v4256 = vadd.f32 %v4254, %v4255
        %v4257 = vsel %vm852, %v4183, 0.0
        %v4258 = vsel %vm852, %v4184, 0.0
        %v4259 = vadd.f32 %v4257, %v4258
        %v4260 = vrot.slane %v4259, 4
        %v4261 = vadd.f32 %v4259, %v4260
        %v4262 = vrot.slane %v4261, 2
        %v4263 = vadd.f32 %v4261, %v4262
        %v4264 = vrot.slane %v4263, 1
        %v4265 = vadd.f32 %v4263, %v4264
        %v4266 = vsel %vm852, %v4185, 0.0
        %v4267 = vsel %vm852, %v4186, 0.0
        %v4268 = vadd.f32 %v4266, %v4267
        %v4269 = vrot.slane %v4268, 4
        %v4270 = vadd.f32 %v4268, %v4269
        %v4271 = vrot.slane %v4270, 2
        %v4272 = vadd.f32 %v4270, %v4271
        %v4273 = vrot.slane %v4272, 1
        %v4274 = vadd.f32 %v4272, %v4273
        %v4275 = vsel %vm852, %v4187, 0.0
        %v4276 = vsel %vm852, %v4188, 0.0
        %v4277 = vadd.f32 %v4275, %v4276
        %v4278 = vrot.slane %v4277, 4
        %v4279 = vadd.f32 %v4277, %v4278
        %v4280 = vrot.slane %v4279, 2
        %v4281 = vadd.f32 %v4279, %v4280
        %v4282 = vrot.slane %v4281, 1
        %v4283 = vadd.f32 %v4281, %v4282
        %v4284 = vsel %vm852, %v4189, 0.0
        %v4285 = vsel %vm852, %v4190, 0.0
        %v4286 = vadd.f32 %v4284, %v4285
        %v4287 = vrot.slane %v4286, 4
        %v4288 = vadd.f32 %v4286, %v4287
        %v4289 = vrot.slane %v4288, 2
        %v4290 = vadd.f32 %v4288, %v4289
        %v4291 = vrot.slane %v4290, 1
        %v4292 = vadd.f32 %v4290, %v4291
        %v4293 = vsel %vm852, %v4191, 0.0
        %v4294 = vsel %vm852, %v4192, 0.0
        %v4295 = vadd.f32 %v4293, %v4294
        %v4296 = vrot.slane %v4295, 4
        %v4297 = vadd.f32 %v4295, %v4296
        %v4298 = vrot.slane %v4297, 2
        %v4299 = vadd.f32 %v4297, %v4298
        %v4300 = vrot.slane %v4299, 1
        %v4301 = vadd.f32 %v4299, %v4300
        %v4302 = vsel %vm852, %v4193, 0.0
        %v4303 = vsel %vm852, %v4194, 0.0
        %v4304 = vadd.f32 %v4302, %v4303
        %v4305 = vrot.slane %v4304, 4
        %v4306 = vadd.f32 %v4304, %v4305
        %v4307 = vrot.slane %v4306, 2
        %v4308 = vadd.f32 %v4306, %v4307
        %v4309 = vrot.slane %v4308, 1
        %v4310 = vadd.f32 %v4308, %v4309
        %v4311 = vsel %vm852, %v4195, 0.0
        %v4312 = vsel %vm852, %v4196, 0.0
        %v4313 = vadd.f32 %v4311, %v4312
        %v4314 = vrot.slane %v4313, 4
        %v4315 = vadd.f32 %v4313, %v4314
        %v4316 = vrot.slane %v4315, 2
        %v4317 = vadd.f32 %v4315, %v4316
        %v4318 = vrot.slane %v4317, 1
        %v4319 = vadd.f32 %v4317, %v4318
        %v4320 = vsel %vm852, %v4197, 0.0
        %v4321 = vsel %vm852, %v4198, 0.0
        %v4322 = vadd.f32 %v4320, %v4321
        %v4323 = vrot.slane %v4322, 4
        %v4324 = vadd.f32 %v4322, %v4323
        %v4325 = vrot.slane %v4324, 2
        %v4326 = vadd.f32 %v4324, %v4325
        %v4327 = vrot.slane %v4326, 1
        %v4328 = vadd.f32 %v4326, %v4327
        %v4329 = vsel %vm852, %v4199, 0.0
        %v4330 = vsel %vm852, %v4200, 0.0
        %v4331 = vadd.f32 %v4329, %v4330
        %v4332 = vrot.slane %v4331, 4
        %v4333 = vadd.f32 %v4331, %v4332
        %v4334 = vrot.slane %v4333, 2
        %v4335 = vadd.f32 %v4333, %v4334
        %v4336 = vrot.slane %v4335, 1
        %v4337 = vadd.f32 %v4335, %v4336
        %v4338 = vsel %vm852, %v4201, 0.0
        %v4339 = vsel %vm852, %v4202, 0.0
        %v4340 = vadd.f32 %v4338, %v4339
        %v4341 = vrot.slane %v4340, 4
        %v4342 = vadd.f32 %v4340, %v4341
        %v4343 = vrot.slane %v4342, 2
        %v4344 = vadd.f32 %v4342, %v4343
        %v4345 = vrot.slane %v4344, 1
        %v4346 = vadd.f32 %v4344, %v4345
        %4349 = vrot.lane.b32.xlu0 %v2165, 8
        %v4350 = vpop.permute.xlu0 %4349
        %4351 = vrot.lane.b32.xlu0 %v2168, 8
        %v4352 = vpop.permute.xlu0 %4351
        %4357 = vrot.lane.b32.xlu0 %v3050, 16
        %v4358 = vpop.permute.xlu0 %4357
        %4359 = vrot.lane.b32.xlu0 %v3053, 16
        %v4360 = vpop.permute.xlu0 %4359
        %4365 = vrot.lane.b32.xlu0 %v3935, 24
        %v4366 = vpop.permute.xlu0 %4365
        %4367 = vrot.lane.b32.xlu0 %v3938, 24
        %v4368 = vpop.permute.xlu0 %4367
        %v4371 = vsel %vm807, %v1278, %v4350
        %v4372 = vsel %vm807, %v1281, %v4352
        %v4373 = vsel %vm852, %v4371, %v4358
        %v4374 = vsel %vm852, %v4372, %v4360
        %vm4375 = vcmask 195584
        %v4376 = vsel %vm4375, %v4373, %v4366
        %v4377 = vsel %vm4375, %v4374, %v4368
        %4380 = vrot.lane.b32.xlu0 %v2188, 8
        %v4381 = vpop.permute.xlu0 %4380
        %4382 = vrot.lane.b32.xlu0 %v2191, 8
        %v4383 = vpop.permute.xlu0 %4382
        %4388 = vrot.lane.b32.xlu0 %v3073, 16
        %v4389 = vpop.permute.xlu0 %4388
        %4390 = vrot.lane.b32.xlu0 %v3076, 16
        %v4391 = vpop.permute.xlu0 %4390
        %4396 = vrot.lane.b32.xlu0 %v3958, 24
        %v4397 = vpop.permute.xlu0 %4396
        %4398 = vrot.lane.b32.xlu0 %v3961, 24
        %v4399 = vpop.permute.xlu0 %4398
        %v4402 = vsel %vm807, %v1301, %v4381
        %v4403 = vsel %vm807, %v1304, %v4383
        %v4404 = vsel %vm852, %v4402, %v4389
        %v4405 = vsel %vm852, %v4403, %v4391
        %v4406 = vsel %vm4375, %v4404, %v4397
        %v4407 = vsel %vm4375, %v4405, %v4399
        %4410 = vrot.lane.b32.xlu0 %v1301, 120
        %v4411 = vpop.permute.xlu0 %4410
        %4412 = vrot.lane.b32.xlu0 %v1304, 120
        %v4413 = vpop.permute.xlu0 %4412
        %4416 = vrot.lane.b32.xlu0 %v3073, 8
        %v4417 = vpop.permute.xlu0 %4416
        %4418 = vrot.lane.b32.xlu0 %v3076, 8
        %v4419 = vpop.permute.xlu0 %4418
        %4422 = vrot.lane.b32.xlu0 %v3958, 16
        %v4423 = vpop.permute.xlu0 %4422
        %4424 = vrot.lane.b32.xlu0 %v3961, 16
        %v4425 = vpop.permute.xlu0 %4424
        %v4428 = vsel %vm807, %v4411, %v2188
        %v4429 = vsel %vm807, %v4413, %v2191
        %v4430 = vsel %vm852, %v4428, %v4417
        %v4431 = vsel %vm852, %v4429, %v4419
        %v4432 = vsel %vm4375, %v4430, %v4423
        %v4433 = vsel %vm4375, %v4431, %v4425
        %4434 = vrot.lane.b32.xlu0 %v1301, 112
        %v4435 = vpop.permute.xlu0 %4434
        %4436 = vrot.lane.b32.xlu0 %v1304, 112
        %v4437 = vpop.permute.xlu0 %4436
        %4440 = vrot.lane.b32.xlu0 %v2188, 120
        %v4441 = vpop.permute.xlu0 %4440
        %4442 = vrot.lane.b32.xlu0 %v2191, 120
        %v4443 = vpop.permute.xlu0 %4442
        %4446 = vrot.lane.b32.xlu0 %v3958, 8
        %v4447 = vpop.permute.xlu0 %4446
        %4448 = vrot.lane.b32.xlu0 %v3961, 8
        %v4449 = vpop.permute.xlu0 %4448
        %v4452 = vsel %vm807, %v4435, %v4441
        %v4453 = vsel %vm807, %v4437, %v4443
        %v4454 = vsel %vm852, %v4452, %v3073
        %v4455 = vsel %vm852, %v4453, %v3076
        %v4456 = vsel %vm4375, %v4454, %v4447
        %v4457 = vsel %vm4375, %v4455, %v4449
        %v4474 = vsel %vm1170, %v1563, %v1554
        %v4475 = vsel %vm1172, %v1572, %v4474
        %v4476 = vsel %vm1174, %v1581, %v4475
        %v4477 = vsel %vm1176, %v1590, %v4476
        %v4478 = vsel %vm1178, %v1599, %v4477
        %v4479 = vsel %vm1180, %v1608, %v4478
        %v4480 = vsel %vm1182, %v1617, %v4479
        %v4481 = vsel %vm1170, %v1635, %v1626
        %v4482 = vsel %vm1172, %v1644, %v4481
        %v4483 = vsel %vm1174, %v1653, %v4482
        %v4484 = vsel %vm1176, %v1662, %v4483
        %v4485 = vsel %vm1178, %v1671, %v4484
        %v4486 = vsel %vm1180, %v1680, %v4485
        %v4487 = vsel %vm1182, %v1689, %v4486
        %v4506 = vsel %vm1170, %v2450, %v2441
        %v4507 = vsel %vm1172, %v2459, %v4506
        %v4508 = vsel %vm1174, %v2468, %v4507
        %v4509 = vsel %vm1176, %v2477, %v4508
        %v4510 = vsel %vm1178, %v2486, %v4509
        %v4511 = vsel %vm1180, %v2495, %v4510
        %v4512 = vsel %vm1182, %v2504, %v4511
        %v4513 = vsel %vm1170, %v2522, %v2513
        %v4514 = vsel %vm1172, %v2531, %v4513
        %v4515 = vsel %vm1174, %v2540, %v4514
        %v4516 = vsel %vm1176, %v2549, %v4515
        %v4517 = vsel %vm1178, %v2558, %v4516
        %v4518 = vsel %vm1180, %v2567, %v4517
        %v4519 = vsel %vm1182, %v2576, %v4518
        %4520 = vrot.lane.b32.xlu0 %v4512, 16
        %v4521 = vpop.permute.xlu0 %4520
        %4522 = vrot.lane.b32.xlu0 %v4519, 16
        %v4523 = vpop.permute.xlu0 %4522
        %v4542 = vsel %vm1170, %v3335, %v3326
        %v4543 = vsel %vm1172, %v3344, %v4542
        %v4544 = vsel %vm1174, %v3353, %v4543
        %v4545 = vsel %vm1176, %v3362, %v4544
        %v4546 = vsel %vm1178, %v3371, %v4545
        %v4547 = vsel %vm1180, %v3380, %v4546
        %v4548 = vsel %vm1182, %v3389, %v4547
        %v4549 = vsel %vm1170, %v3407, %v3398
        %v4550 = vsel %vm1172, %v3416, %v4549
        %v4551 = vsel %vm1174, %v3425, %v4550
        %v4552 = vsel %vm1176, %v3434, %v4551
        %v4553 = vsel %vm1178, %v3443, %v4552
        %v4554 = vsel %vm1180, %v3452, %v4553
        %v4555 = vsel %vm1182, %v3461, %v4554
        %4556 = vrot.lane.b32.xlu0 %v4548, 32
        %v4557 = vpop.permute.xlu0 %4556
        %4558 = vrot.lane.b32.xlu0 %v4555, 32
        %v4559 = vpop.permute.xlu0 %4558
        %v4578 = vsel %vm1170, %v4220, %v4211
        %v4579 = vsel %vm1172, %v4229, %v4578
        %v4580 = vsel %vm1174, %v4238, %v4579
        %v4581 = vsel %vm1176, %v4247, %v4580
        %v4582 = vsel %vm1178, %v4256, %v4581
        %v4583 = vsel %vm1180, %v4265, %v4582
        %v4584 = vsel %vm1182, %v4274, %v4583
        %v4585 = vsel %vm1170, %v4292, %v4283
        %v4586 = vsel %vm1172, %v4301, %v4585
        %v4587 = vsel %vm1174, %v4310, %v4586
        %v4588 = vsel %vm1176, %v4319, %v4587
        %v4589 = vsel %vm1178, %v4328, %v4588
        %v4590 = vsel %vm1180, %v4337, %v4589
        %v4591 = vsel %vm1182, %v4346, %v4590
        %4592 = vrot.lane.b32.xlu0 %v4584, 48
        %v4593 = vpop.permute.xlu0 %4592
        %4594 = vrot.lane.b32.xlu0 %v4591, 48
        %v4595 = vpop.permute.xlu0 %4594
        %v4598 = vsel %vm852, %v4480, %v4521
        %v4599 = vsel %vm852, %v4487, %v4523
        %v4600 = vsel %vm701, %v4598, %v4557
        %v4601 = vsel %vm701, %v4599, %v4559
        %vm4602 = vcmask 392192
        %v4603 = vsel %vm4602, %v4600, %v4593
        %v4604 = vsel %vm4602, %v4601, %v4595
        %v4605 = vsub.f32 %v4406, %v546
        %v4606 = vsub.f32 %v4407, %v551
        %v4607 = vsub.f32 %v4432, %v607
        %v4608 = vsub.f32 %v4433, %v611
        %v4609 = vsub.f32 %v4456, %v667
        %v4610 = vsub.f32 %v4457, %v671
        %v4611 = vmul.f32 %v494, %v4605
        %v4612 = vmul.f32 %v499, %v4606
        %v4613 = vmul.f32 %v557, %v4607
        %v4614 = vmul.f32 %v561, %v4608
        %v4615 = vadd.f32 %v4611, %v4613
        %v4616 = vadd.f32 %v4612, %v4614
        %v4617 = vmul.f32 %v617, %v4609
        %v4618 = vmul.f32 %v621, %v4610
        %v4619 = vadd.f32 %v4615, %v4617
        %v4620 = vadd.f32 %v4616, %v4618
        %v4621 = vmul.f32 %v505, %v4605
        %v4622 = vmul.f32 %v509, %v4606
        %v4623 = vmul.f32 %v567, %v4607
        %v4624 = vmul.f32 %v571, %v4608
        %v4625 = vadd.f32 %v4621, %v4623
        %v4626 = vadd.f32 %v4622, %v4624
        %v4627 = vmul.f32 %v627, %v4609
        %v4628 = vmul.f32 %v631, %v4610
        %v4629 = vadd.f32 %v4625, %v4627
        %v4630 = vadd.f32 %v4626, %v4628
        %v4631 = vmul.f32 %v525, %v4605
        %v4632 = vmul.f32 %v529, %v4606
        %v4633 = vmul.f32 %v587, %v4607
        %v4634 = vmul.f32 %v591, %v4608
        %v4635 = vadd.f32 %v4631, %v4633
        %v4636 = vadd.f32 %v4632, %v4634
        %v4637 = vmul.f32 %v647, %v4609
        %v4638 = vmul.f32 %v651, %v4610
        %v4639 = vadd.f32 %v4635, %v4637
        %v4640 = vadd.f32 %v4636, %v4638
        %v4641 = vmul.f32 %v4619, %v4619
        %v4642 = vmul.f32 %v4620, %v4620
        %v4643 = vmul.f32 %v4629, %v4629
        %v4644 = vmul.f32 %v4630, %v4630
        %v4645 = vadd.f32 %v4641, %v4643
        %v4646 = vadd.f32 %v4642, %v4644
        %v4647 = vmul.f32 %v4639, %v4639
        %v4648 = vmul.f32 %v4640, %v4640
        %v4649 = vadd.f32 %v4645, %v4647
        %v4650 = vadd.f32 %v4646, %v4648
        %v4651 = vadd.f32 %v4649, 1e-08
        %v4652 = vadd.f32 %v4650, 1e-08
        %v4653 = vrsqrt.pop %v4651
        %v4654 = vmul.f32 %v4653, %v4651
        %v4655 = vmul.f32 %v4654, %v4653
        %v4656 = vmul.f32 0.5, %v4655
        %v4657 = vsub.f32 1.5, %v4656
        %v4658 = vmul.f32 %v4653, %v4657
        %v4659 = vmul.f32 %v4651, %v4658
        %vm4660 = vcmp.eq.f32.partialorder %v4651, inf
        %v4661 = vsel %vm4660, %v4651, %v4659
        %vm4662 = vcmp.eq.f32.partialorder %v4651, 0.0
        %v4663 = vand.u32 %v4651, 2147483648
        %v4664 = vsel %vm4662, %v4663, %v4661
        %v4665 = vrsqrt.pop %v4652
        %v4666 = vmul.f32 %v4665, %v4652
        %v4667 = vmul.f32 %v4666, %v4665
        %v4668 = vmul.f32 0.5, %v4667
        %v4669 = vsub.f32 1.5, %v4668
        %v4670 = vmul.f32 %v4665, %v4669
        %v4671 = vmul.f32 %v4652, %v4670
        %vm4672 = vcmp.eq.f32.partialorder %v4652, inf
        %v4673 = vsel %vm4672, %v4652, %v4671
        %vm4674 = vcmp.eq.f32.partialorder %v4652, 0.0
        %v4675 = vand.u32 %v4652, 2147483648
        %v4676 = vsel %vm4674, %v4675, %v4673
        %4679 = vrot.lane.b32.xlu0 %v4619, 32
        %v4680 = vpop.permute.xlu0 %4679
        %4681 = vrot.lane.b32.xlu0 %v4620, 32
        %v4682 = vpop.permute.xlu0 %4681
        %4687 = vrot.lane.b32.xlu0 %v4629, 64
        %v4688 = vpop.permute.xlu0 %4687
        %4689 = vrot.lane.b32.xlu0 %v4630, 64
        %v4690 = vpop.permute.xlu0 %4689
        %4695 = vrot.lane.b32.xlu0 %v4639, 96
        %v4696 = vpop.permute.xlu0 %4695
        %4697 = vrot.lane.b32.xlu0 %v4640, 96
        %v4698 = vpop.permute.xlu0 %4697
        %4703 = vrot.lane.b32.xlu0 %v4603, 32
        %v4704 = vpop.permute.xlu0 %4703
        %4705 = vrot.lane.b32.xlu0 %v4604, 32
        %v4706 = vpop.permute.xlu0 %4705
        %v4709 = vsel %vm701, %v4376, %v4680
        %v4710 = vsel %vm701, %v4377, %v4682
        %vm4711 = vcmask 523264
        %v4712 = vsel %vm4711, %v4709, %v4688
        %v4713 = vsel %vm4711, %v4710, %v4690
        %vm4714 = vcmask 785408
        %v4715 = vsel %vm4714, %v4712, %v4696
        %v4716 = vsel %vm4714, %v4713, %v4698
        %v4717 = vsel %vm701, %v4664, %v4704
        %v4718 = vsel %vm701, %v4676, %v4706
        %v4719 = vld [vmem:[%s7] sm:$0xff]
        %v4720 = vld [vmem:[%s7 + $0x8] sm:$0xff]
        %v4721 = vld [vmem:[%s7 + $0x10] sm:$0xff]
        %v4722 = vld [vmem:[%s7 + $0x18] sm:$0xff]
        %v4723 = vld [vmem:[%s7 + $0x20] sm:$0xff]
        %v4724 = vld [vmem:[%s7 + $0x28] sm:$0xff]
        %v4725 = vld [vmem:[%s7 + $0x30] sm:$0xff]
        %v4726 = vld [vmem:[%s7 + $0x38] sm:$0xff]
        %v4727 = vld [vmem:[%s7 + $0x40] sm:$0xff]
        %v4728 = vld [vmem:[%s7 + $0x48] sm:$0xff]
        %v4729 = vld [vmem:[%s7 + $0x50] sm:$0xff]
        %v4730 = vld [vmem:[%s7 + $0x58] sm:$0xff]
        %v4731 = vld [vmem:[%s7 + $0x60] sm:$0xff]
        %v4732 = vld [vmem:[%s7 + $0x68] sm:$0xff]
        %v4733 = vld [vmem:[%s7 + $0x70] sm:$0xff]
        %v4734 = vld [vmem:[%s7 + $0x78] sm:$0xff]
        %v4735 = vld [vmem:[%s7 + $0x80] sm:$0xff]
        %v4736 = vld [vmem:[%s7 + $0x88] sm:$0xff]
        %v4737 = vld [vmem:[%s7 + $0x90] sm:$0xff]
        %v4738 = vld [vmem:[%s7 + $0x98] sm:$0xff]
        %v4739 = vld [vmem:[%s7 + $0xa0] sm:$0xff]
        %v4740 = vld [vmem:[%s7 + $0xa8] sm:$0xff]
        %v4741 = vld [vmem:[%s7 + $0xb0] sm:$0xff]
        %v4742 = vld [vmem:[%s7 + $0xb8] sm:$0xff]
        %v4743 = vld [vmem:[%s7 + $0xc0] sm:$0xff]
        %v4744 = vld [vmem:[%s7 + $0xc8] sm:$0xff]
        %v4745 = vld [vmem:[%s7 + $0xd0] sm:$0xff]
        %v4746 = vld [vmem:[%s7 + $0xd8] sm:$0xff]
        %v4747 = vld [vmem:[%s8] sm:$0x1]
        %v4749 = vperm.slane %v4747, 0
        %v4752 = vsel %vm4714, %v4717, 0
        %v4755 = vsel %vm4714, %v4718, 0
        %4757 = vmatpush.msra.mxu0 %v4734
        %4758 = vmatpush.msra.mxu0 %v4733
        %4759 = vmatpush.msra.mxu0 %v4732
        %4760 = vmatpush.msra.mxu0 %v4731
        %4761 = vmatpush.msra.mxu0 %v4730
        %4762 = vmatpush.msra.mxu0 %v4729
        %4763 = vmatpush.msra.mxu0 %v4728
        %4764 = vmatpush.msra.mxu0 %v4727
        %4765 = vmatpush.msra.mxu0 %v4726
        %4766 = vmatpush.msra.mxu0 %v4725
        %4767 = vmatpush.msra.mxu0 %v4724
        %4768 = vmatpush.msra.mxu0 %v4723
        %4769 = vmatpush.msra.mxu0 %v4722
        %4770 = vmatpush.msra.mxu0 %v4721
        %4771 = vmatpush.msra.mxu0 %v4720
        %4772 = vmatpush.msra.mxu0 %v4719
        %4773 = vmatmul.f32.gmra.mxu0 %v4715
        %v4774 = vpop.f32.mrf.mxu0
        %v4775 = vadd.f32 %v4749, %v4774
        %4776 = vmatmul.f32.gmra.mxu0 %v4716
        %v4777 = vpop.f32.mrf.mxu0
        %v4778 = vadd.f32 %v4749, %v4777
        %4779 = vdwg.mxu0
        %4780 = vmatpush.msra.mxu0 0.0
        %4781 = vmatpush.msra.mxu0 0.0
        %4782 = vmatpush.msra.mxu0 0.0
        %4783 = vmatpush.msra.mxu0 0.0
        %4784 = vmatpush.msra.mxu0 %v4746
        %4785 = vmatpush.msra.mxu0 %v4745
        %4786 = vmatpush.msra.mxu0 %v4744
        %4787 = vmatpush.msra.mxu0 %v4743
        %4788 = vmatpush.msra.mxu0 %v4742
        %4789 = vmatpush.msra.mxu0 %v4741
        %4790 = vmatpush.msra.mxu0 %v4740
        %4791 = vmatpush.msra.mxu0 %v4739
        %4792 = vmatpush.msra.mxu0 %v4738
        %4793 = vmatpush.msra.mxu0 %v4737
        %4794 = vmatpush.msra.mxu0 %v4736
        %4795 = vmatpush.msra.mxu0 %v4735
        %4796 = vmatmul.f32.gmra.mxu0 %v4752
        %v4797 = vpop.f32.mrf.mxu0
        %v4798 = vadd.f32 %v4775, %v4797
        %4799 = vmatmul.f32.gmra.mxu0 %v4755
        %v4800 = vpop.f32.mrf.mxu0
        %v4801 = vadd.f32 %v4778, %v4800
        %4802 = vdwg.mxu0
        %4803 = vst.msk [vmem:[%s426] sm:$0xff] %vm701, %v4798
        %4804 = vst.msk [vmem:[%s426 + $0x8] sm:$0xff] %vm701, %v4801
        %s4805 = sand.u32 %s249, 1
        %s4806 = scalar_lea.sflag [#allocation4], %s4805
        %s4807 = sand.u32 %s249, 1
        %s4808 = smul.addr %s4807, 16
        %s4809 = scalar_lea.vmem [#allocation7], %s4808
        // Predicated region
        $region65: #{ipa_forward_pallas.3} parent=55 // pred_check
          %p4810 = pneg %p259
        $region66: #{ipa_forward_pallas.3} parent=55 // pred_check_branch
          %4812 = sbr.rel (%p4810) target = $region68
        $region67: #{ipa_forward_pallas.3} parent=55 // pred_region
          %4814 = vsyncadd %s4806, 0
          %s4815 = smul.addr %s27, 2
          %s4816 = smul.addr %s4815, 8
          %s4817 = scalar_lea.hbm %s9, %s4816
          %s4818 = sshll.u32 %s4809, 4
          %s4819 = int_to_ptr.vmem [resolvable:$true] %s4818
          %s4820 = sshll.u32 %s4817, 4
          %s4821 = int_to_ptr.hbm [resolvable:$true] %s4820
          %4826 = dma.vmem_to_hbm [thread:$0]  %s4819, 256, %s4821, %s4806, 128, 128, 8
        $region68: #{ipa_forward_pallas.3} parent=55 // pred_fallthru
          _
      $region56: #{ipa_forward_pallas.3} parent=5 // pred_fallthru
        _
      %p4827 = scmp.le.s32.totalorder 2, %s22
      // Predicated region
      $region69: #{ipa_forward_pallas.3} parent=5 // pred_check
        %p4828 = pneg %p4827
      $region70: #{ipa_forward_pallas.3} parent=5 // pred_check_branch
        %4830 = sbr.rel (%p4828) target = $region72
      $region71: #{ipa_forward_pallas.3} parent=5 // pred_region
        %s4831 = ssub.s32 %s22, 2
        // Predicated region
        $region73: #{ipa_forward_pallas.3} parent=71 // pred_check
          %p4832 = pneg %p265
        $region74: #{ipa_forward_pallas.3} parent=71 // pred_check_branch
          %4834 = sbr.rel (%p4832) target = $region76
        $region75: #{ipa_forward_pallas.3} parent=71 // pred_region
          %s4835 = sand.u32 %s250, 1
          %s4836 = scalar_lea.sflag [#allocation4], %s4835
          %s4837 = sand.u32 %s250, 1
          %s4838 = smul.addr %s4837, 16
          %s4839 = scalar_lea.vmem [#allocation7], %s4838
          %4841 = dma.done %s4836, 256
        $region76: #{ipa_forward_pallas.3} parent=71 // pred_fallthru
          _
      $region72: #{ipa_forward_pallas.3} parent=5 // pred_fallthru
        _
    $region6: #{ipa_forward_pallas.3} parent=1 // loop_footer
      %s26 = sadd.s32 1, %s22
    $region7: #{ipa_forward_pallas.3} parent=1 // loop_footer_branch
      %21 = sbr.rel target = $region3
    $region8: #{ipa_forward_pallas.3} parent=1 // loop_exit
      _
    %4842 = vsyncpa [#allocation3], 1
    %s4843 = scalar_lea.sflag [#allocation3], 1
    %4844 = vsyncpa %s4843, 1
    %4845 = vsyncpa [#allocation4], 1
    %s4846 = scalar_lea.sflag [#allocation4], 1
    %4847 = vsyncpa %s4846, 1
    %4848 = vsyncpa [#allocation5], 1
    %s4849 = scalar_lea.sflag [#allocation5], 1
    %4850 = vsyncpa %s4849, 1

</llo_original>
